<compile_context>
chip_gen: v7x
topology: tpu7x:2x2x1
jax: 0.10.0
libtpu: 0.0.40
codegen_flags: <defaults>
</compile_context>

<pallas_src>
import functools

import jax
import jax.numpy as jnp
from jax.experimental import pallas as pl
from jax.experimental.pallas import tpu as pltpu

EPS = 0.01


# ----------------------------------------------------------------------------
# helpers
# ----------------------------------------------------------------------------
@functools.lru_cache(maxsize=None)
def _vmem_limit():
    """Scoped-VMEM request: ~3/4 of physical VMEM (96 MiB cap), 32 MiB fallback."""
    limit = 32 * 1024 * 1024
    try:
        info_fn = getattr(pltpu, "get_tpu_info", None)
        if info_fn is not None:
            cap = getattr(info_fn(), "vmem_capacity_bytes", None)
            if cap:
                limit = min(int(cap) * 3 // 4, 96 * 1024 * 1024)
    except Exception:
        pass
    return limit


def _boundary_masks(H, W):
    """(1, H*W) f32 validity masks for a 3x3 same-padding conv, built in-kernel
    from iota (no mask DMA)."""
    HW = H * W
    lane = jax.lax.broadcasted_iota(jnp.int32, (1, HW), 1)
    if W & (W - 1) == 0:
        col = jnp.bitwise_and(lane, W - 1)
    else:
        col = lane % W
    row_up = (lane >= W).astype(jnp.float32)          # dy = -1 valid
    row_dn = (lane < HW - W).astype(jnp.float32)      # dy = +1 valid
    col_l = (col != 0).astype(jnp.float32)            # dx = -1 valid
    col_r = (col != W - 1).astype(jnp.float32)        # dx = +1 valid
    return row_up, row_dn, col_l, col_r


def _rgb_to_ycbcr(r, g, b):
    y = 0.299 * r + 0.587 * g + 0.114 * b
    cb = (b - y) * 0.564 + 0.5
    cr = (r - y) * 0.713 + 0.5
    return y, cb, cr


def _conv3x3(x, w_ref, b_ref, p_ref, masks, W, act):
    """3x3 same-padding conv of x:(C,HW) (C a multiple of 8) as ONE MXU matmul.

    Patches are staged in the 8-aligned VMEM scratch p_ref in (dx, dy, cin)
    order (matching _prep_conv_weight).  4 pltpu.roll ops + 4 broadcast mask
    multiplies per layer; the dot runs with bf16 operands / f32 accumulation.
    """
    C, HW = x.shape
    K = 9 * C
    row_up, row_dn, col_l, col_r = masks
    # dy-shifted, row-masked planes -> the dx = 0 block of the patches scratch.
    p_ref[3 * C:4 * C, :] = pltpu.roll(x, W, 1) * row_up          # dy = -1
    p_ref[4 * C:5 * C, :] = x                                     # dy =  0
    p_ref[5 * C:6 * C, :] = pltpu.roll(x, HW - W, 1) * row_dn     # dy = +1
    s = p_ref[3 * C:6 * C, :]                                     # (3C, HW)
    p_ref[0:3 * C, :] = pltpu.roll(s, 1, 1) * col_l               # dx = -1
    p_ref[6 * C:9 * C, :] = pltpu.roll(s, HW - 1, 1) * col_r      # dx = +1
    patches = p_ref[0:K, :].astype(jnp.bfloat16)                  # (9C, HW)
    out = jnp.dot(w_ref[...], patches,
                  preferred_element_type=jnp.float32) + b_ref[...]
    if act == "relu":
        return jnp.maximum(out, 0.0)
    return jax.nn.sigmoid(out)


def _prep_conv_weight(w, cpad):
    """(Cout, Cin, 3, 3) torch-layout weight -> (Cout, 9*cpad) bf16 matrix in
    (kx, ky, cin) order with zero-padded input channels."""
    co, ci, kh, kw = w.shape
    if ci < cpad:
        w = jnp.concatenate(
            [w, jnp.zeros((co, cpad - ci, kh, kw), w.dtype)], axis=1)
    wt = jnp.transpose(w, (0, 3, 2, 1))               # (Cout, kx, ky, cin)
    return wt.reshape(co, 9 * cpad).astype(jnp.bfloat16)


# ----------------------------------------------------------------------------
# IANet stand-in (1 -> 8 -> 1): Y computed in-kernel, 2 fused conv layers
# ----------------------------------------------------------------------------
def _ianet_kernel(img_ref, w1_ref, b1_ref, w2_ref, b2_ref, illumi_ref,
                  xin_ref, p_ref, *, H, W):
    # TODO(synk): real IANet architecture is external; 1->8->1 stand-in used.
    HW = H * W
    r = img_ref[0, 0:1, :]
    g = img_ref[0, 1:2, :]
    b = img_ref[0, 2:3, :]
    y = 0.299 * r + 0.587 * g + 0.114 * b                        # texture_in

    xin_ref[...] = jnp.zeros((8, HW), jnp.float32)               # zero-padded
    xin_ref[0:1, :] = y

    masks = _boundary_masks(H, W)
    h = _conv3x3(xin_ref[...], w1_ref, b1_ref, p_ref, masks, W, "relu")
    illumi_ref[0] = _conv3x3(h, w2_ref, b2_ref, p_ref, masks, W, "sigmoid")


def _ianet(img, params, H, W):
    B, _, HW = img.shape
    w1 = _prep_conv_weight(params["ia1_w"], 8)        # (8, 72)
    b1 = params["ia1_b"].reshape(8, 1)
    w2 = _prep_conv_weight(params["ia2_w"], 8)        # (1, 72)
    b2 = params["ia2_b"].reshape(1, 1)
    return pl.pallas_call(
        functools.partial(_ianet_kernel, H=H, W=W),
        grid=(B,),
        in_specs=[
            pl.BlockSpec((1, 3, HW), lambda b: (b, 0, 0)),
            pl.BlockSpec((8, 72), lambda b: (0, 0)),
            pl.BlockSpec((8, 1), lambda b: (0, 0)),
            pl.BlockSpec((1, 72), lambda b: (0, 0)),
            pl.BlockSpec((1, 1), lambda b: (0, 0)),
        ],
        out_specs=pl.BlockSpec((1, 1, HW), lambda b: (b, 0, 0)),
        out_shape=jax.ShapeDtypeStruct((B, 1, HW), jnp.float32),
        scratch_shapes=[
            pltpu.VMEM((8, HW), jnp.float32),          # padded conv input
            pltpu.VMEM((72, HW), jnp.float32),         # patches (both layers)
        ],
        compiler_params=pltpu.CompilerParams(
            dimension_semantics=("parallel",),
            vmem_limit_bytes=_vmem_limit()),
    )(img, w1, b1, w2, b2)


# ----------------------------------------------------------------------------
# CANet stand-in (6 -> 16 -> 2) with fused input assembly, ycbcr->rgb epilogue
# and per-batch loss statistics
# ----------------------------------------------------------------------------
def _canet_kernel(img_ref, il_ref, gt_ref, w1_ref, b1_ref, w2_ref, b2_ref,
                  out_ref, stats_ref, xin_ref, p_ref, *, H, W, eps):
    # TODO(synk): real CANet architecture is external; 6->16->2 stand-in used.
    HW = H * W
    r = img_ref[0, 0:1, :]
    g = img_ref[0, 1:2, :]
    b = img_ref[0, 2:3, :]
    y_in, cb_in, cr_in = _rgb_to_ycbcr(r, g, b)

    rg = gt_ref[0, 0:1, :]
    gg = gt_ref[0, 1:2, :]
    bg = gt_ref[0, 2:3, :]
    y_gt, cb_gt, cr_gt = _rgb_to_ycbcr(rg, gg, bg)

    inv = 1.0 / jnp.maximum(il_ref[0, 0:1, :], eps)
    _, cb_en, cr_en = _rgb_to_ycbcr(r * inv, g * inv, b * inv)

    # [texture_in, cb_in, cr_in, texture_gt, cb_en, cr_en] + 2 zero pad rows.
    xin_ref[...] = jnp.zeros((8, HW), jnp.float32)
    xin_ref[0:1, :] = y_in
    xin_ref[1:2, :] = cb_in
    xin_ref[2:3, :] = cr_in
    xin_ref[3:4, :] = y_gt
    xin_ref[4:5, :] = cb_en
    xin_ref[5:6, :] = cr_en

    masks = _boundary_masks(H, W)
    h = _conv3x3(xin_ref[...], w1_ref, b1_ref, p_ref, masks, W, "relu")   # (16,HW)
    colors = _conv3x3(h, w2_ref, b2_ref, p_ref, masks, W, "sigmoid")      # (2,HW)

    cb = colors[0:1, :]
    cr = colors[1:2, :]
    cbm = cb - 0.5
    crm = cr - 0.5
    out_r = y_gt + 1.403 * crm
    out_g = y_gt - 0.714 * crm - 0.344 * cbm
    out_b = y_gt + 1.773 * cbm
    out_ref[0, 0:1, :] = out_r
    out_ref[0, 1:2, :] = out_g
    out_ref[0, 2:3, :] = out_b

    # fused per-batch loss statistics: [sum_x, sum_y, sum_xx, sum_yy, sum_xy,
    # sum|x-y|]; the squared error is reconstructed in JAX as sxx - 2*sxy + syy.
    stats_ref[...] = jnp.zeros((1, 24, 128), jnp.float32)

    def put_stats(base, pairs):
        sx = sum(jnp.sum(x) for x, _ in pairs)
        sy = sum(jnp.sum(y) for _, y in pairs)
        sxx = sum(jnp.sum(x * x) for x, _ in pairs)
        syy = sum(jnp.sum(y * y) for _, y in pairs)
        sxy = sum(jnp.sum(x * y) for x, y in pairs)
        sad = sum(jnp.sum(jnp.abs(x - y)) for x, y in pairs)
        for j, v in enumerate((sx, sy, sxx, syy, sxy, sad)):
            stats_ref[0, base + j:base + j + 1, :] = jnp.full(
                (1, 128), v, jnp.float32)

    put_stats(0, [(cb, cb_gt)])                                  # cb  vs cb_gt
    put_stats(8, [(cr, cr_gt)])                                  # cr  vs cr_gt
    put_stats(16, [(out_r, rg), (out_g, gg), (out_b, bg)])       # out vs gt


def _canet(img, illumi, gt, params, H, W):
    B, _, HW = img.shape
    Bg = gt.shape[0]
    gt_map = (lambda b: (0, 0, 0)) if Bg == 1 else (lambda b: (b, 0, 0))
    w1 = _prep_conv_weight(params["ca1_w"], 8)        # (16, 72)
    b1 = params["ca1_b"].reshape(16, 1)
    w2 = _prep_conv_weight(params["ca2_w"], 16)       # (2, 144)
    b2 = params["ca2_b"].reshape(2, 1)
    return pl.pallas_call(
        functools.partial(_canet_kernel, H=H, W=W, eps=EPS),
        grid=(B,),
        in_specs=[
            pl.BlockSpec((1, 3, HW), lambda b: (b, 0, 0)),
            pl.BlockSpec((1, 1, HW), lambda b: (b, 0, 0)),
            pl.BlockSpec((1, 3, HW), gt_map),
            pl.BlockSpec((16, 72), lambda b: (0, 0)),
            pl.BlockSpec((16, 1), lambda b: (0, 0)),
            pl.BlockSpec((2, 144), lambda b: (0, 0)),
            pl.BlockSpec((2, 1), lambda b: (0, 0)),
        ],
        out_specs=(
            pl.BlockSpec((1, 3, HW), lambda b: (b, 0, 0)),
            pl.BlockSpec((1, 24, 128), lambda b: (b, 0, 0)),
        ),
        out_shape=(
            jax.ShapeDtypeStruct((B, 3, HW), jnp.float32),
            jax.ShapeDtypeStruct((B, 24, 128), jnp.float32),
        ),
        scratch_shapes=[
            pltpu.VMEM((8, HW), jnp.float32),          # padded 6-ch conv input
            pltpu.VMEM((144, HW), jnp.float32),        # patches (both layers)
        ],
        compiler_params=pltpu.CompilerParams(
            dimension_semantics=("parallel",),
            vmem_limit_bytes=_vmem_limit()),
    )(img, illumi, gt, w1, b1, w2, b2)


# ----------------------------------------------------------------------------
# loss metrics from the per-batch statistic partials
# ----------------------------------------------------------------------------
def _metrics_from_stats(row, n):
    # TODO(synk): models_vevid SSIM / MS-SSIM use an 11x11 Gaussian window and
    # a multi-scale pyramid; a global-statistics SSIM is used here instead.
    n = jnp.float32(n)
    sx, sy, sxx, syy, sxy, sad = (row[j] for j in range(6))
    mse = (sxx - 2.0 * sxy + syy) / n
    l1 = sad / n
    mx = sx / n
    my = sy / n
    vx = sxx / n - mx * mx
    vy = syy / n - my * my
    cov = sxy / n - mx * my
    c1 = 0.01 ** 2
    c2 = 0.03 ** 2
    ssim = ((2.0 * mx * my + c1) * (2.0 * cov + c2)) / (
        (mx * mx + my * my + c1) * (vx + vy + c2))
    return mse, 1.0 - ssim, l1


# ----------------------------------------------------------------------------
# parameters (deterministic stand-ins with the declared channel counts)
# ----------------------------------------------------------------------------
def init_params(key):
    ks = jax.random.split(key, 4)

    def cw(k, cout, cin):
        return 0.1 * jax.random.normal(k, (cout, cin, 3, 3), jnp.float32)

    return {
        "ia1_w": cw(ks[0], 8, 1),  "ia1_b": jnp.zeros((8,), jnp.float32),
        "ia2_w": cw(ks[1], 1, 8),  "ia2_b": jnp.zeros((1,), jnp.float32),
        "ca1_w": cw(ks[2], 16, 6), "ca1_b": jnp.zeros((16,), jnp.float32),
        "ca2_w": cw(ks[3], 2, 16), "ca2_b": jnp.zeros((2,), jnp.float32),
    }


# ----------------------------------------------------------------------------
# ModelCANet.forward
# ----------------------------------------------------------------------------
@functools.partial(jax.jit, static_argnames=("training",))
def model_canet_forward(image, image_gt, params, training=True):
    if training:
        image = jnp.squeeze(image, axis=0)            # (8, 3, H, W)
        # image_gt.repeat(8,1,1,1) is realised via broadcasting index_maps.
    B, _, H, W = image.shape
    HW = H * W
    img = image.astype(jnp.float32).reshape(B, 3, HW)               # zero-copy
    gt = image_gt.astype(jnp.float32).reshape(image_gt.shape[0], 3, HW)

    # model_ianet.eval(): no gradient through the illumination branch.
    illumi = jax.lax.stop_gradient(_ianet(img, params, H, W))       # (B, 1, HW)

    # One fused kernel: input assembly + CANet + ycbcr->rgb + loss partials.
    image_out, stats = _canet(img, illumi, gt, params, H, W)

    tot = jnp.sum(stats[:, :, 0], axis=0)             # (24,) global sums
    mse_cb, ssim_cb, _ = _metrics_from_stats(tot[0:6], B * HW)
    mse_cr, ssim_cr, _ = _metrics_from_stats(tot[8:14], B * HW)
    _, ssim_img, l1_img = _metrics_from_stats(tot[16:22], B * 3 * HW)

    color_loss1 = mse_cb + 1.6 * ssim_cb
    color_loss2 = mse_cr + 1.6 * ssim_cr
    alpha = 0.84
    restor_loss = (alpha * ssim_img + (1.0 - alpha) * l1_img) * 1.0

    return image_out.reshape(B, 3, H, W), color_loss1, color_loss2, restor_loss


if __name__ == "__main__":
    key = jax.random.PRNGKey(0)
    kp, ki, kg = jax.random.split(key, 3)
    params = init_params(kp)

    H = W = 16
    image = jax.random.uniform(ki, (1, 8, 3, H, W), jnp.float32)   # squeezed to (8,3,H,W)
    image_gt = jax.random.uniform(kg, (1, 3, H, W), jnp.float32)   # broadcast to batch 8

    outs = model_canet_forward(image, image_gt, params, training=True)
    outs = jax.block_until_ready(outs)
    img_out, cl1, cl2, rl = outs
    assert img_out.shape == (8, 3, H, W)
    assert bool(jnp.isfinite(cl1)) and bool(jnp.isfinite(cl2)) and bool(jnp.isfinite(rl))
    print("KERNEL_OK")
</pallas_src>

<mosaic_0001>
module attributes {stable_mosaic.version = 11 : i64} {
  func.func @_ianet_kernel(%arg0: i32, %arg1: memref<1x3x256xf32, #tpu.memory_space<vmem>>, %arg2: memref<8x72xbf16, #tpu.memory_space<vmem>>, %arg3: memref<8x1xf32, #tpu.memory_space<vmem>>, %arg4: memref<1x72xbf16, #tpu.memory_space<vmem>>, %arg5: memref<1x1xf32, #tpu.memory_space<vmem>>, %arg6: memref<1x1x256xf32, #tpu.memory_space<vmem>>, %arg7: memref<8x256xf32, #tpu.memory_space<vmem>>, %arg8: memref<72x256xf32, #tpu.memory_space<vmem>>) attributes {dimension_semantics = [#tpu.dimension_semantics<parallel>], iteration_bounds = array<i64: 8>, scalar_prefetch = 0 : i64, scratch_operands = 2 : i64, tpu.core_type = #tpu.core_type<tc>, window_params = [{transform_indices = @transform_0, window_bounds = array<i64: 1, 3, 256>}, {pipeline_mode = #tpu.pipeline_mode<synchronous>, transform_indices = @transform_1, window_bounds = array<i64: 8, 72>}, {pipeline_mode = #tpu.pipeline_mode<synchronous>, transform_indices = @transform_2, window_bounds = array<i64: 8, 1>}, {pipeline_mode = #tpu.pipeline_mode<synchronous>, transform_indices = @transform_3, window_bounds = array<i64: 1, 72>}, {pipeline_mode = #tpu.pipeline_mode<synchronous>, transform_indices = @transform_4, window_bounds = array<i64: 1, 1>}, {transform_indices = @transform_5, window_bounds = array<i64: 1, 1, 256>}]} {
    %c0 = arith.constant 0 : index
    %c0_0 = arith.constant 0 : index
    %c0_1 = arith.constant 0 : index
    %0 = vector.load %arg1[%c0, %c0_0, %c0_1] : memref<1x3x256xf32, #tpu.memory_space<vmem>>, vector<1x1x256xf32>
    %1 = vector.shape_cast %0 : vector<1x1x256xf32> to vector<1x256xf32>
    %c0_2 = arith.constant 0 : index
    %c1 = arith.constant 1 : index
    %c0_3 = arith.constant 0 : index
    %2 = vector.load %arg1[%c0_2, %c1, %c0_3] : memref<1x3x256xf32, #tpu.memory_space<vmem>>, vector<1x1x256xf32>
    %3 = vector.shape_cast %2 : vector<1x1x256xf32> to vector<1x256xf32>
    %c0_4 = arith.constant 0 : index
    %c2 = arith.constant 2 : index
    %c0_5 = arith.constant 0 : index
    %4 = vector.load %arg1[%c0_4, %c2, %c0_5] : memref<1x3x256xf32, #tpu.memory_space<vmem>>, vector<1x1x256xf32>
    %5 = vector.shape_cast %4 : vector<1x1x256xf32> to vector<1x256xf32>
    %cst = arith.constant 2.990000e-01 : f32
    %6 = vector.broadcast %cst : f32 to vector<1x256xf32>
    %7 = arith.mulf %6, %1 : vector<1x256xf32>
    %cst_6 = arith.constant 5.870000e-01 : f32
    %8 = vector.broadcast %cst_6 : f32 to vector<1x256xf32>
    %9 = arith.mulf %8, %3 : vector<1x256xf32>
    %10 = arith.addf %7, %9 : vector<1x256xf32>
    %cst_7 = arith.constant 1.140000e-01 : f32
    %11 = vector.broadcast %cst_7 : f32 to vector<1x256xf32>
    %12 = arith.mulf %11, %5 : vector<1x256xf32>
    %13 = arith.addf %10, %12 : vector<1x256xf32>
    %cst_8 = arith.constant 0.000000e+00 : f32
    %14 = vector.broadcast %cst_8 : f32 to vector<8x256xf32>
    %c0_9 = arith.constant 0 : index
    %c0_10 = arith.constant 0 : index
    %15 = vector.load %arg7[%c0_9, %c0_10] : memref<8x256xf32, #tpu.memory_space<vmem>>, vector<8x256xf32>
    tpu.vector_store %arg7[%c0_9, %c0_10], %14 {strides = array<i32>} : memref<8x256xf32, #tpu.memory_space<vmem>>, vector<8x256xf32>,
    %c0_11 = arith.constant 0 : index
    %c0_12 = arith.constant 0 : index
    %16 = vector.load %arg7[%c0_11, %c0_12] : memref<8x256xf32, #tpu.memory_space<vmem>>, vector<1x256xf32>
    tpu.vector_store %arg7[%c0_11, %c0_12], %13 {strides = array<i32>} : memref<8x256xf32, #tpu.memory_space<vmem>>, vector<1x256xf32>,
    %17 = tpu.iota {dimensions = array<i32: 1>} : vector<1x256xi32>
    %c15_i32 = arith.constant 15 : i32
    %18 = vector.broadcast %c15_i32 : i32 to vector<1x256xi32>
    %19 = arith.andi %17, %18 : vector<1x256xi32>
    %c16_i32 = arith.constant 16 : i32
    %20 = vector.broadcast %c16_i32 : i32 to vector<1x256xi32>
    %21 = arith.cmpi sge, %17, %20 : vector<1x256xi32>
    %22 = arith.extui %21 : vector<1x256xi1> to vector<1x256xi32>
    %23 = arith.sitofp %22 : vector<1x256xi32> to vector<1x256xf32>
    %c240_i32 = arith.constant 240 : i32
    %24 = vector.broadcast %c240_i32 : i32 to vector<1x256xi32>
    %25 = arith.cmpi slt, %17, %24 : vector<1x256xi32>
    %26 = arith.extui %25 : vector<1x256xi1> to vector<1x256xi32>
    %27 = arith.sitofp %26 : vector<1x256xi32> to vector<1x256xf32>
    %c0_i32 = arith.constant 0 : i32
    %28 = vector.broadcast %c0_i32 : i32 to vector<1x256xi32>
    %29 = arith.cmpi ne, %19, %28 : vector<1x256xi32>
    %30 = arith.extui %29 : vector<1x256xi1> to vector<1x256xi32>
    %31 = arith.sitofp %30 : vector<1x256xi32> to vector<1x256xf32>
    %c15_i32_13 = arith.constant 15 : i32
    %32 = vector.broadcast %c15_i32_13 : i32 to vector<1x256xi32>
    %33 = arith.cmpi ne, %19, %32 : vector<1x256xi32>
    %34 = arith.extui %33 : vector<1x256xi1> to vector<1x256xi32>
    %35 = arith.sitofp %34 : vector<1x256xi32> to vector<1x256xf32>
    %c0_14 = arith.constant 0 : index
    %c0_15 = arith.constant 0 : index
    %36 = vector.load %arg7[%c0_14, %c0_15] : memref<8x256xf32, #tpu.memory_space<vmem>>, vector<8x256xf32>
    %c16_i32_16 = arith.constant 16 : i32
    %37 = tpu.dynamic_rotate %36 by %c16_i32_16 dim 1 : vector<8x256xf32>, i32 -> vector<8x256xf32>
    %38 = vector.broadcast %23 : vector<1x256xf32> to vector<8x256xf32>
    %39 = arith.mulf %37, %38 : vector<8x256xf32>
    %c24 = arith.constant 24 : index
    %c0_17 = arith.constant 0 : index
    %40 = vector.load %arg8[%c24, %c0_17] : memref<72x256xf32, #tpu.memory_space<vmem>>, vector<8x256xf32>
    tpu.vector_store %arg8[%c24, %c0_17], %39 {strides = array<i32>} : memref<72x256xf32, #tpu.memory_space<vmem>>, vector<8x256xf32>,
    %c32 = arith.constant 32 : index
    %c0_18 = arith.constant 0 : index
    %41 = vector.load %arg8[%c32, %c0_18] : memref<72x256xf32, #tpu.memory_space<vmem>>, vector<8x256xf32>
    tpu.vector_store %arg8[%c32, %c0_18], %36 {strides = array<i32>} : memref<72x256xf32, #tpu.memory_space<vmem>>, vector<8x256xf32>,
    %c240_i32_19 = arith.constant 240 : i32
    %42 = tpu.dynamic_rotate %36 by %c240_i32_19 dim 1 : vector<8x256xf32>, i32 -> vector<8x256xf32>
    %43 = vector.broadcast %27 : vector<1x256xf32> to vector<8x256xf32>
    %44 = arith.mulf %42, %43 : vector<8x256xf32>
    %c40 = arith.constant 40 : index
    %c0_20 = arith.constant 0 : index
    %45 = vector.load %arg8[%c40, %c0_20] : memref<72x256xf32, #tpu.memory_space<vmem>>, vector<8x256xf32>
    tpu.vector_store %arg8[%c40, %c0_20], %44 {strides = array<i32>} : memref<72x256xf32, #tpu.memory_space<vmem>>, vector<8x256xf32>,
    %c24_21 = arith.constant 24 : index
    %c0_22 = arith.constant 0 : index
    %46 = vector.load %arg8[%c24_21, %c0_22] : memref<72x256xf32, #tpu.memory_space<vmem>>, vector<24x256xf32>
    %c1_i32 = arith.constant 1 : i32
    %47 = tpu.dynamic_rotate %46 by %c1_i32 dim 1 : vector<24x256xf32>, i32 -> vector<24x256xf32>
    %48 = vector.broadcast %31 : vector<1x256xf32> to vector<24x256xf32>
    %49 = arith.mulf %47, %48 : vector<24x256xf32>
    %c0_23 = arith.constant 0 : index
    %c0_24 = arith.constant 0 : index
    %50 = vector.load %arg8[%c0_23, %c0_24] : memref<72x256xf32, #tpu.memory_space<vmem>>, vector<24x256xf32>
    tpu.vector_store %arg8[%c0_23, %c0_24], %49 {strides = array<i32>} : memref<72x256xf32, #tpu.memory_space<vmem>>, vector<24x256xf32>,
    %c255_i32 = arith.constant 255 : i32
    %51 = tpu.dynamic_rotate %46 by %c255_i32 dim 1 : vector<24x256xf32>, i32 -> vector<24x256xf32>
    %52 = vector.broadcast %35 : vector<1x256xf32> to vector<24x256xf32>
    %53 = arith.mulf %51, %52 : vector<24x256xf32>
    %c48 = arith.constant 48 : index
    %c0_25 = arith.constant 0 : index
    %54 = vector.load %arg8[%c48, %c0_25] : memref<72x256xf32, #tpu.memory_space<vmem>>, vector<24x256xf32>
    tpu.vector_store %arg8[%c48, %c0_25], %53 {strides = array<i32>} : memref<72x256xf32, #tpu.memory_space<vmem>>, vector<24x256xf32>,
    %c0_26 = arith.constant 0 : index
    %c0_27 = arith.constant 0 : index
    %55 = vector.load %arg8[%c0_26, %c0_27] : memref<72x256xf32, #tpu.memory_space<vmem>>, vector<72x256xf32>
    %56 = arith.truncf %55 : vector<72x256xf32> to vector<72x256xbf16>
    %c0_28 = arith.constant 0 : index
    %c0_29 = arith.constant 0 : index
    %57 = vector.load %arg2[%c0_28, %c0_29] : memref<8x72xbf16, #tpu.memory_space<vmem>>, vector<8x72xbf16>
    %cst_30 = arith.constant dense<0.000000e+00> : vector<8x256xf32>
    %58 = tpu.matmul %57, %56, %cst_30 {dimension_numbers = #tpu.dot_dimension_numbers<[1], [0], [0], [1], [0, 0, 1, 1], [], []>} : vector<8x72xbf16>, vector<72x256xbf16>, vector<8x256xf32> -> vector<8x256xf32>
    %c0_31 = arith.constant 0 : index
    %c0_32 = arith.constant 0 : index
    %59 = vector.load %arg3[%c0_31, %c0_32] : memref<8x1xf32, #tpu.memory_space<vmem>>, vector<8x1xf32>
    %60 = vector.broadcast %59 : vector<8x1xf32> to vector<8x256xf32>
    %61 = arith.addf %58, %60 : vector<8x256xf32>
    %cst_33 = arith.constant 0.000000e+00 : f32
    %62 = vector.broadcast %cst_33 : f32 to vector<8x256xf32>
    %63 = arith.maximumf %61, %62 : vector<8x256xf32>
    %c16_i32_34 = arith.constant 16 : i32
    %64 = tpu.dynamic_rotate %63 by %c16_i32_34 dim 1 : vector<8x256xf32>, i32 -> vector<8x256xf32>
    %65 = vector.broadcast %23 : vector<1x256xf32> to vector<8x256xf32>
    %66 = arith.mulf %64, %65 : vector<8x256xf32>
    %c24_35 = arith.constant 24 : index
    %c0_36 = arith.constant 0 : index
    %67 = vector.load %arg8[%c24_35, %c0_36] : memref<72x256xf32, #tpu.memory_space<vmem>>, vector<8x256xf32>
    tpu.vector_store %arg8[%c24_35, %c0_36], %66 {strides = array<i32>} : memref<72x256xf32, #tpu.memory_space<vmem>>, vector<8x256xf32>,
    %c32_37 = arith.constant 32 : index
    %c0_38 = arith.constant 0 : index
    %68 = vector.load %arg8[%c32_37, %c0_38] : memref<72x256xf32, #tpu.memory_space<vmem>>, vector<8x256xf32>
    tpu.vector_store %arg8[%c32_37, %c0_38], %63 {strides = array<i32>} : memref<72x256xf32, #tpu.memory_space<vmem>>, vector<8x256xf32>,
    %c240_i32_39 = arith.constant 240 : i32
    %69 = tpu.dynamic_rotate %63 by %c240_i32_39 dim 1 : vector<8x256xf32>, i32 -> vector<8x256xf32>
    %70 = vector.broadcast %27 : vector<1x256xf32> to vector<8x256xf32>
    %71 = arith.mulf %69, %70 : vector<8x256xf32>
    %c40_40 = arith.constant 40 : index
    %c0_41 = arith.constant 0 : index
    %72 = vector.load %arg8[%c40_40, %c0_41] : memref<72x256xf32, #tpu.memory_space<vmem>>, vector<8x256xf32>
    tpu.vector_store %arg8[%c40_40, %c0_41], %71 {strides = array<i32>} : memref<72x256xf32, #tpu.memory_space<vmem>>, vector<8x256xf32>,
    %c24_42 = arith.constant 24 : index
    %c0_43 = arith.constant 0 : index
    %73 = vector.load %arg8[%c24_42, %c0_43] : memref<72x256xf32, #tpu.memory_space<vmem>>, vector<24x256xf32>
    %c1_i32_44 = arith.constant 1 : i32
    %74 = tpu.dynamic_rotate %73 by %c1_i32_44 dim 1 : vector<24x256xf32>, i32 -> vector<24x256xf32>
    %75 = vector.broadcast %31 : vector<1x256xf32> to vector<24x256xf32>
    %76 = arith.mulf %74, %75 : vector<24x256xf32>
    %c0_45 = arith.constant 0 : index
    %c0_46 = arith.constant 0 : index
    %77 = vector.load %arg8[%c0_45, %c0_46] : memref<72x256xf32, #tpu.memory_space<vmem>>, vector<24x256xf32>
    tpu.vector_store %arg8[%c0_45, %c0_46], %76 {strides = array<i32>} : memref<72x256xf32, #tpu.memory_space<vmem>>, vector<24x256xf32>,
    %c255_i32_47 = arith.constant 255 : i32
    %78 = tpu.dynamic_rotate %73 by %c255_i32_47 dim 1 : vector<24x256xf32>, i32 -> vector<24x256xf32>
    %79 = vector.broadcast %35 : vector<1x256xf32> to vector<24x256xf32>
    %80 = arith.mulf %78, %79 : vector<24x256xf32>
    %c48_48 = arith.constant 48 : index
    %c0_49 = arith.constant 0 : index
    %81 = vector.load %arg8[%c48_48, %c0_49] : memref<72x256xf32, #tpu.memory_space<vmem>>, vector<24x256xf32>
    tpu.vector_store %arg8[%c48_48, %c0_49], %80 {strides = array<i32>} : memref<72x256xf32, #tpu.memory_space<vmem>>, vector<24x256xf32>,
    %c0_50 = arith.constant 0 : index
    %c0_51 = arith.constant 0 : index
    %82 = vector.load %arg8[%c0_50, %c0_51] : memref<72x256xf32, #tpu.memory_space<vmem>>, vector<72x256xf32>
    %83 = arith.truncf %82 : vector<72x256xf32> to vector<72x256xbf16>
    %c0_52 = arith.constant 0 : index
    %c0_53 = arith.constant 0 : index
    %84 = vector.load %arg4[%c0_52, %c0_53] : memref<1x72xbf16, #tpu.memory_space<vmem>>, vector<1x72xbf16>
    %cst_54 = arith.constant dense<0.000000e+00> : vector<1x256xf32>
    %85 = tpu.matmul %84, %83, %cst_54 {dimension_numbers = #tpu.dot_dimension_numbers<[1], [0], [0], [1], [0, 0, 1, 1], [], []>} : vector<1x72xbf16>, vector<72x256xbf16>, vector<1x256xf32> -> vector<1x256xf32>
    %c0_55 = arith.constant 0 : index
    %c0_56 = arith.constant 0 : index
    %86 = vector.load %arg5[%c0_55, %c0_56] : memref<1x1xf32, #tpu.memory_space<vmem>>, vector<1x1xf32>
    %87 = vector.broadcast %86 : vector<1x1xf32> to vector<1x256xf32>
    %88 = arith.addf %85, %87 : vector<1x256xf32>
    %89 = arith.negf %88 : vector<1x256xf32>
    %90 = math.exp %89 : vector<1x256xf32>
    %cst_57 = arith.constant 1.000000e+00 : f32
    %91 = vector.broadcast %cst_57 : f32 to vector<1x256xf32>
    %92 = arith.addf %91, %90 : vector<1x256xf32>
    %93 = arith.divf %91, %92 : vector<1x256xf32>
    %c0_58 = arith.constant 0 : index
    %c0_59 = arith.constant 0 : index
    %c0_60 = arith.constant 0 : index
    %94 = vector.load %arg6[%c0_58, %c0_59, %c0_60] : memref<1x1x256xf32, #tpu.memory_space<vmem>>, vector<1x1x256xf32>
    %95 = vector.shape_cast %94 : vector<1x1x256xf32> to vector<1x256xf32>
    %96 = vector.shape_cast %93 : vector<1x256xf32> to vector<1x1x256xf32>
    tpu.vector_store %arg6[%c0_58, %c0_59, %c0_60], %96 {strides = array<i32>} : memref<1x1x256xf32, #tpu.memory_space<vmem>>, vector<1x1x256xf32>,
    return
  }
  func.func @transform_0(%arg0: i32) -> (i32, i32, i32) {
    %c0_i32 = arith.constant 0 : i32
    %c0_i32_0 = arith.constant 0 : i32
    %c0_i32_1 = arith.constant 0 : i32
    return %arg0, %c0_i32, %c0_i32_0 : i32, i32, i32
  }
  func.func @transform_1(%arg0: i32) -> (i32, i32) {
    %c0_i32 = arith.constant 0 : i32
    %c0_i32_0 = arith.constant 0 : i32
    %c0_i32_1 = arith.constant 0 : i32
    return %c0_i32, %c0_i32_0 : i32, i32
  }
  func.func @transform_2(%arg0: i32) -> (i32, i32) {
    %c0_i32 = arith.constant 0 : i32
    %c0_i32_0 = arith.constant 0 : i32
    %c0_i32_1 = arith.constant 0 : i32
    return %c0_i32, %c0_i32_0 : i32, i32
  }
  func.func @transform_3(%arg0: i32) -> (i32, i32) {
    %c0_i32 = arith.constant 0 : i32
    %c0_i32_0 = arith.constant 0 : i32
    %c0_i32_1 = arith.constant 0 : i32
    return %c0_i32, %c0_i32_0 : i32, i32
  }
  func.func @transform_4(%arg0: i32) -> (i32, i32) {
    %c0_i32 = arith.constant 0 : i32
    %c0_i32_0 = arith.constant 0 : i32
    %c0_i32_1 = arith.constant 0 : i32
    return %c0_i32, %c0_i32_0 : i32, i32
  }
  func.func @transform_5(%arg0: i32) -> (i32, i32, i32) {
    %c0_i32 = arith.constant 0 : i32
    %c0_i32_0 = arith.constant 0 : i32
    %c0_i32_1 = arith.constant 0 : i32
    return %arg0, %c0_i32, %c0_i32_0 : i32, i32, i32
  }
}

module attributes {stable_mosaic.version = 11 : i64} {
  func.func @_canet_kernel(%arg0: i32, %arg1: memref<1x3x256xf32, #tpu.memory_space<vmem>>, %arg2: memref<1x1x256xf32, #tpu.memory_space<vmem>>, %arg3: memref<1x3x256xf32, #tpu.memory_space<vmem>>, %arg4: memref<16x72xbf16, #tpu.memory_space<vmem>>, %arg5: memref<16x1xf32, #tpu.memory_space<vmem>>, %arg6: memref<2x144xbf16, #tpu.memory_space<vmem>>, %arg7: memref<2x1xf32, #tpu.memory_space<vmem>>, %arg8: memref<1x3x256xf32, #tpu.memory_space<vmem>>, %arg9: memref<1x24x128xf32, #tpu.memory_space<vmem>>, %arg10: memref<8x256xf32, #tpu.memory_space<vmem>>, %arg11: memref<144x256xf32, #tpu.memory_space<vmem>>) attributes {dimension_semantics = [#tpu.dimension_semantics<parallel>], iteration_bounds = array<i64: 8>, scalar_prefetch = 0 : i64, scratch_operands = 2 : i64, tpu.core_type = #tpu.core_type<tc>, window_params = [{transform_indices = @transform_0, window_bounds = array<i64: 1, 3, 256>}, {transform_indices = @transform_1, window_bounds = array<i64: 1, 1, 256>}, {pipeline_mode = #tpu.pipeline_mode<synchronous>, transform_indices = @transform_2, window_bounds = array<i64: 1, 3, 256>}, {pipeline_mode = #tpu.pipeline_mode<synchronous>, transform_indices = @transform_3, window_bounds = array<i64: 16, 72>}, {pipeline_mode = #tpu.pipeline_mode<synchronous>, transform_indices = @transform_4, window_bounds = array<i64: 16, 1>}, {pipeline_mode = #tpu.pipeline_mode<synchronous>, transform_indices = @transform_5, window_bounds = array<i64: 2, 144>}, {pipeline_mode = #tpu.pipeline_mode<synchronous>, transform_indices = @transform_6, window_bounds = array<i64: 2, 1>}, {transform_indices = @transform_7, window_bounds = array<i64: 1, 3, 256>}, {transform_indices = @transform_8, window_bounds = array<i64: 1, 24, 128>}]} {
    %c0 = arith.constant 0 : index
    %c0_0 = arith.constant 0 : index
    %c0_1 = arith.constant 0 : index
    %0 = vector.load %arg1[%c0, %c0_0, %c0_1] : memref<1x3x256xf32, #tpu.memory_space<vmem>>, vector<1x1x256xf32>
    %1 = vector.shape_cast %0 : vector<1x1x256xf32> to vector<1x256xf32>
    %c0_2 = arith.constant 0 : index
    %c1 = arith.constant 1 : index
    %c0_3 = arith.constant 0 : index
    %2 = vector.load %arg1[%c0_2, %c1, %c0_3] : memref<1x3x256xf32, #tpu.memory_space<vmem>>, vector<1x1x256xf32>
    %3 = vector.shape_cast %2 : vector<1x1x256xf32> to vector<1x256xf32>
    %c0_4 = arith.constant 0 : index
    %c2 = arith.constant 2 : index
    %c0_5 = arith.constant 0 : index
    %4 = vector.load %arg1[%c0_4, %c2, %c0_5] : memref<1x3x256xf32, #tpu.memory_space<vmem>>, vector<1x1x256xf32>
    %5 = vector.shape_cast %4 : vector<1x1x256xf32> to vector<1x256xf32>
    %cst = arith.constant 2.990000e-01 : f32
    %6 = vector.broadcast %cst : f32 to vector<1x256xf32>
    %7 = arith.mulf %6, %1 : vector<1x256xf32>
    %cst_6 = arith.constant 5.870000e-01 : f32
    %8 = vector.broadcast %cst_6 : f32 to vector<1x256xf32>
    %9 = arith.mulf %8, %3 : vector<1x256xf32>
    %10 = arith.addf %7, %9 : vector<1x256xf32>
    %cst_7 = arith.constant 1.140000e-01 : f32
    %11 = vector.broadcast %cst_7 : f32 to vector<1x256xf32>
    %12 = arith.mulf %11, %5 : vector<1x256xf32>
    %13 = arith.addf %10, %12 : vector<1x256xf32>
    %14 = arith.subf %5, %13 : vector<1x256xf32>
    %cst_8 = arith.constant 5.640000e-01 : f32
    %15 = vector.broadcast %cst_8 : f32 to vector<1x256xf32>
    %16 = arith.mulf %14, %15 : vector<1x256xf32>
    %cst_9 = arith.constant 5.000000e-01 : f32
    %17 = vector.broadcast %cst_9 : f32 to vector<1x256xf32>
    %18 = arith.addf %16, %17 : vector<1x256xf32>
    %19 = arith.subf %1, %13 : vector<1x256xf32>
    %cst_10 = arith.constant 0.712999999 : f32
    %20 = vector.broadcast %cst_10 : f32 to vector<1x256xf32>
    %21 = arith.mulf %19, %20 : vector<1x256xf32>
    %cst_11 = arith.constant 5.000000e-01 : f32
    %22 = vector.broadcast %cst_11 : f32 to vector<1x256xf32>
    %23 = arith.addf %21, %22 : vector<1x256xf32>
    %c0_12 = arith.constant 0 : index
    %c0_13 = arith.constant 0 : index
    %c0_14 = arith.constant 0 : index
    %24 = vector.load %arg3[%c0_12, %c0_13, %c0_14] : memref<1x3x256xf32, #tpu.memory_space<vmem>>, vector<1x1x256xf32>
    %25 = vector.shape_cast %24 : vector<1x1x256xf32> to vector<1x256xf32>
    %c0_15 = arith.constant 0 : index
    %c1_16 = arith.constant 1 : index
    %c0_17 = arith.constant 0 : index
    %26 = vector.load %arg3[%c0_15, %c1_16, %c0_17] : memref<1x3x256xf32, #tpu.memory_space<vmem>>, vector<1x1x256xf32>
    %27 = vector.shape_cast %26 : vector<1x1x256xf32> to vector<1x256xf32>
    %c0_18 = arith.constant 0 : index
    %c2_19 = arith.constant 2 : index
    %c0_20 = arith.constant 0 : index
    %28 = vector.load %arg3[%c0_18, %c2_19, %c0_20] : memref<1x3x256xf32, #tpu.memory_space<vmem>>, vector<1x1x256xf32>
    %29 = vector.shape_cast %28 : vector<1x1x256xf32> to vector<1x256xf32>
    %cst_21 = arith.constant 2.990000e-01 : f32
    %30 = vector.broadcast %cst_21 : f32 to vector<1x256xf32>
    %31 = arith.mulf %30, %25 : vector<1x256xf32>
    %cst_22 = arith.constant 5.870000e-01 : f32
    %32 = vector.broadcast %cst_22 : f32 to vector<1x256xf32>
    %33 = arith.mulf %32, %27 : vector<1x256xf32>
    %34 = arith.addf %31, %33 : vector<1x256xf32>
    %cst_23 = arith.constant 1.140000e-01 : f32
    %35 = vector.broadcast %cst_23 : f32 to vector<1x256xf32>
    %36 = arith.mulf %35, %29 : vector<1x256xf32>
    %37 = arith.addf %34, %36 : vector<1x256xf32>
    %38 = arith.subf %29, %37 : vector<1x256xf32>
    %cst_24 = arith.constant 5.640000e-01 : f32
    %39 = vector.broadcast %cst_24 : f32 to vector<1x256xf32>
    %40 = arith.mulf %38, %39 : vector<1x256xf32>
    %cst_25 = arith.constant 5.000000e-01 : f32
    %41 = vector.broadcast %cst_25 : f32 to vector<1x256xf32>
    %42 = arith.addf %40, %41 : vector<1x256xf32>
    %43 = arith.subf %25, %37 : vector<1x256xf32>
    %cst_26 = arith.constant 0.712999999 : f32
    %44 = vector.broadcast %cst_26 : f32 to vector<1x256xf32>
    %45 = arith.mulf %43, %44 : vector<1x256xf32>
    %cst_27 = arith.constant 5.000000e-01 : f32
    %46 = vector.broadcast %cst_27 : f32 to vector<1x256xf32>
    %47 = arith.addf %45, %46 : vector<1x256xf32>
    %c0_28 = arith.constant 0 : index
    %c0_29 = arith.constant 0 : index
    %c0_30 = arith.constant 0 : index
    %48 = vector.load %arg2[%c0_28, %c0_29, %c0_30] : memref<1x1x256xf32, #tpu.memory_space<vmem>>, vector<1x1x256xf32>
    %49 = vector.shape_cast %48 : vector<1x1x256xf32> to vector<1x256xf32>
    %cst_31 = arith.constant 0.00999999977 : f32
    %50 = vector.broadcast %cst_31 : f32 to vector<1x256xf32>
    %51 = arith.maximumf %49, %50 : vector<1x256xf32>
    %cst_32 = arith.constant 1.000000e+00 : f32
    %52 = vector.broadcast %cst_32 : f32 to vector<1x256xf32>
    %53 = arith.divf %52, %51 : vector<1x256xf32>
    %54 = arith.mulf %1, %53 : vector<1x256xf32>
    %55 = arith.mulf %3, %53 : vector<1x256xf32>
    %56 = arith.mulf %5, %53 : vector<1x256xf32>
    %cst_33 = arith.constant 2.990000e-01 : f32
    %57 = vector.broadcast %cst_33 : f32 to vector<1x256xf32>
    %58 = arith.mulf %57, %54 : vector<1x256xf32>
    %cst_34 = arith.constant 5.870000e-01 : f32
    %59 = vector.broadcast %cst_34 : f32 to vector<1x256xf32>
    %60 = arith.mulf %59, %55 : vector<1x256xf32>
    %61 = arith.addf %58, %60 : vector<1x256xf32>
    %cst_35 = arith.constant 1.140000e-01 : f32
    %62 = vector.broadcast %cst_35 : f32 to vector<1x256xf32>
    %63 = arith.mulf %62, %56 : vector<1x256xf32>
    %64 = arith.addf %61, %63 : vector<1x256xf32>
    %65 = arith.subf %56, %64 : vector<1x256xf32>
    %cst_36 = arith.constant 5.640000e-01 : f32
    %66 = vector.broadcast %cst_36 : f32 to vector<1x256xf32>
    %67 = arith.mulf %65, %66 : vector<1x256xf32>
    %cst_37 = arith.constant 5.000000e-01 : f32
    %68 = vector.broadcast %cst_37 : f32 to vector<1x256xf32>
    %69 = arith.addf %67, %68 : vector<1x256xf32>
    %70 = arith.subf %54, %64 : vector<1x256xf32>
    %cst_38 = arith.constant 0.712999999 : f32
    %71 = vector.broadcast %cst_38 : f32 to vector<1x256xf32>
    %72 = arith.mulf %70, %71 : vector<1x256xf32>
    %cst_39 = arith.constant 5.000000e-01 : f32
    %73 = vector.broadcast %cst_39 : f32 to vector<1x256xf32>
    %74 = arith.addf %72, %73 : vector<1x256xf32>
    %cst_40 = arith.constant 0.000000e+00 : f32
    %75 = vector.broadcast %cst_40 : f32 to vector<8x256xf32>
    %c0_41 = arith.constant 0 : index
    %c0_42 = arith.constant 0 : index
    %76 = vector.load %arg10[%c0_41, %c0_42] : memref<8x256xf32, #tpu.memory_space<vmem>>, vector<8x256xf32>
    tpu.vector_store %arg10[%c0_41, %c0_42], %75 {strides = array<i32>} : memref<8x256xf32, #tpu.memory_space<vmem>>, vector<8x256xf32>,
    %c0_43 = arith.constant 0 : index
    %c0_44 = arith.constant 0 : index
    %77 = vector.load %arg10[%c0_43, %c0_44] : memref<8x256xf32, #tpu.memory_space<vmem>>, vector<1x256xf32>
    tpu.vector_store %arg10[%c0_43, %c0_44], %13 {strides = array<i32>} : memref<8x256xf32, #tpu.memory_space<vmem>>, vector<1x256xf32>,
    %c1_45 = arith.constant 1 : index
    %c0_46 = arith.constant 0 : index
    %78 = vector.load %arg10[%c1_45, %c0_46] : memref<8x256xf32, #tpu.memory_space<vmem>>, vector<1x256xf32>
    tpu.vector_store %arg10[%c1_45, %c0_46], %18 {strides = array<i32>} : memref<8x256xf32, #tpu.memory_space<vmem>>, vector<1x256xf32>,
    %c2_47 = arith.constant 2 : index
    %c0_48 = arith.constant 0 : index
    %79 = vector.load %arg10[%c2_47, %c0_48] : memref<8x256xf32, #tpu.memory_space<vmem>>, vector<1x256xf32>
    tpu.vector_store %arg10[%c2_47, %c0_48], %23 {strides = array<i32>} : memref<8x256xf32, #tpu.memory_space<vmem>>, vector<1x256xf32>,
    %c3 = arith.constant 3 : index
    %c0_49 = arith.constant 0 : index
    %80 = vector.load %arg10[%c3, %c0_49] : memref<8x256xf32, #tpu.memory_space<vmem>>, vector<1x256xf32>
    tpu.vector_store %arg10[%c3, %c0_49], %37 {strides = array<i32>} : memref<8x256xf32, #tpu.memory_space<vmem>>, vector<1x256xf32>,
    %c4 = arith.constant 4 : index
    %c0_50 = arith.constant 0 : index
    %81 = vector.load %arg10[%c4, %c0_50] : memref<8x256xf32, #tpu.memory_space<vmem>>, vector<1x256xf32>
    tpu.vector_store %arg10[%c4, %c0_50], %69 {strides = array<i32>} : memref<8x256xf32, #tpu.memory_space<vmem>>, vector<1x256xf32>,
    %c5 = arith.constant 5 : index
    %c0_51 = arith.constant 0 : index
    %82 = vector.load %arg10[%c5, %c0_51] : memref<8x256xf32, #tpu.memory_space<vmem>>, vector<1x256xf32>
    tpu.vector_store %arg10[%c5, %c0_51], %74 {strides = array<i32>} : memref<8x256xf32, #tpu.memory_space<vmem>>, vector<1x256xf32>,
    %83 = tpu.iota {dimensions = array<i32: 1>} : vector<1x256xi32>
    %c15_i32 = arith.constant 15 : i32
    %84 = vector.broadcast %c15_i32 : i32 to vector<1x256xi32>
    %85 = arith.andi %83, %84 : vector<1x256xi32>
    %c16_i32 = arith.constant 16 : i32
    %86 = vector.broadcast %c16_i32 : i32 to vector<1x256xi32>
    %87 = arith.cmpi sge, %83, %86 : vector<1x256xi32>
    %88 = arith.extui %87 : vector<1x256xi1> to vector<1x256xi32>
    %89 = arith.sitofp %88 : vector<1x256xi32> to vector<1x256xf32>
    %c240_i32 = arith.constant 240 : i32
    %90 = vector.broadcast %c240_i32 : i32 to vector<1x256xi32>
    %91 = arith.cmpi slt, %83, %90 : vector<1x256xi32>
    %92 = arith.extui %91 : vector<1x256xi1> to vector<1x256xi32>
    %93 = arith.sitofp %92 : vector<1x256xi32> to vector<1x256xf32>
    %c0_i32 = arith.constant 0 : i32
    %94 = vector.broadcast %c0_i32 : i32 to vector<1x256xi32>
    %95 = arith.cmpi ne, %85, %94 : vector<1x256xi32>
    %96 = arith.extui %95 : vector<1x256xi1> to vector<1x256xi32>
    %97 = arith.sitofp %96 : vector<1x256xi32> to vector<1x256xf32>
    %c15_i32_52 = arith.constant 15 : i32
    %98 = vector.broadcast %c15_i32_52 : i32 to vector<1x256xi32>
    %99 = arith.cmpi ne, %85, %98 : vector<1x256xi32>
    %100 = arith.extui %99 : vector<1x256xi1> to vector<1x256xi32>
    %101 = arith.sitofp %100 : vector<1x256xi32> to vector<1x256xf32>
    %c0_53 = arith.constant 0 : index
    %c0_54 = arith.constant 0 : index
    %102 = vector.load %arg10[%c0_53, %c0_54] : memref<8x256xf32, #tpu.memory_space<vmem>>, vector<8x256xf32>
    %c16_i32_55 = arith.constant 16 : i32
    %103 = tpu.dynamic_rotate %102 by %c16_i32_55 dim 1 : vector<8x256xf32>, i32 -> vector<8x256xf32>
    %104 = vector.broadcast %89 : vector<1x256xf32> to vector<8x256xf32>
    %105 = arith.mulf %103, %104 : vector<8x256xf32>
    %c24 = arith.constant 24 : index
    %c0_56 = arith.constant 0 : index
    %106 = vector.load %arg11[%c24, %c0_56] : memref<144x256xf32, #tpu.memory_space<vmem>>, vector<8x256xf32>
    tpu.vector_store %arg11[%c24, %c0_56], %105 {strides = array<i32>} : memref<144x256xf32, #tpu.memory_space<vmem>>, vector<8x256xf32>,
    %c32 = arith.constant 32 : index
    %c0_57 = arith.constant 0 : index
    %107 = vector.load %arg11[%c32, %c0_57] : memref<144x256xf32, #tpu.memory_space<vmem>>, vector<8x256xf32>
    tpu.vector_store %arg11[%c32, %c0_57], %102 {strides = array<i32>} : memref<144x256xf32, #tpu.memory_space<vmem>>, vector<8x256xf32>,
    %c240_i32_58 = arith.constant 240 : i32
    %108 = tpu.dynamic_rotate %102 by %c240_i32_58 dim 1 : vector<8x256xf32>, i32 -> vector<8x256xf32>
    %109 = vector.broadcast %93 : vector<1x256xf32> to vector<8x256xf32>
    %110 = arith.mulf %108, %109 : vector<8x256xf32>
    %c40 = arith.constant 40 : index
    %c0_59 = arith.constant 0 : index
    %111 = vector.load %arg11[%c40, %c0_59] : memref<144x256xf32, #tpu.memory_space<vmem>>, vector<8x256xf32>
    tpu.vector_store %arg11[%c40, %c0_59], %110 {strides = array<i32>} : memref<144x256xf32, #tpu.memory_space<vmem>>, vector<8x256xf32>,
    %c24_60 = arith.constant 24 : index
    %c0_61 = arith.constant 0 : index
    %112 = vector.load %arg11[%c24_60, %c0_61] : memref<144x256xf32, #tpu.memory_space<vmem>>, vector<24x256xf32>
    %c1_i32 = arith.constant 1 : i32
    %113 = tpu.dynamic_rotate %112 by %c1_i32 dim 1 : vector<24x256xf32>, i32 -> vector<24x256xf32>
    %114 = vector.broadcast %97 : vector<1x256xf32> to vector<24x256xf32>
    %115 = arith.mulf %113, %114 : vector<24x256xf32>
    %c0_62 = arith.constant 0 : index
    %c0_63 = arith.constant 0 : index
    %116 = vector.load %arg11[%c0_62, %c0_63] : memref<144x256xf32, #tpu.memory_space<vmem>>, vector<24x256xf32>
    tpu.vector_store %arg11[%c0_62, %c0_63], %115 {strides = array<i32>} : memref<144x256xf32, #tpu.memory_space<vmem>>, vector<24x256xf32>,
    %c255_i32 = arith.constant 255 : i32
    %117 = tpu.dynamic_rotate %112 by %c255_i32 dim 1 : vector<24x256xf32>, i32 -> vector<24x256xf32>
    %118 = vector.broadcast %101 : vector<1x256xf32> to vector<24x256xf32>
    %119 = arith.mulf %117, %118 : vector<24x256xf32>
    %c48 = arith.constant 48 : index
    %c0_64 = arith.constant 0 : index
    %120 = vector.load %arg11[%c48, %c0_64] : memref<144x256xf32, #tpu.memory_space<vmem>>, vector<24x256xf32>
    tpu.vector_store %arg11[%c48, %c0_64], %119 {strides = array<i32>} : memref<144x256xf32, #tpu.memory_space<vmem>>, vector<24x256xf32>,
    %c0_65 = arith.constant 0 : index
    %c0_66 = arith.constant 0 : index
    %121 = vector.load %arg11[%c0_65, %c0_66] : memref<144x256xf32, #tpu.memory_space<vmem>>, vector<72x256xf32>
    %122 = arith.truncf %121 : vector<72x256xf32> to vector<72x256xbf16>
    %c0_67 = arith.constant 0 : index
    %c0_68 = arith.constant 0 : index
    %123 = vector.load %arg4[%c0_67, %c0_68] : memref<16x72xbf16, #tpu.memory_space<vmem>>, vector<16x72xbf16>
    %cst_69 = arith.constant dense<0.000000e+00> : vector<16x256xf32>
    %124 = tpu.matmul %123, %122, %cst_69 {dimension_numbers = #tpu.dot_dimension_numbers<[1], [0], [0], [1], [0, 0, 1, 1], [], []>} : vector<16x72xbf16>, vector<72x256xbf16>, vector<16x256xf32> -> vector<16x256xf32>
    %c0_70 = arith.constant 0 : index
    %c0_71 = arith.constant 0 : index
    %125 = vector.load %arg5[%c0_70, %c0_71] : memref<16x1xf32, #tpu.memory_space<vmem>>, vector<16x1xf32>
    %126 = vector.broadcast %125 : vector<16x1xf32> to vector<16x256xf32>
    %127 = arith.addf %124, %126 : vector<16x256xf32>
    %cst_72 = arith.constant 0.000000e+00 : f32
    %128 = vector.broadcast %cst_72 : f32 to vector<16x256xf32>
    %129 = arith.maximumf %127, %128 : vector<16x256xf32>
    %c16_i32_73 = arith.constant 16 : i32
    %130 = tpu.dynamic_rotate %129 by %c16_i32_73 dim 1 : vector<16x256xf32>, i32 -> vector<16x256xf32>
    %131 = vector.broadcast %89 : vector<1x256xf32> to vector<16x256xf32>
    %132 = arith.mulf %130, %131 : vector<16x256xf32>
    %c48_74 = arith.constant 48 : index
    %c0_75 = arith.constant 0 : index
    %133 = vector.load %arg11[%c48_74, %c0_75] : memref<144x256xf32, #tpu.memory_space<vmem>>, vector<16x256xf32>
    tpu.vector_store %arg11[%c48_74, %c0_75], %132 {strides = array<i32>} : memref<144x256xf32, #tpu.memory_space<vmem>>, vector<16x256xf32>,
    %c64 = arith.constant 64 : index
    %c0_76 = arith.constant 0 : index
    %134 = vector.load %arg11[%c64, %c0_76] : memref<144x256xf32, #tpu.memory_space<vmem>>, vector<16x256xf32>
    tpu.vector_store %arg11[%c64, %c0_76], %129 {strides = array<i32>} : memref<144x256xf32, #tpu.memory_space<vmem>>, vector<16x256xf32>,
    %c240_i32_77 = arith.constant 240 : i32
    %135 = tpu.dynamic_rotate %129 by %c240_i32_77 dim 1 : vector<16x256xf32>, i32 -> vector<16x256xf32>
    %136 = vector.broadcast %93 : vector<1x256xf32> to vector<16x256xf32>
    %137 = arith.mulf %135, %136 : vector<16x256xf32>
    %c80 = arith.constant 80 : index
    %c0_78 = arith.constant 0 : index
    %138 = vector.load %arg11[%c80, %c0_78] : memref<144x256xf32, #tpu.memory_space<vmem>>, vector<16x256xf32>
    tpu.vector_store %arg11[%c80, %c0_78], %137 {strides = array<i32>} : memref<144x256xf32, #tpu.memory_space<vmem>>, vector<16x256xf32>,
    %c48_79 = arith.constant 48 : index
    %c0_80 = arith.constant 0 : index
    %139 = vector.load %arg11[%c48_79, %c0_80] : memref<144x256xf32, #tpu.memory_space<vmem>>, vector<48x256xf32>
    %c1_i32_81 = arith.constant 1 : i32
    %140 = tpu.dynamic_rotate %139 by %c1_i32_81 dim 1 : vector<48x256xf32>, i32 -> vector<48x256xf32>
    %141 = vector.broadcast %97 : vector<1x256xf32> to vector<48x256xf32>
    %142 = arith.mulf %140, %141 : vector<48x256xf32>
    %c0_82 = arith.constant 0 : index
    %c0_83 = arith.constant 0 : index
    %143 = vector.load %arg11[%c0_82, %c0_83] : memref<144x256xf32, #tpu.memory_space<vmem>>, vector<48x256xf32>
    tpu.vector_store %arg11[%c0_82, %c0_83], %142 {strides = array<i32>} : memref<144x256xf32, #tpu.memory_space<vmem>>, vector<48x256xf32>,
    %c255_i32_84 = arith.constant 255 : i32
    %144 = tpu.dynamic_rotate %139 by %c255_i32_84 dim 1 : vector<48x256xf32>, i32 -> vector<48x256xf32>
    %145 = vector.broadcast %101 : vector<1x256xf32> to vector<48x256xf32>
    %146 = arith.mulf %144, %145 : vector<48x256xf32>
    %c96 = arith.constant 96 : index
    %c0_85 = arith.constant 0 : index
    %147 = vector.load %arg11[%c96, %c0_85] : memref<144x256xf32, #tpu.memory_space<vmem>>, vector<48x256xf32>
    tpu.vector_store %arg11[%c96, %c0_85], %146 {strides = array<i32>} : memref<144x256xf32, #tpu.memory_space<vmem>>, vector<48x256xf32>,
    %c0_86 = arith.constant 0 : index
    %c0_87 = arith.constant 0 : index
    %148 = vector.load %arg11[%c0_86, %c0_87] : memref<144x256xf32, #tpu.memory_space<vmem>>, vector<144x256xf32>
    %149 = arith.truncf %148 : vector<144x256xf32> to vector<144x256xbf16>
    %c0_88 = arith.constant 0 : index
    %c0_89 = arith.constant 0 : index
    %150 = vector.load %arg6[%c0_88, %c0_89] : memref<2x144xbf16, #tpu.memory_space<vmem>>, vector<2x144xbf16>
    %cst_90 = arith.constant dense<0.000000e+00> : vector<2x256xf32>
    %151 = tpu.matmul %150, %149, %cst_90 {dimension_numbers = #tpu.dot_dimension_numbers<[1], [0], [0], [1], [0, 0, 1, 1], [], []>} : vector<2x144xbf16>, vector<144x256xbf16>, vector<2x256xf32> -> vector<2x256xf32>
    %c0_91 = arith.constant 0 : index
    %c0_92 = arith.constant 0 : index
    %152 = vector.load %arg7[%c0_91, %c0_92] : memref<2x1xf32, #tpu.memory_space<vmem>>, vector<2x1xf32>
    %153 = vector.broadcast %152 : vector<2x1xf32> to vector<2x256xf32>
    %154 = arith.addf %151, %153 : vector<2x256xf32>
    %155 = arith.negf %154 : vector<2x256xf32>
    %156 = math.exp %155 : vector<2x256xf32>
    %cst_93 = arith.constant 1.000000e+00 : f32
    %157 = vector.broadcast %cst_93 : f32 to vector<2x256xf32>
    %158 = arith.addf %157, %156 : vector<2x256xf32>
    %159 = arith.divf %157, %158 : vector<2x256xf32>
    %160 = vector.extract_strided_slice %159 {offsets = [0, 0], sizes = [1, 256], strides = [1, 1]} : vector<2x256xf32> to vector<1x256xf32>
    %161 = vector.extract_strided_slice %159 {offsets = [1, 0], sizes = [1, 256], strides = [1, 1]} : vector<2x256xf32> to vector<1x256xf32>
    %cst_94 = arith.constant 5.000000e-01 : f32
    %162 = vector.broadcast %cst_94 : f32 to vector<1x256xf32>
    %163 = arith.subf %160, %162 : vector<1x256xf32>
    %cst_95 = arith.constant 5.000000e-01 : f32
    %164 = vector.broadcast %cst_95 : f32 to vector<1x256xf32>
    %165 = arith.subf %161, %164 : vector<1x256xf32>
    %cst_96 = arith.constant 1.403000e+00 : f32
    %166 = vector.broadcast %cst_96 : f32 to vector<1x256xf32>
    %167 = arith.mulf %166, %165 : vector<1x256xf32>
    %168 = arith.addf %37, %167 : vector<1x256xf32>
    %cst_97 = arith.constant 7.140000e-01 : f32
    %169 = vector.broadcast %cst_97 : f32 to vector<1x256xf32>
    %170 = arith.mulf %169, %165 : vector<1x256xf32>
    %171 = arith.subf %37, %170 : vector<1x256xf32>
    %cst_98 = arith.constant 3.440000e-01 : f32
    %172 = vector.broadcast %cst_98 : f32 to vector<1x256xf32>
    %173 = arith.mulf %172, %163 : vector<1x256xf32>
    %174 = arith.subf %171, %173 : vector<1x256xf32>
    %cst_99 = arith.constant 1.773000e+00 : f32
    %175 = vector.broadcast %cst_99 : f32 to vector<1x256xf32>
    %176 = arith.mulf %175, %163 : vector<1x256xf32>
    %177 = arith.addf %37, %176 : vector<1x256xf32>
    %c0_100 = arith.constant 0 : index
    %c0_101 = arith.constant 0 : index
    %c0_102 = arith.constant 0 : index
    %178 = vector.load %arg8[%c0_100, %c0_101, %c0_102] : memref<1x3x256xf32, #tpu.memory_space<vmem>>, vector<1x1x256xf32>
    %179 = vector.shape_cast %178 : vector<1x1x256xf32> to vector<1x256xf32>
    %180 = vector.shape_cast %168 : vector<1x256xf32> to vector<1x1x256xf32>
    tpu.vector_store %arg8[%c0_100, %c0_101, %c0_102], %180 {strides = array<i32>} : memref<1x3x256xf32, #tpu.memory_space<vmem>>, vector<1x1x256xf32>,
    %c0_103 = arith.constant 0 : index
    %c1_104 = arith.constant 1 : index
    %c0_105 = arith.constant 0 : index
    %181 = vector.load %arg8[%c0_103, %c1_104, %c0_105] : memref<1x3x256xf32, #tpu.memory_space<vmem>>, vector<1x1x256xf32>
    %182 = vector.shape_cast %181 : vector<1x1x256xf32> to vector<1x256xf32>
    %183 = vector.shape_cast %174 : vector<1x256xf32> to vector<1x1x256xf32>
    tpu.vector_store %arg8[%c0_103, %c1_104, %c0_105], %183 {strides = array<i32>} : memref<1x3x256xf32, #tpu.memory_space<vmem>>, vector<1x1x256xf32>,
    %c0_106 = arith.constant 0 : index
    %c2_107 = arith.constant 2 : index
    %c0_108 = arith.constant 0 : index
    %184 = vector.load %arg8[%c0_106, %c2_107, %c0_108] : memref<1x3x256xf32, #tpu.memory_space<vmem>>, vector<1x1x256xf32>
    %185 = vector.shape_cast %184 : vector<1x1x256xf32> to vector<1x256xf32>
    %186 = vector.shape_cast %177 : vector<1x256xf32> to vector<1x1x256xf32>
    tpu.vector_store %arg8[%c0_106, %c2_107, %c0_108], %186 {strides = array<i32>} : memref<1x3x256xf32, #tpu.memory_space<vmem>>, vector<1x1x256xf32>,
    %cst_109 = arith.constant 0.000000e+00 : f32
    %187 = vector.broadcast %cst_109 : f32 to vector<1x24x128xf32>
    %c0_110 = arith.constant 0 : index
    %c0_111 = arith.constant 0 : index
    %c0_112 = arith.constant 0 : index
    %188 = vector.load %arg9[%c0_110, %c0_111, %c0_112] : memref<1x24x128xf32, #tpu.memory_space<vmem>>, vector<1x24x128xf32>
    tpu.vector_store %arg9[%c0_110, %c0_111, %c0_112], %187 {strides = array<i32>} : memref<1x24x128xf32, #tpu.memory_space<vmem>>, vector<1x24x128xf32>,
    %189 = vector.shape_cast %160 : vector<1x256xf32> to vector<1x1x256xf32>
    %cst_113 = arith.constant dense<0.000000e+00> : vector<1xf32>
    %190 = vector.multi_reduction <add>, %189, %cst_113 [1, 2] : vector<1x1x256xf32> to vector<1xf32>
    %191 = vector.shape_cast %190 : vector<1xf32> to vector<1x1x1xf32>
    %192 = vector.extract %191[0, 0, 0] : f32 from vector<1x1x1xf32>
    %cst_114 = arith.constant 0.000000e+00 : f32
    %193 = arith.addf %cst_114, %192 : f32
    %194 = vector.shape_cast %42 : vector<1x256xf32> to vector<1x1x256xf32>
    %cst_115 = arith.constant dense<0.000000e+00> : vector<1xf32>
    %195 = vector.multi_reduction <add>, %194, %cst_115 [1, 2] : vector<1x1x256xf32> to vector<1xf32>
    %196 = vector.shape_cast %195 : vector<1xf32> to vector<1x1x1xf32>
    %197 = vector.extract %196[0, 0, 0] : f32 from vector<1x1x1xf32>
    %cst_116 = arith.constant 0.000000e+00 : f32
    %198 = arith.addf %cst_116, %197 : f32
    %199 = arith.mulf %160, %160 : vector<1x256xf32>
    %200 = vector.shape_cast %199 : vector<1x256xf32> to vector<1x1x256xf32>
    %cst_117 = arith.constant dense<0.000000e+00> : vector<1xf32>
    %201 = vector.multi_reduction <add>, %200, %cst_117 [1, 2] : vector<1x1x256xf32> to vector<1xf32>
    %202 = vector.shape_cast %201 : vector<1xf32> to vector<1x1x1xf32>
    %203 = vector.extract %202[0, 0, 0] : f32 from vector<1x1x1xf32>
    %cst_118 = arith.constant 0.000000e+00 : f32
    %204 = arith.addf %cst_118, %203 : f32
    %205 = arith.mulf %42, %42 : vector<1x256xf32>
    %206 = vector.shape_cast %205 : vector<1x256xf32> to vector<1x1x256xf32>
    %cst_119 = arith.constant dense<0.000000e+00> : vector<1xf32>
    %207 = vector.multi_reduction <add>, %206, %cst_119 [1, 2] : vector<1x1x256xf32> to vector<1xf32>
    %208 = vector.shape_cast %207 : vector<1xf32> to vector<1x1x1xf32>
    %209 = vector.extract %208[0, 0, 0] : f32 from vector<1x1x1xf32>
    %cst_120 = arith.constant 0.000000e+00 : f32
    %210 = arith.addf %cst_120, %209 : f32
    %211 = arith.mulf %160, %42 : vector<1x256xf32>
    %212 = vector.shape_cast %211 : vector<1x256xf32> to vector<1x1x256xf32>
    %cst_121 = arith.constant dense<0.000000e+00> : vector<1xf32>
    %213 = vector.multi_reduction <add>, %212, %cst_121 [1, 2] : vector<1x1x256xf32> to vector<1xf32>
    %214 = vector.shape_cast %213 : vector<1xf32> to vector<1x1x1xf32>
    %215 = vector.extract %214[0, 0, 0] : f32 from vector<1x1x1xf32>
    %cst_122 = arith.constant 0.000000e+00 : f32
    %216 = arith.addf %cst_122, %215 : f32
    %217 = arith.subf %160, %42 : vector<1x256xf32>
    %218 = math.absf %217 : vector<1x256xf32>
    %219 = vector.shape_cast %218 : vector<1x256xf32> to vector<1x1x256xf32>
    %cst_123 = arith.constant dense<0.000000e+00> : vector<1xf32>
    %220 = vector.multi_reduction <add>, %219, %cst_123 [1, 2] : vector<1x1x256xf32> to vector<1xf32>
    %221 = vector.shape_cast %220 : vector<1xf32> to vector<1x1x1xf32>
    %222 = vector.extract %221[0, 0, 0] : f32 from vector<1x1x1xf32>
    %cst_124 = arith.constant 0.000000e+00 : f32
    %223 = arith.addf %cst_124, %222 : f32
    %224 = vector.broadcast %193 : f32 to vector<1x128xf32>
    %c0_125 = arith.constant 0 : index
    %c0_126 = arith.constant 0 : index
    %c0_127 = arith.constant 0 : index
    %225 = vector.load %arg9[%c0_125, %c0_126, %c0_127] : memref<1x24x128xf32, #tpu.memory_space<vmem>>, vector<1x1x128xf32>
    %226 = vector.shape_cast %225 : vector<1x1x128xf32> to vector<1x128xf32>
    %227 = vector.shape_cast %224 : vector<1x128xf32> to vector<1x1x128xf32>
    tpu.vector_store %arg9[%c0_125, %c0_126, %c0_127], %227 {strides = array<i32>} : memref<1x24x128xf32, #tpu.memory_space<vmem>>, vector<1x1x128xf32>,
    %228 = vector.broadcast %198 : f32 to vector<1x128xf32>
    %c0_128 = arith.constant 0 : index
    %c1_129 = arith.constant 1 : index
    %c0_130 = arith.constant 0 : index
    %229 = vector.load %arg9[%c0_128, %c1_129, %c0_130] : memref<1x24x128xf32, #tpu.memory_space<vmem>>, vector<1x1x128xf32>
    %230 = vector.shape_cast %229 : vector<1x1x128xf32> to vector<1x128xf32>
    %231 = vector.shape_cast %228 : vector<1x128xf32> to vector<1x1x128xf32>
    tpu.vector_store %arg9[%c0_128, %c1_129, %c0_130], %231 {strides = array<i32>} : memref<1x24x128xf32, #tpu.memory_space<vmem>>, vector<1x1x128xf32>,
    %232 = vector.broadcast %204 : f32 to vector<1x128xf32>
    %c0_131 = arith.constant 0 : index
    %c2_132 = arith.constant 2 : index
    %c0_133 = arith.constant 0 : index
    %233 = vector.load %arg9[%c0_131, %c2_132, %c0_133] : memref<1x24x128xf32, #tpu.memory_space<vmem>>, vector<1x1x128xf32>
    %234 = vector.shape_cast %233 : vector<1x1x128xf32> to vector<1x128xf32>
    %235 = vector.shape_cast %232 : vector<1x128xf32> to vector<1x1x128xf32>
    tpu.vector_store %arg9[%c0_131, %c2_132, %c0_133], %235 {strides = array<i32>} : memref<1x24x128xf32, #tpu.memory_space<vmem>>, vector<1x1x128xf32>,
    %236 = vector.broadcast %210 : f32 to vector<1x128xf32>
    %c0_134 = arith.constant 0 : index
    %c3_135 = arith.constant 3 : index
    %c0_136 = arith.constant 0 : index
    %237 = vector.load %arg9[%c0_134, %c3_135, %c0_136] : memref<1x24x128xf32, #tpu.memory_space<vmem>>, vector<1x1x128xf32>
    %238 = vector.shape_cast %237 : vector<1x1x128xf32> to vector<1x128xf32>
    %239 = vector.shape_cast %236 : vector<1x128xf32> to vector<1x1x128xf32>
    tpu.vector_store %arg9[%c0_134, %c3_135, %c0_136], %239 {strides = array<i32>} : memref<1x24x128xf32, #tpu.memory_space<vmem>>, vector<1x1x128xf32>,
    %240 = vector.broadcast %216 : f32 to vector<1x128xf32>
    %c0_137 = arith.constant 0 : index
    %c4_138 = arith.constant 4 : index
    %c0_139 = arith.constant 0 : index
    %241 = vector.load %arg9[%c0_137, %c4_138, %c0_139] : memref<1x24x128xf32, #tpu.memory_space<vmem>>, vector<1x1x128xf32>
    %242 = vector.shape_cast %241 : vector<1x1x128xf32> to vector<1x128xf32>
    %243 = vector.shape_cast %240 : vector<1x128xf32> to vector<1x1x128xf32>
    tpu.vector_store %arg9[%c0_137, %c4_138, %c0_139], %243 {strides = array<i32>} : memref<1x24x128xf32, #tpu.memory_space<vmem>>, vector<1x1x128xf32>,
    %244 = vector.broadcast %223 : f32 to vector<1x128xf32>
    %c0_140 = arith.constant 0 : index
    %c5_141 = arith.constant 5 : index
    %c0_142 = arith.constant 0 : index
    %245 = vector.load %arg9[%c0_140, %c5_141, %c0_142] : memref<1x24x128xf32, #tpu.memory_space<vmem>>, vector<1x1x128xf32>
    %246 = vector.shape_cast %245 : vector<1x1x128xf32> to vector<1x128xf32>
    %247 = vector.shape_cast %244 : vector<1x128xf32> to vector<1x1x128xf32>
    tpu.vector_store %arg9[%c0_140, %c5_141, %c0_142], %247 {strides = array<i32>} : memref<1x24x128xf32, #tpu.memory_space<vmem>>, vector<1x1x128xf32>,
    %248 = vector.shape_cast %161 : vector<1x256xf32> to vector<1x1x256xf32>
    %cst_143 = arith.constant dense<0.000000e+00> : vector<1xf32>
    %249 = vector.multi_reduction <add>, %248, %cst_143 [1, 2] : vector<1x1x256xf32> to vector<1xf32>
    %250 = vector.shape_cast %249 : vector<1xf32> to vector<1x1x1xf32>
    %251 = vector.extract %250[0, 0, 0] : f32 from vector<1x1x1xf32>
    %cst_144 = arith.constant 0.000000e+00 : f32
    %252 = arith.addf %cst_144, %251 : f32
    %253 = vector.shape_cast %47 : vector<1x256xf32> to vector<1x1x256xf32>
    %cst_145 = arith.constant dense<0.000000e+00> : vector<1xf32>
    %254 = vector.multi_reduction <add>, %253, %cst_145 [1, 2] : vector<1x1x256xf32> to vector<1xf32>
    %255 = vector.shape_cast %254 : vector<1xf32> to vector<1x1x1xf32>
    %256 = vector.extract %255[0, 0, 0] : f32 from vector<1x1x1xf32>
    %cst_146 = arith.constant 0.000000e+00 : f32
    %257 = arith.addf %cst_146, %256 : f32
    %258 = arith.mulf %161, %161 : vector<1x256xf32>
    %259 = vector.shape_cast %258 : vector<1x256xf32> to vector<1x1x256xf32>
    %cst_147 = arith.constant dense<0.000000e+00> : vector<1xf32>
    %260 = vector.multi_reduction <add>, %259, %cst_147 [1, 2] : vector<1x1x256xf32> to vector<1xf32>
    %261 = vector.shape_cast %260 : vector<1xf32> to vector<1x1x1xf32>
    %262 = vector.extract %261[0, 0, 0] : f32 from vector<1x1x1xf32>
    %cst_148 = arith.constant 0.000000e+00 : f32
    %263 = arith.addf %cst_148, %262 : f32
    %264 = arith.mulf %47, %47 : vector<1x256xf32>
    %265 = vector.shape_cast %264 : vector<1x256xf32> to vector<1x1x256xf32>
    %cst_149 = arith.constant dense<0.000000e+00> : vector<1xf32>
    %266 = vector.multi_reduction <add>, %265, %cst_149 [1, 2] : vector<1x1x256xf32> to vector<1xf32>
    %267 = vector.shape_cast %266 : vector<1xf32> to vector<1x1x1xf32>
    %268 = vector.extract %267[0, 0, 0] : f32 from vector<1x1x1xf32>
    %cst_150 = arith.constant 0.000000e+00 : f32
    %269 = arith.addf %cst_150, %268 : f32
    %270 = arith.mulf %161, %47 : vector<1x256xf32>
    %271 = vector.shape_cast %270 : vector<1x256xf32> to vector<1x1x256xf32>
    %cst_151 = arith.constant dense<0.000000e+00> : vector<1xf32>
    %272 = vector.multi_reduction <add>, %271, %cst_151 [1, 2] : vector<1x1x256xf32> to vector<1xf32>
    %273 = vector.shape_cast %272 : vector<1xf32> to vector<1x1x1xf32>
    %274 = vector.extract %273[0, 0, 0] : f32 from vector<1x1x1xf32>
    %cst_152 = arith.constant 0.000000e+00 : f32
    %275 = arith.addf %cst_152, %274 : f32
    %276 = arith.subf %161, %47 : vector<1x256xf32>
    %277 = math.absf %276 : vector<1x256xf32>
    %278 = vector.shape_cast %277 : vector<1x256xf32> to vector<1x1x256xf32>
    %cst_153 = arith.constant dense<0.000000e+00> : vector<1xf32>
    %279 = vector.multi_reduction <add>, %278, %cst_153 [1, 2] : vector<1x1x256xf32> to vector<1xf32>
    %280 = vector.shape_cast %279 : vector<1xf32> to vector<1x1x1xf32>
    %281 = vector.extract %280[0, 0, 0] : f32 from vector<1x1x1xf32>
    %cst_154 = arith.constant 0.000000e+00 : f32
    %282 = arith.addf %cst_154, %281 : f32
    %283 = vector.broadcast %252 : f32 to vector<1x128xf32>
    %c0_155 = arith.constant 0 : index
    %c8 = arith.constant 8 : index
    %c0_156 = arith.constant 0 : index
    %284 = vector.load %arg9[%c0_155, %c8, %c0_156] : memref<1x24x128xf32, #tpu.memory_space<vmem>>, vector<1x1x128xf32>
    %285 = vector.shape_cast %284 : vector<1x1x128xf32> to vector<1x128xf32>
    %286 = vector.shape_cast %283 : vector<1x128xf32> to vector<1x1x128xf32>
    tpu.vector_store %arg9[%c0_155, %c8, %c0_156], %286 {strides = array<i32>} : memref<1x24x128xf32, #tpu.memory_space<vmem>>, vector<1x1x128xf32>,
    %287 = vector.broadcast %257 : f32 to vector<1x128xf32>
    %c0_157 = arith.constant 0 : index
    %c9 = arith.constant 9 : index
    %c0_158 = arith.constant 0 : index
    %288 = vector.load %arg9[%c0_157, %c9, %c0_158] : memref<1x24x128xf32, #tpu.memory_space<vmem>>, vector<1x1x128xf32>
    %289 = vector.shape_cast %288 : vector<1x1x128xf32> to vector<1x128xf32>
    %290 = vector.shape_cast %287 : vector<1x128xf32> to vector<1x1x128xf32>
    tpu.vector_store %arg9[%c0_157, %c9, %c0_158], %290 {strides = array<i32>} : memref<1x24x128xf32, #tpu.memory_space<vmem>>, vector<1x1x128xf32>,
    %291 = vector.broadcast %263 : f32 to vector<1x128xf32>
    %c0_159 = arith.constant 0 : index
    %c10 = arith.constant 10 : index
    %c0_160 = arith.constant 0 : index
    %292 = vector.load %arg9[%c0_159, %c10, %c0_160] : memref<1x24x128xf32, #tpu.memory_space<vmem>>, vector<1x1x128xf32>
    %293 = vector.shape_cast %292 : vector<1x1x128xf32> to vector<1x128xf32>
    %294 = vector.shape_cast %291 : vector<1x128xf32> to vector<1x1x128xf32>
    tpu.vector_store %arg9[%c0_159, %c10, %c0_160], %294 {strides = array<i32>} : memref<1x24x128xf32, #tpu.memory_space<vmem>>, vector<1x1x128xf32>,
    %295 = vector.broadcast %269 : f32 to vector<1x128xf32>
    %c0_161 = arith.constant 0 : index
    %c11 = arith.constant 11 : index
    %c0_162 = arith.constant 0 : index
    %296 = vector.load %arg9[%c0_161, %c11, %c0_162] : memref<1x24x128xf32, #tpu.memory_space<vmem>>, vector<1x1x128xf32>
    %297 = vector.shape_cast %296 : vector<1x1x128xf32> to vector<1x128xf32>
    %298 = vector.shape_cast %295 : vector<1x128xf32> to vector<1x1x128xf32>
    tpu.vector_store %arg9[%c0_161, %c11, %c0_162], %298 {strides = array<i32>} : memref<1x24x128xf32, #tpu.memory_space<vmem>>, vector<1x1x128xf32>,
    %299 = vector.broadcast %275 : f32 to vector<1x128xf32>
    %c0_163 = arith.constant 0 : index
    %c12 = arith.constant 12 : index
    %c0_164 = arith.constant 0 : index
    %300 = vector.load %arg9[%c0_163, %c12, %c0_164] : memref<1x24x128xf32, #tpu.memory_space<vmem>>, vector<1x1x128xf32>
    %301 = vector.shape_cast %300 : vector<1x1x128xf32> to vector<1x128xf32>
    %302 = vector.shape_cast %299 : vector<1x128xf32> to vector<1x1x128xf32>
    tpu.vector_store %arg9[%c0_163, %c12, %c0_164], %302 {strides = array<i32>} : memref<1x24x128xf32, #tpu.memory_space<vmem>>, vector<1x1x128xf32>,
    %303 = vector.broadcast %282 : f32 to vector<1x128xf32>
    %c0_165 = arith.constant 0 : index
    %c13 = arith.constant 13 : index
    %c0_166 = arith.constant 0 : index
    %304 = vector.load %arg9[%c0_165, %c13, %c0_166] : memref<1x24x128xf32, #tpu.memory_space<vmem>>, vector<1x1x128xf32>
    %305 = vector.shape_cast %304 : vector<1x1x128xf32> to vector<1x128xf32>
    %306 = vector.shape_cast %303 : vector<1x128xf32> to vector<1x1x128xf32>
    tpu.vector_store %arg9[%c0_165, %c13, %c0_166], %306 {strides = array<i32>} : memref<1x24x128xf32, #tpu.memory_space<vmem>>, vector<1x1x128xf32>,
    %307 = vector.shape_cast %168 : vector<1x256xf32> to vector<1x1x256xf32>
    %cst_167 = arith.constant dense<0.000000e+00> : vector<1xf32>
    %308 = vector.multi_reduction <add>, %307, %cst_167 [1, 2] : vector<1x1x256xf32> to vector<1xf32>
    %309 = vector.shape_cast %308 : vector<1xf32> to vector<1x1x1xf32>
    %310 = vector.extract %309[0, 0, 0] : f32 from vector<1x1x1xf32>
    %cst_168 = arith.constant 0.000000e+00 : f32
    %311 = arith.addf %cst_168, %310 : f32
    %312 = vector.shape_cast %174 : vector<1x256xf32> to vector<1x1x256xf32>
    %cst_169 = arith.constant dense<0.000000e+00> : vector<1xf32>
    %313 = vector.multi_reduction <add>, %312, %cst_169 [1, 2] : vector<1x1x256xf32> to vector<1xf32>
    %314 = vector.shape_cast %313 : vector<1xf32> to vector<1x1x1xf32>
    %315 = vector.extract %314[0, 0, 0] : f32 from vector<1x1x1xf32>
    %316 = arith.addf %311, %315 : f32
    %317 = vector.shape_cast %177 : vector<1x256xf32> to vector<1x1x256xf32>
    %cst_170 = arith.constant dense<0.000000e+00> : vector<1xf32>
    %318 = vector.multi_reduction <add>, %317, %cst_170 [1, 2] : vector<1x1x256xf32> to vector<1xf32>
    %319 = vector.shape_cast %318 : vector<1xf32> to vector<1x1x1xf32>
    %320 = vector.extract %319[0, 0, 0] : f32 from vector<1x1x1xf32>
    %321 = arith.addf %316, %320 : f32
    %322 = vector.shape_cast %25 : vector<1x256xf32> to vector<1x1x256xf32>
    %cst_171 = arith.constant dense<0.000000e+00> : vector<1xf32>
    %323 = vector.multi_reduction <add>, %322, %cst_171 [1, 2] : vector<1x1x256xf32> to vector<1xf32>
    %324 = vector.shape_cast %323 : vector<1xf32> to vector<1x1x1xf32>
    %325 = vector.extract %324[0, 0, 0] : f32 from vector<1x1x1xf32>
    %cst_172 = arith.constant 0.000000e+00 : f32
    %326 = arith.addf %cst_172, %325 : f32
    %327 = vector.shape_cast %27 : vector<1x256xf32> to vector<1x1x256xf32>
    %cst_173 = arith.constant dense<0.000000e+00> : vector<1xf32>
    %328 = vector.multi_reduction <add>, %327, %cst_173 [1, 2] : vector<1x1x256xf32> to vector<1xf32>
    %329 = vector.shape_cast %328 : vector<1xf32> to vector<1x1x1xf32>
    %330 = vector.extract %329[0, 0, 0] : f32 from vector<1x1x1xf32>
    %331 = arith.addf %326, %330 : f32
    %332 = vector.shape_cast %29 : vector<1x256xf32> to vector<1x1x256xf32>
    %cst_174 = arith.constant dense<0.000000e+00> : vector<1xf32>
    %333 = vector.multi_reduction <add>, %332, %cst_174 [1, 2] : vector<1x1x256xf32> to vector<1xf32>
    %334 = vector.shape_cast %333 : vector<1xf32> to vector<1x1x1xf32>
    %335 = vector.extract %334[0, 0, 0] : f32 from vector<1x1x1xf32>
    %336 = arith.addf %331, %335 : f32
    %337 = arith.mulf %168, %168 : vector<1x256xf32>
    %338 = vector.shape_cast %337 : vector<1x256xf32> to vector<1x1x256xf32>
    %cst_175 = arith.constant dense<0.000000e+00> : vector<1xf32>
    %339 = vector.multi_reduction <add>, %338, %cst_175 [1, 2] : vector<1x1x256xf32> to vector<1xf32>
    %340 = vector.shape_cast %339 : vector<1xf32> to vector<1x1x1xf32>
    %341 = vector.extract %340[0, 0, 0] : f32 from vector<1x1x1xf32>
    %cst_176 = arith.constant 0.000000e+00 : f32
    %342 = arith.addf %cst_176, %341 : f32
    %343 = arith.mulf %174, %174 : vector<1x256xf32>
    %344 = vector.shape_cast %343 : vector<1x256xf32> to vector<1x1x256xf32>
    %cst_177 = arith.constant dense<0.000000e+00> : vector<1xf32>
    %345 = vector.multi_reduction <add>, %344, %cst_177 [1, 2] : vector<1x1x256xf32> to vector<1xf32>
    %346 = vector.shape_cast %345 : vector<1xf32> to vector<1x1x1xf32>
    %347 = vector.extract %346[0, 0, 0] : f32 from vector<1x1x1xf32>
    %348 = arith.addf %342, %347 : f32
    %349 = arith.mulf %177, %177 : vector<1x256xf32>
    %350 = vector.shape_cast %349 : vector<1x256xf32> to vector<1x1x256xf32>
    %cst_178 = arith.constant dense<0.000000e+00> : vector<1xf32>
    %351 = vector.multi_reduction <add>, %350, %cst_178 [1, 2] : vector<1x1x256xf32> to vector<1xf32>
    %352 = vector.shape_cast %351 : vector<1xf32> to vector<1x1x1xf32>
    %353 = vector.extract %352[0, 0, 0] : f32 from vector<1x1x1xf32>
    %354 = arith.addf %348, %353 : f32
    %355 = arith.mulf %25, %25 : vector<1x256xf32>
    %356 = vector.shape_cast %355 : vector<1x256xf32> to vector<1x1x256xf32>
    %cst_179 = arith.constant dense<0.000000e+00> : vector<1xf32>
    %357 = vector.multi_reduction <add>, %356, %cst_179 [1, 2] : vector<1x1x256xf32> to vector<1xf32>
    %358 = vector.shape_cast %357 : vector<1xf32> to vector<1x1x1xf32>
    %359 = vector.extract %358[0, 0, 0] : f32 from vector<1x1x1xf32>
    %cst_180 = arith.constant 0.000000e+00 : f32
    %360 = arith.addf %cst_180, %359 : f32
    %361 = arith.mulf %27, %27 : vector<1x256xf32>
    %362 = vector.shape_cast %361 : vector<1x256xf32> to vector<1x1x256xf32>
    %cst_181 = arith.constant dense<0.000000e+00> : vector<1xf32>
    %363 = vector.multi_reduction <add>, %362, %cst_181 [1, 2] : vector<1x1x256xf32> to vector<1xf32>
    %364 = vector.shape_cast %363 : vector<1xf32> to vector<1x1x1xf32>
    %365 = vector.extract %364[0, 0, 0] : f32 from vector<1x1x1xf32>
    %366 = arith.addf %360, %365 : f32
    %367 = arith.mulf %29, %29 : vector<1x256xf32>
    %368 = vector.shape_cast %367 : vector<1x256xf32> to vector<1x1x256xf32>
    %cst_182 = arith.constant dense<0.000000e+00> : vector<1xf32>
    %369 = vector.multi_reduction <add>, %368, %cst_182 [1, 2] : vector<1x1x256xf32> to vector<1xf32>
    %370 = vector.shape_cast %369 : vector<1xf32> to vector<1x1x1xf32>
    %371 = vector.extract %370[0, 0, 0] : f32 from vector<1x1x1xf32>
    %372 = arith.addf %366, %371 : f32
    %373 = arith.mulf %168, %25 : vector<1x256xf32>
    %374 = vector.shape_cast %373 : vector<1x256xf32> to vector<1x1x256xf32>
    %cst_183 = arith.constant dense<0.000000e+00> : vector<1xf32>
    %375 = vector.multi_reduction <add>, %374, %cst_183 [1, 2] : vector<1x1x256xf32> to vector<1xf32>
    %376 = vector.shape_cast %375 : vector<1xf32> to vector<1x1x1xf32>
    %377 = vector.extract %376[0, 0, 0] : f32 from vector<1x1x1xf32>
    %cst_184 = arith.constant 0.000000e+00 : f32
    %378 = arith.addf %cst_184, %377 : f32
    %379 = arith.mulf %174, %27 : vector<1x256xf32>
    %380 = vector.shape_cast %379 : vector<1x256xf32> to vector<1x1x256xf32>
    %cst_185 = arith.constant dense<0.000000e+00> : vector<1xf32>
    %381 = vector.multi_reduction <add>, %380, %cst_185 [1, 2] : vector<1x1x256xf32> to vector<1xf32>
    %382 = vector.shape_cast %381 : vector<1xf32> to vector<1x1x1xf32>
    %383 = vector.extract %382[0, 0, 0] : f32 from vector<1x1x1xf32>
    %384 = arith.addf %378, %383 : f32
    %385 = arith.mulf %177, %29 : vector<1x256xf32>
    %386 = vector.shape_cast %385 : vector<1x256xf32> to vector<1x1x256xf32>
    %cst_186 = arith.constant dense<0.000000e+00> : vector<1xf32>
    %387 = vector.multi_reduction <add>, %386, %cst_186 [1, 2] : vector<1x1x256xf32> to vector<1xf32>
    %388 = vector.shape_cast %387 : vector<1xf32> to vector<1x1x1xf32>
    %389 = vector.extract %388[0, 0, 0] : f32 from vector<1x1x1xf32>
    %390 = arith.addf %384, %389 : f32
    %391 = arith.subf %168, %25 : vector<1x256xf32>
    %392 = math.absf %391 : vector<1x256xf32>
    %393 = vector.shape_cast %392 : vector<1x256xf32> to vector<1x1x256xf32>
    %cst_187 = arith.constant dense<0.000000e+00> : vector<1xf32>
    %394 = vector.multi_reduction <add>, %393, %cst_187 [1, 2] : vector<1x1x256xf32> to vector<1xf32>
    %395 = vector.shape_cast %394 : vector<1xf32> to vector<1x1x1xf32>
    %396 = vector.extract %395[0, 0, 0] : f32 from vector<1x1x1xf32>
    %cst_188 = arith.constant 0.000000e+00 : f32
    %397 = arith.addf %cst_188, %396 : f32
    %398 = arith.subf %174, %27 : vector<1x256xf32>
    %399 = math.absf %398 : vector<1x256xf32>
    %400 = vector.shape_cast %399 : vector<1x256xf32> to vector<1x1x256xf32>
    %cst_189 = arith.constant dense<0.000000e+00> : vector<1xf32>
    %401 = vector.multi_reduction <add>, %400, %cst_189 [1, 2] : vector<1x1x256xf32> to vector<1xf32>
    %402 = vector.shape_cast %401 : vector<1xf32> to vector<1x1x1xf32>
    %403 = vector.extract %402[0, 0, 0] : f32 from vector<1x1x1xf32>
    %404 = arith.addf %397, %403 : f32
    %405 = arith.subf %177, %29 : vector<1x256xf32>
    %406 = math.absf %405 : vector<1x256xf32>
    %407 = vector.shape_cast %406 : vector<1x256xf32> to vector<1x1x256xf32>
    %cst_190 = arith.constant dense<0.000000e+00> : vector<1xf32>
    %408 = vector.multi_reduction <add>, %407, %cst_190 [1, 2] : vector<1x1x256xf32> to vector<1xf32>
    %409 = vector.shape_cast %408 : vector<1xf32> to vector<1x1x1xf32>
    %410 = vector.extract %409[0, 0, 0] : f32 from vector<1x1x1xf32>
    %411 = arith.addf %404, %410 : f32
    %412 = vector.broadcast %321 : f32 to vector<1x128xf32>
    %c0_191 = arith.constant 0 : index
    %c16 = arith.constant 16 : index
    %c0_192 = arith.constant 0 : index
    %413 = vector.load %arg9[%c0_191, %c16, %c0_192] : memref<1x24x128xf32, #tpu.memory_space<vmem>>, vector<1x1x128xf32>
    %414 = vector.shape_cast %413 : vector<1x1x128xf32> to vector<1x128xf32>
    %415 = vector.shape_cast %412 : vector<1x128xf32> to vector<1x1x128xf32>
    tpu.vector_store %arg9[%c0_191, %c16, %c0_192], %415 {strides = array<i32>} : memref<1x24x128xf32, #tpu.memory_space<vmem>>, vector<1x1x128xf32>,
    %416 = vector.broadcast %336 : f32 to vector<1x128xf32>
    %c0_193 = arith.constant 0 : index
    %c17 = arith.constant 17 : index
    %c0_194 = arith.constant 0 : index
    %417 = vector.load %arg9[%c0_193, %c17, %c0_194] : memref<1x24x128xf32, #tpu.memory_space<vmem>>, vector<1x1x128xf32>
    %418 = vector.shape_cast %417 : vector<1x1x128xf32> to vector<1x128xf32>
    %419 = vector.shape_cast %416 : vector<1x128xf32> to vector<1x1x128xf32>
    tpu.vector_store %arg9[%c0_193, %c17, %c0_194], %419 {strides = array<i32>} : memref<1x24x128xf32, #tpu.memory_space<vmem>>, vector<1x1x128xf32>,
    %420 = vector.broadcast %354 : f32 to vector<1x128xf32>
    %c0_195 = arith.constant 0 : index
    %c18 = arith.constant 18 : index
    %c0_196 = arith.constant 0 : index
    %421 = vector.load %arg9[%c0_195, %c18, %c0_196] : memref<1x24x128xf32, #tpu.memory_space<vmem>>, vector<1x1x128xf32>
    %422 = vector.shape_cast %421 : vector<1x1x128xf32> to vector<1x128xf32>
    %423 = vector.shape_cast %420 : vector<1x128xf32> to vector<1x1x128xf32>
    tpu.vector_store %arg9[%c0_195, %c18, %c0_196], %423 {strides = array<i32>} : memref<1x24x128xf32, #tpu.memory_space<vmem>>, vector<1x1x128xf32>,
    %424 = vector.broadcast %372 : f32 to vector<1x128xf32>
    %c0_197 = arith.constant 0 : index
    %c19 = arith.constant 19 : index
    %c0_198 = arith.constant 0 : index
    %425 = vector.load %arg9[%c0_197, %c19, %c0_198] : memref<1x24x128xf32, #tpu.memory_space<vmem>>, vector<1x1x128xf32>
    %426 = vector.shape_cast %425 : vector<1x1x128xf32> to vector<1x128xf32>
    %427 = vector.shape_cast %424 : vector<1x128xf32> to vector<1x1x128xf32>
    tpu.vector_store %arg9[%c0_197, %c19, %c0_198], %427 {strides = array<i32>} : memref<1x24x128xf32, #tpu.memory_space<vmem>>, vector<1x1x128xf32>,
    %428 = vector.broadcast %390 : f32 to vector<1x128xf32>
    %c0_199 = arith.constant 0 : index
    %c20 = arith.constant 20 : index
    %c0_200 = arith.constant 0 : index
    %429 = vector.load %arg9[%c0_199, %c20, %c0_200] : memref<1x24x128xf32, #tpu.memory_space<vmem>>, vector<1x1x128xf32>
    %430 = vector.shape_cast %429 : vector<1x1x128xf32> to vector<1x128xf32>
    %431 = vector.shape_cast %428 : vector<1x128xf32> to vector<1x1x128xf32>
    tpu.vector_store %arg9[%c0_199, %c20, %c0_200], %431 {strides = array<i32>} : memref<1x24x128xf32, #tpu.memory_space<vmem>>, vector<1x1x128xf32>,
    %432 = vector.broadcast %411 : f32 to vector<1x128xf32>
    %c0_201 = arith.constant 0 : index
    %c21 = arith.constant 21 : index
    %c0_202 = arith.constant 0 : index
    %433 = vector.load %arg9[%c0_201, %c21, %c0_202] : memref<1x24x128xf32, #tpu.memory_space<vmem>>, vector<1x1x128xf32>
    %434 = vector.shape_cast %433 : vector<1x1x128xf32> to vector<1x128xf32>
    %435 = vector.shape_cast %432 : vector<1x128xf32> to vector<1x1x128xf32>
    tpu.vector_store %arg9[%c0_201, %c21, %c0_202], %435 {strides = array<i32>} : memref<1x24x128xf32, #tpu.memory_space<vmem>>, vector<1x1x128xf32>,
    return
  }
  func.func @transform_0(%arg0: i32) -> (i32, i32, i32) {
    %c0_i32 = arith.constant 0 : i32
    %c0_i32_0 = arith.constant 0 : i32
    %c0_i32_1 = arith.constant 0 : i32
    return %arg0, %c0_i32, %c0_i32_0 : i32, i32, i32
  }
  func.func @transform_1(%arg0: i32) -> (i32, i32, i32) {
    %c0_i32 = arith.constant 0 : i32
    %c0_i32_0 = arith.constant 0 : i32
    %c0_i32_1 = arith.constant 0 : i32
    return %arg0, %c0_i32, %c0_i32_0 : i32, i32, i32
  }
  func.func @transform_2(%arg0: i32) -> (i32, i32, i32) {
    %c0_i32 = arith.constant 0 : i32
    %c0_i32_0 = arith.constant 0 : i32
    %c0_i32_1 = arith.constant 0 : i32
    %c0_i32_2 = arith.constant 0 : i32
    return %c0_i32, %c0_i32_0, %c0_i32_1 : i32, i32, i32
  }
  func.func @transform_3(%arg0: i32) -> (i32, i32) {
    %c0_i32 = arith.constant 0 : i32
    %c0_i32_0 = arith.constant 0 : i32
    %c0_i32_1 = arith.constant 0 : i32
    return %c0_i32, %c0_i32_0 : i32, i32
  }
  func.func @transform_4(%arg0: i32) -> (i32, i32) {
    %c0_i32 = arith.constant 0 : i32
    %c0_i32_0 = arith.constant 0 : i32
    %c0_i32_1 = arith.constant 0 : i32
    return %c0_i32, %c0_i32_0 : i32, i32
  }
  func.func @transform_5(%arg0: i32) -> (i32, i32) {
    %c0_i32 = arith.constant 0 : i32
    %c0_i32_0 = arith.constant 0 : i32
    %c0_i32_1 = arith.constant 0 : i32
    return %c0_i32, %c0_i32_0 : i32, i32
  }
  func.func @transform_6(%arg0: i32) -> (i32, i32) {
    %c0_i32 = arith.constant 0 : i32
    %c0_i32_0 = arith.constant 0 : i32
    %c0_i32_1 = arith.constant 0 : i32
    return %c0_i32, %c0_i32_0 : i32, i32
  }
  func.func @transform_7(%arg0: i32) -> (i32, i32, i32) {
    %c0_i32 = arith.constant 0 : i32
    %c0_i32_0 = arith.constant 0 : i32
    %c0_i32_1 = arith.constant 0 : i32
    return %arg0, %c0_i32, %c0_i32_0 : i32, i32, i32
  }
  func.func @transform_8(%arg0: i32) -> (i32, i32, i32) {
    %c0_i32 = arith.constant 0 : i32
    %c0_i32_0 = arith.constant 0 : i32
    %c0_i32_1 = arith.constant 0 : i32
    return %arg0, %c0_i32, %c0_i32_0 : i32, i32, i32
  }
}

</mosaic_0001>

<llo_original>
// kernel: model_canet_forward.2
$region0: #{model_canet_forward.2}
  #allocation0 [shape = 'u32[]', space=smem, size = 0x4, offset = 0x4, fixed_abs, tag = 'smem constant byte address 0x4 - core index']
  #allocation1 [shape = 'u32[144,128]{1,0:T(1,128)}', space=vmem, size = 0x12000, scoped, tag = 'internal scratch']
  #allocation2 [shape = 'f32[8,256]{1,0:T(8,128)}', space=vmem, size = 0x2000, scoped, tag = 'scratch operand']
  #allocation3 [shape = 'f32[72,256]{1,0:T(8,128)}', space=vmem, size = 0x12000, scoped, tag = 'scratch operand']
  #allocation4 [shape = 'f32[1,1]{1,0:T(1,128)S(1)}', space=vmem, size = 0x200, scoped, tag = 'scoped memory for model_canet_forward.2']
  %s0 = inlined_call_operand.vmem [shape: f32[8,3,256], index: 0, kind: input, shape index: {}]
  %s1 = inlined_call_operand.vmem [shape: bf16[8,72], index: 1, kind: input, shape index: {}]
  %s2 = inlined_call_operand.vmem [shape: f32[8,1], index: 2, kind: input, shape index: {}]
  %s3 = inlined_call_operand.vmem [shape: bf16[1,72], index: 3, kind: input, shape index: {}]
  %s4 = inlined_call_operand.<no memory space> [shape: f32[1,1], index: 4, kind: input, shape index: {}]
  %s5 = inlined_call_operand.vmem [shape: f32[8,1,256], index: 5, kind: output, shape index: {}]
  %s6 = sld [smem:[#allocation0]]
  $region53: #{model_canet_forward.2} parent=0
    _
  %s8 = ssub.s32 1, %s6
  %s9 = scalar_select 0, %s8, %s6
  %v10 = vstv %s4
  %11 = vst [vmem:[#allocation4] sm:$0x1] %v10
  loop: start=0, step=1, limit=10
  $region2: #{model_canet_forward.2} parent=0 // loop_pre_header
    _
  $region3: #{model_canet_forward.2} parent=0 // loop_header
    %s13 = sphi 0, %s17
    %p14 = scmp.ge.s32.totalorder %s13, 10
    %s23 = sphi 0, %s25
    %s26 = sphi 0, %s23
    %s27 = sphi 0, %s26
    %s43 = sphi 0, %s27
    %s47 = sphi 0, %s47
    %s49 = sphi 0, %s47
    %s50 = sphi 0, %s49
    %s64 = sphi 0, %s50
    %s68 = sphi 0, %s68
    %s70 = sphi 0, %s68
    %s71 = sphi 0, %s70
    %s85 = sphi 0, %s71
    %s89 = sphi 0, %s89
    %s91 = sphi 0, %s89
    %s92 = sphi 0, %s91
    %s106 = sphi 0, %s92
    %s110 = sphi 0, %s110
    %s112 = sphi 0, %s110
    %s113 = sphi 0, %s112
    %s127 = sphi 0, %s113
    %s133 = sphi 0, %s135
    %s136 = sphi 0, %s133
    %s137 = sphi 0, %s136
    %s153 = sphi 0, %s137
  $region4: #{model_canet_forward.2} parent=0 // loop_header_branch
    %16 = sbr.rel (%p14) target = $region8
  $region5: #{model_canet_forward.2} parent=0 // loop_body
    %s18 = ssub.s32 %s13, 1
    %s19 = ssub.s32 %s13, 2
    %s20 = sadd.s32 %s13, 1
    %s21 = ssub.s32 %s13, %s20
    %p22 = scmp.eq.s32.totalorder %s21, 0
    %s24 = sadd.s32 %s23, 1
    %s25 = scalar_select %p22, %s23, %s24
    %p28 = pneg %p22
    %p29 = scmp.eq.s32.totalorder %s13, 7
    %p30 = por %p28, %p29
    %p31 = scmp.ne.s32.totalorder %s23, %s26
    %p32 = scmp.eq.s32.totalorder %s13, 0
    %p33 = por %p31, %p32
    %p34 = scmp.ne.s32.totalorder %s23, %s26
    %p35 = scmp.eq.s32.totalorder %s18, 7
    %p36 = por %p34, %p35
    %p37 = scmp.ne.s32.totalorder %s26, %s27
    %p38 = scmp.eq.s32.totalorder %s18, 0
    %p39 = por %p37, %p38
    %p40 = scmp.ne.s32.totalorder %s26, %s27
    %p41 = scmp.eq.s32.totalorder %s19, 7
    %p42 = por %p40, %p41
    %p44 = scmp.ne.s32.totalorder %s27, %s43
    %p45 = scmp.eq.s32.totalorder %s19, 0
    %p46 = por %p44, %p45
    %s48 = sadd.s32 %s47, 1
    %p51 = scmp.eq.s32.totalorder %s13, 7
    %p52 = scmp.ne.s32.totalorder %s47, %s49
    %p53 = scmp.eq.s32.totalorder %s13, 0
    %p54 = por %p52, %p53
    %p55 = scmp.ne.s32.totalorder %s47, %s49
    %p56 = scmp.eq.s32.totalorder %s18, 7
    %p57 = por %p55, %p56
    %p58 = scmp.ne.s32.totalorder %s49, %s50
    %p59 = scmp.eq.s32.totalorder %s18, 0
    %p60 = por %p58, %p59
    %p61 = scmp.ne.s32.totalorder %s49, %s50
    %p62 = scmp.eq.s32.totalorder %s19, 7
    %p63 = por %p61, %p62
    %p65 = scmp.ne.s32.totalorder %s50, %s64
    %p66 = scmp.eq.s32.totalorder %s19, 0
    %p67 = por %p65, %p66
    %s69 = sadd.s32 %s68, 1
    %p72 = scmp.eq.s32.totalorder %s13, 7
    %p73 = scmp.ne.s32.totalorder %s68, %s70
    %p74 = scmp.eq.s32.totalorder %s13, 0
    %p75 = por %p73, %p74
    %p76 = scmp.ne.s32.totalorder %s68, %s70
    %p77 = scmp.eq.s32.totalorder %s18, 7
    %p78 = por %p76, %p77
    %p79 = scmp.ne.s32.totalorder %s70, %s71
    %p80 = scmp.eq.s32.totalorder %s18, 0
    %p81 = por %p79, %p80
    %p82 = scmp.ne.s32.totalorder %s70, %s71
    %p83 = scmp.eq.s32.totalorder %s19, 7
    %p84 = por %p82, %p83
    %p86 = scmp.ne.s32.totalorder %s71, %s85
    %p87 = scmp.eq.s32.totalorder %s19, 0
    %p88 = por %p86, %p87
    %s90 = sadd.s32 %s89, 1
    %p93 = scmp.eq.s32.totalorder %s13, 7
    %p94 = scmp.ne.s32.totalorder %s89, %s91
    %p95 = scmp.eq.s32.totalorder %s13, 0
    %p96 = por %p94, %p95
    %p97 = scmp.ne.s32.totalorder %s89, %s91
    %p98 = scmp.eq.s32.totalorder %s18, 7
    %p99 = por %p97, %p98
    %p100 = scmp.ne.s32.totalorder %s91, %s92
    %p101 = scmp.eq.s32.totalorder %s18, 0
    %p102 = por %p100, %p101
    %p103 = scmp.ne.s32.totalorder %s91, %s92
    %p104 = scmp.eq.s32.totalorder %s19, 7
    %p105 = por %p103, %p104
    %p107 = scmp.ne.s32.totalorder %s92, %s106
    %p108 = scmp.eq.s32.totalorder %s19, 0
    %p109 = por %p107, %p108
    %s111 = sadd.s32 %s110, 1
    %p114 = scmp.eq.s32.totalorder %s13, 7
    %p115 = scmp.ne.s32.totalorder %s110, %s112
    %p116 = scmp.eq.s32.totalorder %s13, 0
    %p117 = por %p115, %p116
    %p118 = scmp.ne.s32.totalorder %s110, %s112
    %p119 = scmp.eq.s32.totalorder %s18, 7
    %p120 = por %p118, %p119
    %p121 = scmp.ne.s32.totalorder %s112, %s113
    %p122 = scmp.eq.s32.totalorder %s18, 0
    %p123 = por %p121, %p122
    %p124 = scmp.ne.s32.totalorder %s112, %s113
    %p125 = scmp.eq.s32.totalorder %s19, 7
    %p126 = por %p124, %p125
    %p128 = scmp.ne.s32.totalorder %s113, %s127
    %p129 = scmp.eq.s32.totalorder %s19, 0
    %p130 = por %p128, %p129
    %s131 = ssub.s32 %s13, %s20
    %p132 = scmp.eq.s32.totalorder %s131, 0
    %s134 = sadd.s32 %s133, 1
    %s135 = scalar_select %p132, %s133, %s134
    %p138 = pneg %p132
    %p139 = scmp.eq.s32.totalorder %s13, 7
    %p140 = por %p138, %p139
    %p141 = scmp.ne.s32.totalorder %s133, %s136
    %p142 = scmp.eq.s32.totalorder %s13, 0
    %p143 = por %p141, %p142
    %p144 = scmp.ne.s32.totalorder %s133, %s136
    %p145 = scmp.eq.s32.totalorder %s18, 7
    %p146 = por %p144, %p145
    %p147 = scmp.ne.s32.totalorder %s136, %s137
    %p148 = scmp.eq.s32.totalorder %s18, 0
    %p149 = por %p147, %p148
    %p150 = scmp.ne.s32.totalorder %s136, %s137
    %p151 = scmp.eq.s32.totalorder %s19, 7
    %p152 = por %p150, %p151
    %p154 = scmp.ne.s32.totalorder %s137, %s153
    %p155 = scmp.eq.s32.totalorder %s19, 0
    %p156 = por %p154, %p155
    %p157 = scmp.le.s32.totalorder 1, %s13
    %p158 = scmp.lt.s32.totalorder %s13, 9
    %p159 = pnand %p157, %p158
    %p160 = pneg %p159
    // Predicated region
    $region9: #{model_canet_forward.2} parent=5 // pred_check
      _
    $region10: #{model_canet_forward.2} parent=5 // pred_check_branch
      %162 = sbr.rel (%p159) target = $region12
    $region11: #{model_canet_forward.2} parent=5 // pred_region
      %s163 = ssub.s32 %s13, 1
      // Predicated region
      $region13: #{model_canet_forward.2} parent=11 // pred_check
        %p164 = pneg %p60
      $region14: #{model_canet_forward.2} parent=11 // pred_check_branch
        %166 = sbr.rel (%p164) target = $region16
      $region15: #{model_canet_forward.2} parent=11 // pred_region
        _
      $region16: #{model_canet_forward.2} parent=11 // pred_fallthru
        _
      // Predicated region
      $region17: #{model_canet_forward.2} parent=11 // pred_check
        %p167 = pneg %p81
      $region18: #{model_canet_forward.2} parent=11 // pred_check_branch
        %169 = sbr.rel (%p167) target = $region20
      $region19: #{model_canet_forward.2} parent=11 // pred_region
        _
      $region20: #{model_canet_forward.2} parent=11 // pred_fallthru
        _
      // Predicated region
      $region21: #{model_canet_forward.2} parent=11 // pred_check
        %p170 = pneg %p102
      $region22: #{model_canet_forward.2} parent=11 // pred_check_branch
        %172 = sbr.rel (%p170) target = $region24
      $region23: #{model_canet_forward.2} parent=11 // pred_region
        _
      $region24: #{model_canet_forward.2} parent=11 // pred_fallthru
        _
      // Predicated region
      $region25: #{model_canet_forward.2} parent=11 // pred_check
        %p173 = pneg %p123
      $region26: #{model_canet_forward.2} parent=11 // pred_check_branch
        %175 = sbr.rel (%p173) target = $region28
      $region27: #{model_canet_forward.2} parent=11 // pred_region
        _
      $region28: #{model_canet_forward.2} parent=11 // pred_fallthru
        _
    $region12: #{model_canet_forward.2} parent=5 // pred_fallthru
      _
    %p176 = scmp.lt.s32.totalorder %s13, 8
    // Predicated region
    $region29: #{model_canet_forward.2} parent=5 // pred_check
      %p177 = pneg %p176
    $region30: #{model_canet_forward.2} parent=5 // pred_check_branch
      %179 = sbr.rel (%p177) target = $region32
    $region31: #{model_canet_forward.2} parent=5 // pred_region
      // Predicated region
      $region33: #{model_canet_forward.2} parent=31 // pred_check
        %p180 = pneg %p33
      $region34: #{model_canet_forward.2} parent=31 // pred_check_branch
        %182 = sbr.rel (%p180) target = $region36
      $region35: #{model_canet_forward.2} parent=31 // pred_region
        %p183 = scmp.lt.s32.totalorder %s13, 7
        %s184 = scalar_select %p183, %s13, 7
        %s185 = smul.addr %s184, 2
        %s186 = smul.addr %s185, 4
        %s187 = scalar_lea.vmem %s0, %s186
      $region36: #{model_canet_forward.2} parent=31 // pred_fallthru
        _
    $region32: #{model_canet_forward.2} parent=5 // pred_fallthru
      _
    %p188 = scmp.le.s32.totalorder 1, %s13
    %p189 = scmp.lt.s32.totalorder %s13, 9
    %p190 = pnand %p188, %p189
    %p191 = pneg %p190
    // Predicated region
    $region37: #{model_canet_forward.2} parent=5 // pred_check
      _
    $region38: #{model_canet_forward.2} parent=5 // pred_check_branch
      %193 = sbr.rel (%p190) target = $region40
    $region39: #{model_canet_forward.2} parent=5 // pred_region
      %s194 = ssub.s32 %s13, 1
      %p195 = scmp.lt.s32.totalorder %s18, 7
      %s196 = scalar_select %p195, %s18, 7
      %s197 = smul.addr %s196, 2
      %s198 = smul.addr %s197, 4
      %s199 = scalar_lea.vmem %s0, %s198
      %p200 = pneg %p39
      %p201 = pneg %p36
      %p202 = pneg %p60
      %p203 = pneg %p57
      %p204 = pneg %p81
      %p205 = pneg %p78
      %p206 = pneg %p102
      %p207 = pneg %p99
      %p208 = pneg %p123
      %p209 = pneg %p120
      %p210 = pneg %p149
      %p211 = pneg %p146
      %p212 = scmp.lt.s32.totalorder %s18, 7
      %s213 = scalar_select %p212, %s18, 7
      %s214 = smul.addr %s213, 2
      %s215 = scalar_lea.vmem %s5, %s214
      %p216 = scmp.lt.s32.totalorder %s18, 7
      %s217 = scalar_select %p216, %s18, 7
      %s218 = smul.addr %s217, 2
      %s219 = smul.addr %s218, 4
      %s220 = scalar_lea.vmem %s0, %s219
      %p221 = scmp.lt.s32.totalorder %s18, 7
      %s222 = scalar_select %p221, %s18, 7
      %s223 = smul.addr %s222, 2
      %s224 = scalar_lea.vmem %s5, %s223
      %v226 = vld [vmem:[%s220] ss:$4 sm:$0x3]
      %s227 = scalar_lea.vmem %s220, 1
      %v228 = vld [vmem:[%s227] ss:$4 sm:$0x3]
      %s229 = scalar_lea.vmem %s220, 2
      %v230 = vld [vmem:[%s229] ss:$4 sm:$0x3]
      %v231 = vmul.f32 %v226, 0.299
      %v232 = vmul.f32 %v228, 0.587
      %v233 = vadd.f32 %v231, %v232
      %v234 = vmul.f32 %v230, 0.114
      %v235 = vadd.f32 %v233, %v234
      %236 = vst [vmem:[#allocation2] sm:$0xff] 0.0
      %237 = vst [vmem:[#allocation2 + $0x8] sm:$0xff] 0.0
      %v238 = vlaneseq
      %vm239 = vcmp.ge.s32.totalorder %v238, 0
      %vm240 = vcmp.lt.s32.totalorder %v238, 256
      %vm241 = vmand %vm239, %vm240
      %242 = vst.msk [vmem:[#allocation2] ss:$8 sm:$0x3] %vm241, %v235
      %243 = vst.msk [vmem:[#allocation2] ss:$8 sm:$0x0] %vm241, %v235
      %v244 = vlaneseq
      %v245 = vand.u32 %v244, 127
      %v246 = vadd.s32 %v245, 128
      %v247 = vand.u32 %v245, 15
      %v248 = vand.u32 %v246, 15
      %vm249 = vcmp.ge.s32.totalorder %v245, 16
      %vm250 = vcmp.ge.s32.totalorder %v246, 16
      %v251 = vsel %vm249, 1, 0
      %v252 = vsel %vm250, 1, 0
      %v253 = vcvt.s32.f32 %v251
      %v254 = vcvt.s32.f32 %v252
      %vm255 = vcmp.lt.s32.totalorder %v245, 240
      %vm256 = vcmp.lt.s32.totalorder %v246, 240
      %v257 = vsel %vm255, 1, 0
      %v258 = vsel %vm256, 1, 0
      %v259 = vcvt.s32.f32 %v257
      %v260 = vcvt.s32.f32 %v258
      %vm261 = vcmp.ne.s32.totalorder %v247, 0
      %vm262 = vcmp.ne.s32.totalorder %v248, 0
      %v263 = vsel %vm261, 1, 0
      %v264 = vsel %vm262, 1, 0
      %v265 = vcvt.s32.f32 %v263
      %v266 = vcvt.s32.f32 %v264
      %vm267 = vcmp.ne.s32.totalorder %v247, 15
      %vm268 = vcmp.ne.s32.totalorder %v248, 15
      %v269 = vsel %vm267, 1, 0
      %v270 = vsel %vm268, 1, 0
      %v271 = vcvt.s32.f32 %v269
      %v272 = vcvt.s32.f32 %v270
      %v273 = vld [vmem:[#allocation2] sm:$0xff]
      %v274 = vld [vmem:[#allocation2 + $0x8] sm:$0xff]
      %275 = vrot.lane.b32.xlu0 %v273, 16
      %v276 = vpop.permute.xlu0 %275
      %277 = vrot.lane.b32.xlu0 %v274, 16
      %v278 = vpop.permute.xlu0 %277
      %vm279 = vcmp.lt.s32.totalorder %v245, 16
      %v280 = vsel %vm279, %v276, %v278
      %v281 = vsel %vm279, %v278, %v276
      %v282 = vmul.f32 %v281, %v253
      %v283 = vmul.f32 %v280, %v254
      %284 = vst [vmem:[#allocation3 + $0x30] sm:$0xff] %v282
      %285 = vst [vmem:[#allocation3 + $0x38] sm:$0xff] %v283
      %286 = vst [vmem:[#allocation3 + $0x40] sm:$0xff] %v273
      %287 = vst [vmem:[#allocation3 + $0x48] sm:$0xff] %v274
      %288 = vrot.lane.b32.xlu0 %v273, 112
      %v289 = vpop.permute.xlu0 %288
      %290 = vrot.lane.b32.xlu0 %v274, 112
      %v291 = vpop.permute.xlu0 %290
      %vm292 = vcmp.lt.s32.totalorder %v245, 112
      %v293 = vsel %vm292, %v289, %v291
      %v294 = vsel %vm292, %v291, %v289
      %v295 = vmul.f32 %v293, %v259
      %v296 = vmul.f32 %v294, %v260
      %297 = vst [vmem:[#allocation3 + $0x50] sm:$0xff] %v295
      %298 = vst [vmem:[#allocation3 + $0x58] sm:$0xff] %v296
      %v299 = vld [vmem:[#allocation3 + $0x30] sm:$0xff]
      %v300 = vld [vmem:[#allocation3 + $0x38] sm:$0xff]
      %v301 = vld [vmem:[#allocation3 + $0x40] sm:$0xff]
      %v302 = vld [vmem:[#allocation3 + $0x48] sm:$0xff]
      %v303 = vld [vmem:[#allocation3 + $0x50] sm:$0xff]
      %v304 = vld [vmem:[#allocation3 + $0x58] sm:$0xff]
      %305 = vrot.lane.b32.xlu0 %v299, 1
      %v306 = vpop.permute.xlu0 %305
      %307 = vrot.lane.b32.xlu0 %v301, 1
      %v308 = vpop.permute.xlu0 %307
      %309 = vrot.lane.b32.xlu0 %v303, 1
      %v310 = vpop.permute.xlu0 %309
      %311 = vrot.lane.b32.xlu0 %v300, 1
      %v312 = vpop.permute.xlu0 %311
      %313 = vrot.lane.b32.xlu0 %v302, 1
      %v314 = vpop.permute.xlu0 %313
      %315 = vrot.lane.b32.xlu0 %v304, 1
      %v316 = vpop.permute.xlu0 %315
      %vm317 = vcmp.lt.s32.totalorder %v245, 1
      %v318 = vsel %vm317, %v306, %v312
      %v319 = vsel %vm317, %v308, %v314
      %v320 = vsel %vm317, %v310, %v316
      %v321 = vsel %vm317, %v312, %v306
      %v322 = vsel %vm317, %v314, %v308
      %v323 = vsel %vm317, %v316, %v310
      %v324 = vmul.f32 %v321, %v265
      %v325 = vmul.f32 %v318, %v266
      %v326 = vmul.f32 %v322, %v265
      %v327 = vmul.f32 %v319, %v266
      %v328 = vmul.f32 %v323, %v265
      %v329 = vmul.f32 %v320, %v266
      %330 = vst [vmem:[#allocation3] sm:$0xff] %v324
      %331 = vst [vmem:[#allocation3 + $0x8] sm:$0xff] %v325
      %332 = vst [vmem:[#allocation3 + $0x10] sm:$0xff] %v326
      %333 = vst [vmem:[#allocation3 + $0x18] sm:$0xff] %v327
      %334 = vst [vmem:[#allocation3 + $0x20] sm:$0xff] %v328
      %335 = vst [vmem:[#allocation3 + $0x28] sm:$0xff] %v329
      %336 = vrot.lane.b32.xlu0 %v299, 127
      %v337 = vpop.permute.xlu0 %336
      %338 = vrot.lane.b32.xlu0 %v301, 127
      %v339 = vpop.permute.xlu0 %338
      %340 = vrot.lane.b32.xlu0 %v303, 127
      %v341 = vpop.permute.xlu0 %340
      %342 = vrot.lane.b32.xlu0 %v300, 127
      %v343 = vpop.permute.xlu0 %342
      %344 = vrot.lane.b32.xlu0 %v302, 127
      %v345 = vpop.permute.xlu0 %344
      %346 = vrot.lane.b32.xlu0 %v304, 127
      %v347 = vpop.permute.xlu0 %346
      %vm348 = vcmp.lt.s32.totalorder %v245, 127
      %v349 = vsel %vm348, %v337, %v343
      %v350 = vsel %vm348, %v339, %v345
      %v351 = vsel %vm348, %v341, %v347
      %v352 = vsel %vm348, %v343, %v337
      %v353 = vsel %vm348, %v345, %v339
      %v354 = vsel %vm348, %v347, %v341
      %v355 = vmul.f32 %v349, %v271
      %v356 = vmul.f32 %v352, %v272
      %v357 = vmul.f32 %v350, %v271
      %v358 = vmul.f32 %v353, %v272
      %v359 = vmul.f32 %v351, %v271
      %v360 = vmul.f32 %v354, %v272
      %361 = vst [vmem:[#allocation3 + $0x60] sm:$0xff] %v355
      %362 = vst [vmem:[#allocation3 + $0x68] sm:$0xff] %v356
      %363 = vst [vmem:[#allocation3 + $0x70] sm:$0xff] %v357
      %364 = vst [vmem:[#allocation3 + $0x78] sm:$0xff] %v358
      %365 = vst [vmem:[#allocation3 + $0x80] sm:$0xff] %v359
      %366 = vst [vmem:[#allocation3 + $0x88] sm:$0xff] %v360
      %v367 = vld [vmem:[#allocation3] sm:$0xff]
      %v368 = vld [vmem:[#allocation3 + $0x8] sm:$0xff]
      %v369 = vld [vmem:[#allocation3 + $0x10] sm:$0xff]
      %v370 = vld [vmem:[#allocation3 + $0x18] sm:$0xff]
      %v371 = vld [vmem:[#allocation3 + $0x20] sm:$0xff]
      %v372 = vld [vmem:[#allocation3 + $0x28] sm:$0xff]
      %v373 = vld [vmem:[#allocation3 + $0x30] sm:$0xff]
      %v374 = vld [vmem:[#allocation3 + $0x38] sm:$0xff]
      %v375 = vld [vmem:[#allocation3 + $0x40] sm:$0xff]
      %v376 = vld [vmem:[#allocation3 + $0x48] sm:$0xff]
      %v377 = vld [vmem:[#allocation3 + $0x50] sm:$0xff]
      %v378 = vld [vmem:[#allocation3 + $0x58] sm:$0xff]
      %v379 = vld [vmem:[#allocation3 + $0x60] sm:$0xff]
      %v380 = vld [vmem:[#allocation3 + $0x68] sm:$0xff]
      %v381 = vld [vmem:[#allocation3 + $0x70] sm:$0xff]
      %v382 = vld [vmem:[#allocation3 + $0x78] sm:$0xff]
      %v383 = vld [vmem:[#allocation3 + $0x80] sm:$0xff]
      %v384 = vld [vmem:[#allocation3 + $0x88] sm:$0xff]
      %v385 = vpack.c.bf16 %v369, %v367
      %v386 = vpack.c.bf16 %v370, %v368
      %v387 = vpack.c.bf16 %v373, %v371
      %v388 = vpack.c.bf16 %v374, %v372
      %v389 = vpack.c.bf16 %v377, %v375
      %v390 = vpack.c.bf16 %v378, %v376
      %v391 = vpack.c.bf16 %v381, %v379
      %v392 = vpack.c.bf16 %v382, %v380
      %v393 = vpack.c.bf16 %v383, %v383
      %v394 = vpack.c.bf16 %v384, %v384
      %v395 = vld [vmem:[%s1] sm:$0xf]
      %v396 = vld [vmem:[%s2] sm:$0xff]
      %398 = vset.pattern.permute.xlu0 0
      %399 = vperm.xlu0 %398, %v396
      %v400 = vpop.permute.xlu0 %399
      %vm402 = vcmask 588800
      %v404 = vsel %vm402, %v395, 0
      %vm406 = vcmask 1043456
      %v408 = vsel %vm406, %v393, 0
      %v411 = vsel %vm406, %v394, 0
      %413 = vmatprep.subr.bf16.mxu0 %v386
      %414 = vmatpush1.bf16.msra.mxu0 %v385
      %415 = vmatprep.subr.bf16.mxu0 %v388
      %416 = vmatpush1.bf16.msra.mxu0 %v387
      %417 = vmatprep.subr.bf16.mxu0 %v390
      %418 = vmatpush1.bf16.msra.mxu0 %v389
      %419 = vmatprep.subr.bf16.mxu0 %v392
      %420 = vmatpush1.bf16.msra.mxu0 %v391
      %421 = vmatprep.subr.bf16.mxu0 %v411
      %422 = vmatpush1.bf16.msra.mxu0 %v408
      %423 = vmatprep.subr.bf16.mxu0 0
      %424 = vmatpush1.bf16.msra.mxu0 0
      %425 = vmatprep.subr.bf16.mxu0 0
      %426 = vmatpush1.bf16.msra.mxu0 0
      %427 = vmatprep.subr.bf16.mxu0 0
      %428 = vmatpush1.bf16.msra.mxu0 0
      %429 = vmatprep.subr.bf16.mxu0 0
      %430 = vmatpush1.bf16.msra.mxu0 0
      %431 = vmatprep.subr.bf16.mxu0 0
      %432 = vmatpush1.bf16.msra.mxu0 0
      %433 = vmatprep.subr.bf16.mxu0 0
      %434 = vmatpush1.bf16.msra.mxu0 0
      %435 = vmatprep.subr.bf16.mxu0 0
      %436 = vmatpush1.bf16.msra.mxu0 0
      %437 = vmatprep.subr.bf16.mxu0 0
      %438 = vmatpush1.bf16.msra.mxu0 0
      %439 = vmatprep.subr.bf16.mxu0 0
      %440 = vmatpush1.bf16.msra.mxu0 0
      %441 = vmatprep.subr.bf16.mxu0 0
      %442 = vmatpush1.bf16.msra.mxu0 0
      %443 = vmatprep.subr.bf16.mxu0 0
      %444 = vmatpush1.bf16.msra.mxu0 0
      %445 = vmatprep.mubr.bf16.mxu0 0
      %446 = vmatmul.mubr.bf16.gmra.mrb[0].mxu0 %v404
      %v447 = vpop.f32.mrb[0].mxu0
      %v448 = vadd.f32 %v400, %v447
      %v449 = vpop.f32.mrb[0].mxu0
      %v450 = vadd.f32 %v400, %v449
      %v451 = vpop.f32.mrb[0].mxu0
      %v452 = vpop.f32.mrb[0].mxu0
      %453 = vdwg.mxu0
      %v454 = vmax.f32 %v448, 0.0
      %v455 = vmax.f32 %v450, 0.0
      %456 = vrot.lane.b32.xlu0 %v454, 16
      %v457 = vpop.permute.xlu0 %456
      %458 = vrot.lane.b32.xlu0 %v455, 16
      %v459 = vpop.permute.xlu0 %458
      %v460 = vsel %vm279, %v457, %v459
      %v461 = vsel %vm279, %v459, %v457
      %v462 = vmul.f32 %v461, %v253
      %v463 = vmul.f32 %v460, %v254
      %464 = vst [vmem:[#allocation3 + $0x30] sm:$0xff] %v462
      %465 = vst [vmem:[#allocation3 + $0x38] sm:$0xff] %v463
      %466 = vst [vmem:[#allocation3 + $0x40] sm:$0xff] %v454
      %467 = vst [vmem:[#allocation3 + $0x48] sm:$0xff] %v455
      %468 = vrot.lane.b32.xlu0 %v454, 112
      %v469 = vpop.permute.xlu0 %468
      %470 = vrot.lane.b32.xlu0 %v455, 112
      %v471 = vpop.permute.xlu0 %470
      %v472 = vsel %vm292, %v469, %v471
      %v473 = vsel %vm292, %v471, %v469
      %v474 = vmul.f32 %v472, %v259
      %v475 = vmul.f32 %v473, %v260
      %476 = vst [vmem:[#allocation3 + $0x50] sm:$0xff] %v474
      %477 = vst [vmem:[#allocation3 + $0x58] sm:$0xff] %v475
      %v478 = vld [vmem:[#allocation3 + $0x30] sm:$0xff]
      %v479 = vld [vmem:[#allocation3 + $0x38] sm:$0xff]
      %v480 = vld [vmem:[#allocation3 + $0x40] sm:$0xff]
      %v481 = vld [vmem:[#allocation3 + $0x48] sm:$0xff]
      %v482 = vld [vmem:[#allocation3 + $0x50] sm:$0xff]
      %v483 = vld [vmem:[#allocation3 + $0x58] sm:$0xff]
      %484 = vrot.lane.b32.xlu0 %v478, 1
      %v485 = vpop.permute.xlu0 %484
      %486 = vrot.lane.b32.xlu0 %v480, 1
      %v487 = vpop.permute.xlu0 %486
      %488 = vrot.lane.b32.xlu0 %v482, 1
      %v489 = vpop.permute.xlu0 %488
      %490 = vrot.lane.b32.xlu0 %v479, 1
      %v491 = vpop.permute.xlu0 %490
      %492 = vrot.lane.b32.xlu0 %v481, 1
      %v493 = vpop.permute.xlu0 %492
      %494 = vrot.lane.b32.xlu0 %v483, 1
      %v495 = vpop.permute.xlu0 %494
      %v496 = vsel %vm317, %v485, %v491
      %v497 = vsel %vm317, %v487, %v493
      %v498 = vsel %vm317, %v489, %v495
      %v499 = vsel %vm317, %v491, %v485
      %v500 = vsel %vm317, %v493, %v487
      %v501 = vsel %vm317, %v495, %v489
      %v502 = vmul.f32 %v499, %v265
      %v503 = vmul.f32 %v496, %v266
      %v504 = vmul.f32 %v500, %v265
      %v505 = vmul.f32 %v497, %v266
      %v506 = vmul.f32 %v501, %v265
      %v507 = vmul.f32 %v498, %v266
      %508 = vst [vmem:[#allocation3] sm:$0xff] %v502
      %509 = vst [vmem:[#allocation3 + $0x8] sm:$0xff] %v503
      %510 = vst [vmem:[#allocation3 + $0x10] sm:$0xff] %v504
      %511 = vst [vmem:[#allocation3 + $0x18] sm:$0xff] %v505
      %512 = vst [vmem:[#allocation3 + $0x20] sm:$0xff] %v506
      %513 = vst [vmem:[#allocation3 + $0x28] sm:$0xff] %v507
      %514 = vrot.lane.b32.xlu0 %v478, 127
      %v515 = vpop.permute.xlu0 %514
      %516 = vrot.lane.b32.xlu0 %v480, 127
      %v517 = vpop.permute.xlu0 %516
      %518 = vrot.lane.b32.xlu0 %v482, 127
      %v519 = vpop.permute.xlu0 %518
      %520 = vrot.lane.b32.xlu0 %v479, 127
      %v521 = vpop.permute.xlu0 %520
      %522 = vrot.lane.b32.xlu0 %v481, 127
      %v523 = vpop.permute.xlu0 %522
      %524 = vrot.lane.b32.xlu0 %v483, 127
      %v525 = vpop.permute.xlu0 %524
      %v526 = vsel %vm348, %v515, %v521
      %v527 = vsel %vm348, %v517, %v523
      %v528 = vsel %vm348, %v519, %v525
      %v529 = vsel %vm348, %v521, %v515
      %v530 = vsel %vm348, %v523, %v517
      %v531 = vsel %vm348, %v525, %v519
      %v532 = vmul.f32 %v526, %v271
      %v533 = vmul.f32 %v529, %v272
      %v534 = vmul.f32 %v527, %v271
      %v535 = vmul.f32 %v530, %v272
      %v536 = vmul.f32 %v528, %v271
      %v537 = vmul.f32 %v531, %v272
      %538 = vst [vmem:[#allocation3 + $0x60] sm:$0xff] %v532
      %539 = vst [vmem:[#allocation3 + $0x68] sm:$0xff] %v533
      %540 = vst [vmem:[#allocation3 + $0x70] sm:$0xff] %v534
      %541 = vst [vmem:[#allocation3 + $0x78] sm:$0xff] %v535
      %542 = vst [vmem:[#allocation3 + $0x80] sm:$0xff] %v536
      %543 = vst [vmem:[#allocation3 + $0x88] sm:$0xff] %v537
      %v544 = vld [vmem:[#allocation3] sm:$0xff]
      %v545 = vld [vmem:[#allocation3 + $0x8] sm:$0xff]
      %v546 = vld [vmem:[#allocation3 + $0x10] sm:$0xff]
      %v547 = vld [vmem:[#allocation3 + $0x18] sm:$0xff]
      %v548 = vld [vmem:[#allocation3 + $0x20] sm:$0xff]
      %v549 = vld [vmem:[#allocation3 + $0x28] sm:$0xff]
      %v550 = vld [vmem:[#allocation3 + $0x30] sm:$0xff]
      %v551 = vld [vmem:[#allocation3 + $0x38] sm:$0xff]
      %v552 = vld [vmem:[#allocation3 + $0x40] sm:$0xff]
      %v553 = vld [vmem:[#allocation3 + $0x48] sm:$0xff]
      %v554 = vld [vmem:[#allocation3 + $0x50] sm:$0xff]
      %v555 = vld [vmem:[#allocation3 + $0x58] sm:$0xff]
      %v556 = vld [vmem:[#allocation3 + $0x60] sm:$0xff]
      %v557 = vld [vmem:[#allocation3 + $0x68] sm:$0xff]
      %v558 = vld [vmem:[#allocation3 + $0x70] sm:$0xff]
      %v559 = vld [vmem:[#allocation3 + $0x78] sm:$0xff]
      %v560 = vld [vmem:[#allocation3 + $0x80] sm:$0xff]
      %v561 = vld [vmem:[#allocation3 + $0x88] sm:$0xff]
      %v562 = vpack.c.bf16 %v546, %v544
      %v563 = vpack.c.bf16 %v547, %v545
      %v564 = vpack.c.bf16 %v550, %v548
      %v565 = vpack.c.bf16 %v551, %v549
      %v566 = vpack.c.bf16 %v554, %v552
      %v567 = vpack.c.bf16 %v555, %v553
      %v568 = vpack.c.bf16 %v558, %v556
      %v569 = vpack.c.bf16 %v559, %v557
      %v570 = vpack.c.bf16 %v560, %v560
      %v571 = vpack.c.bf16 %v561, %v561
      %v572 = vld [vmem:[%s3] sm:$0x1]
      %v573 = vld [vmem:[#allocation4] sm:$0x1]
      %575 = vset.pattern.permute.xlu0 0
      %576 = vperm.xlu0 %575, %v573
      %v577 = vpop.permute.xlu0 %576
      %v579 = vlaneseq
      %v580 = vshrl.u32 %v579, 7
      %v581 = vsub.s32 0, %v580
      %v582 = vrot.slane %v577, %v581
      %v584 = vsel %vm402, %v572, 0
      %v587 = vsel %vm406, %v570, 0
      %v590 = vsel %vm406, %v571, 0
      %592 = vmatprep.subr.bf16.mxu0 %v563
      %593 = vmatpush1.bf16.msra.mxu0 %v562
      %594 = vmatprep.subr.bf16.mxu0 %v565
      %595 = vmatpush1.bf16.msra.mxu0 %v564
      %596 = vmatprep.subr.bf16.mxu0 %v567
      %597 = vmatpush1.bf16.msra.mxu0 %v566
      %598 = vmatprep.subr.bf16.mxu0 %v569
      %599 = vmatpush1.bf16.msra.mxu0 %v568
      %600 = vmatprep.subr.bf16.mxu0 %v590
      %601 = vmatpush1.bf16.msra.mxu0 %v587
      %602 = vmatprep.subr.bf16.mxu0 0
      %603 = vmatpush1.bf16.msra.mxu0 0
      %604 = vmatprep.subr.bf16.mxu0 0
      %605 = vmatpush1.bf16.msra.mxu0 0
      %606 = vmatprep.subr.bf16.mxu0 0
      %607 = vmatpush1.bf16.msra.mxu0 0
      %608 = vmatprep.subr.bf16.mxu0 0
      %609 = vmatpush1.bf16.msra.mxu0 0
      %610 = vmatprep.subr.bf16.mxu0 0
      %611 = vmatpush1.bf16.msra.mxu0 0
      %612 = vmatprep.subr.bf16.mxu0 0
      %613 = vmatpush1.bf16.msra.mxu0 0
      %614 = vmatprep.subr.bf16.mxu0 0
      %615 = vmatpush1.bf16.msra.mxu0 0
      %616 = vmatprep.subr.bf16.mxu0 0
      %617 = vmatpush1.bf16.msra.mxu0 0
      %618 = vmatprep.subr.bf16.mxu0 0
      %619 = vmatpush1.bf16.msra.mxu0 0
      %620 = vmatprep.subr.bf16.mxu0 0
      %621 = vmatpush1.bf16.msra.mxu0 0
      %622 = vmatprep.subr.bf16.mxu0 0
      %623 = vmatpush1.bf16.msra.mxu0 0
      %624 = vmatprep.mubr.bf16.mxu0 0
      %625 = vmatmul.mubr.bf16.gmra.mrb[0].mxu0 %v584
      %v626 = vpop.f32.mrb[0].mxu0
      %v627 = vadd.f32 %v582, %v626
      %v628 = vpop.f32.mrb[0].mxu0
      %v629 = vadd.f32 %v582, %v628
      %v630 = vpop.f32.mrb[0].mxu0
      %v631 = vpop.f32.mrb[0].mxu0
      %632 = vdwg.mxu0
      %v633 = vxor.u32 %v627, 2147483648
      %v634 = vxor.u32 %v629, 2147483648
      %v635 = vmul.f32 %v633, 1.442695
      %v636 = vpow.pop %v635
      %v637 = vmul.f32 %v634, 1.442695
      %v638 = vpow.pop %v637
      %v639 = vadd.f32 %v636, 1.0
      %v640 = vadd.f32 %v638, 1.0
      %v641 = vrcp.pop %v639
      %v642 = vmul.f32 1.0, %v641
      %v643 = vrcp.pop %v640
      %v644 = vmul.f32 1.0, %v643
      %v647 = vcombine.low %v642, %v644
      %v649 = vunpack.c.l.s4 1966171168
      %v650 = vunpack.c.0.s8 %v649
      %v651 = vlaneseq
      %v652 = vshrl.u32 %v651, 7
      %v653 = vsub.s32 %v650, %v652
      %v654 = vrot.slane %v647, %v653
      %v656 = vunpack.c.l.s4 1966171168
      %v657 = vunpack.c.0.s8 %v656
      %v658 = vlaneseq
      %v659 = vshrl.u32 %v658, 7
      %v660 = vsub.s32 %v657, %v659
      %v661 = vrot.slane %v654, %v660
      %663 = vst.msk [vmem:[%s224] sm:$0x3] %vm241, %v661
      %p664 = scmp.lt.s32.totalorder %s18, 7
      %s665 = scalar_select %p664, %s18, 7
      %s666 = smul.addr %s665, 2
      %s667 = scalar_lea.vmem %s5, %s666
      // Predicated region
      $region41: #{model_canet_forward.2} parent=39 // pred_check
        %p668 = pneg %p146
      $region42: #{model_canet_forward.2} parent=39 // pred_check_branch
        %670 = sbr.rel (%p668) target = $region44
      $region43: #{model_canet_forward.2} parent=39 // pred_region
        _
      $region44: #{model_canet_forward.2} parent=39 // pred_fallthru
        _
    $region40: #{model_canet_forward.2} parent=5 // pred_fallthru
      _
    %p671 = scmp.le.s32.totalorder 2, %s13
    // Predicated region
    $region45: #{model_canet_forward.2} parent=5 // pred_check
      %p672 = pneg %p671
    $region46: #{model_canet_forward.2} parent=5 // pred_check_branch
      %674 = sbr.rel (%p672) target = $region48
    $region47: #{model_canet_forward.2} parent=5 // pred_region
      %s675 = ssub.s32 %s13, 2
      // Predicated region
      $region49: #{model_canet_forward.2} parent=47 // pred_check
        %p676 = pneg %p152
      $region50: #{model_canet_forward.2} parent=47 // pred_check_branch
        %678 = sbr.rel (%p676) target = $region52
      $region51: #{model_canet_forward.2} parent=47 // pred_region
        %p679 = scmp.lt.s32.totalorder %s19, 7
        %s680 = scalar_select %p679, %s19, 7
        %s681 = smul.addr %s680, 2
        %s682 = scalar_lea.vmem %s5, %s681
      $region52: #{model_canet_forward.2} parent=47 // pred_fallthru
        _
    $region48: #{model_canet_forward.2} parent=5 // pred_fallthru
      _
  $region6: #{model_canet_forward.2} parent=0 // loop_footer
    %s17 = sadd.s32 1, %s13
  $region7: #{model_canet_forward.2} parent=0 // loop_footer_branch
    %12 = sbr.rel target = $region3
  $region8: #{model_canet_forward.2} parent=0 // loop_exit
    _

// kernel: model_canet_forward.3
$region0: #{model_canet_forward.3}
  #allocation0 [shape = 'u32[]', space=smem, size = 0x4, offset = 0x4, fixed_abs, tag = 'smem constant byte address 0x4 - core index']
  #allocation1 [shape = 'u32[144,128]{1,0:T(1,128)}', space=vmem, size = 0x12000, scoped, tag = 'internal scratch']
  #allocation2 [shape = 'f32[8,256]{1,0:T(8,128)}', space=vmem, size = 0x2000, scoped, tag = 'scratch operand']
  #allocation3 [shape = 'f32[144,256]{1,0:T(8,128)}', space=vmem, size = 0x24000, scoped, tag = 'scratch operand']
  %s0 = inlined_call_operand.vmem [shape: f32[8,3,256], index: 0, kind: input, shape index: {}]
  %s1 = inlined_call_operand.vmem [shape: f32[8,1,256], index: 1, kind: input, shape index: {}]
  %s2 = inlined_call_operand.vmem [shape: f32[1,3,256], index: 2, kind: input, shape index: {}]
  %s3 = inlined_call_operand.vmem [shape: bf16[16,72], index: 3, kind: input, shape index: {}]
  %s4 = inlined_call_operand.vmem [shape: f32[16,1], index: 4, kind: input, shape index: {}]
  %s5 = inlined_call_operand.vmem [shape: bf16[2,144], index: 5, kind: input, shape index: {}]
  %s6 = inlined_call_operand.vmem [shape: f32[2,1], index: 6, kind: input, shape index: {}]
  %s7 = inlined_call_operand.vmem [shape: f32[8,3,256], index: 7, kind: output, shape index: {0}]
  %s8 = inlined_call_operand.vmem [shape: f32[8,24,128], index: 8, kind: output, shape index: {1}]
  %9 = xla_tuple %s7, %s8
  %s10 = sld [smem:[#allocation0]]
  $region69: #{model_canet_forward.3} parent=0
    _
  %s12 = ssub.s32 1, %s10
  %s13 = scalar_select 0, %s12, %s10
  loop: start=0, step=1, limit=10
  $region2: #{model_canet_forward.3} parent=0 // loop_pre_header
    _
  $region3: #{model_canet_forward.3} parent=0 // loop_header
    %s15 = sphi 0, %s19
    %p16 = scmp.ge.s32.totalorder %s15, 10
    %s25 = sphi 0, %s27
    %s28 = sphi 0, %s25
    %s29 = sphi 0, %s28
    %s45 = sphi 0, %s29
    %s51 = sphi 0, %s53
    %s54 = sphi 0, %s51
    %s55 = sphi 0, %s54
    %s71 = sphi 0, %s55
    %s75 = sphi 0, %s75
    %s77 = sphi 0, %s75
    %s78 = sphi 0, %s77
    %s92 = sphi 0, %s78
    %s96 = sphi 0, %s96
    %s98 = sphi 0, %s96
    %s99 = sphi 0, %s98
    %s113 = sphi 0, %s99
    %s117 = sphi 0, %s117
    %s119 = sphi 0, %s117
    %s120 = sphi 0, %s119
    %s134 = sphi 0, %s120
    %s138 = sphi 0, %s138
    %s140 = sphi 0, %s138
    %s141 = sphi 0, %s140
    %s155 = sphi 0, %s141
    %s159 = sphi 0, %s159
    %s161 = sphi 0, %s159
    %s162 = sphi 0, %s161
    %s176 = sphi 0, %s162
    %s182 = sphi 0, %s184
    %s185 = sphi 0, %s182
    %s186 = sphi 0, %s185
    %s202 = sphi 0, %s186
    %s208 = sphi 0, %s210
    %s211 = sphi 0, %s208
    %s212 = sphi 0, %s211
    %s228 = sphi 0, %s212
  $region4: #{model_canet_forward.3} parent=0 // loop_header_branch
    %18 = sbr.rel (%p16) target = $region8
  $region5: #{model_canet_forward.3} parent=0 // loop_body
    %s20 = ssub.s32 %s15, 1
    %s21 = ssub.s32 %s15, 2
    %s22 = sadd.s32 %s15, 1
    %s23 = ssub.s32 %s15, %s22
    %p24 = scmp.eq.s32.totalorder %s23, 0
    %s26 = sadd.s32 %s25, 1
    %s27 = scalar_select %p24, %s25, %s26
    %p30 = pneg %p24
    %p31 = scmp.eq.s32.totalorder %s15, 7
    %p32 = por %p30, %p31
    %p33 = scmp.ne.s32.totalorder %s25, %s28
    %p34 = scmp.eq.s32.totalorder %s15, 0
    %p35 = por %p33, %p34
    %p36 = scmp.ne.s32.totalorder %s25, %s28
    %p37 = scmp.eq.s32.totalorder %s20, 7
    %p38 = por %p36, %p37
    %p39 = scmp.ne.s32.totalorder %s28, %s29
    %p40 = scmp.eq.s32.totalorder %s20, 0
    %p41 = por %p39, %p40
    %p42 = scmp.ne.s32.totalorder %s28, %s29
    %p43 = scmp.eq.s32.totalorder %s21, 7
    %p44 = por %p42, %p43
    %p46 = scmp.ne.s32.totalorder %s29, %s45
    %p47 = scmp.eq.s32.totalorder %s21, 0
    %p48 = por %p46, %p47
    %s49 = ssub.s32 %s15, %s22
    %p50 = scmp.eq.s32.totalorder %s49, 0
    %s52 = sadd.s32 %s51, 1
    %s53 = scalar_select %p50, %s51, %s52
    %p56 = pneg %p50
    %p57 = scmp.eq.s32.totalorder %s15, 7
    %p58 = por %p56, %p57
    %p59 = scmp.ne.s32.totalorder %s51, %s54
    %p60 = scmp.eq.s32.totalorder %s15, 0
    %p61 = por %p59, %p60
    %p62 = scmp.ne.s32.totalorder %s51, %s54
    %p63 = scmp.eq.s32.totalorder %s20, 7
    %p64 = por %p62, %p63
    %p65 = scmp.ne.s32.totalorder %s54, %s55
    %p66 = scmp.eq.s32.totalorder %s20, 0
    %p67 = por %p65, %p66
    %p68 = scmp.ne.s32.totalorder %s54, %s55
    %p69 = scmp.eq.s32.totalorder %s21, 7
    %p70 = por %p68, %p69
    %p72 = scmp.ne.s32.totalorder %s55, %s71
    %p73 = scmp.eq.s32.totalorder %s21, 0
    %p74 = por %p72, %p73
    %s76 = sadd.s32 %s75, 1
    %p79 = scmp.eq.s32.totalorder %s15, 7
    %p80 = scmp.ne.s32.totalorder %s75, %s77
    %p81 = scmp.eq.s32.totalorder %s15, 0
    %p82 = por %p80, %p81
    %p83 = scmp.ne.s32.totalorder %s75, %s77
    %p84 = scmp.eq.s32.totalorder %s20, 7
    %p85 = por %p83, %p84
    %p86 = scmp.ne.s32.totalorder %s77, %s78
    %p87 = scmp.eq.s32.totalorder %s20, 0
    %p88 = por %p86, %p87
    %p89 = scmp.ne.s32.totalorder %s77, %s78
    %p90 = scmp.eq.s32.totalorder %s21, 7
    %p91 = por %p89, %p90
    %p93 = scmp.ne.s32.totalorder %s78, %s92
    %p94 = scmp.eq.s32.totalorder %s21, 0
    %p95 = por %p93, %p94
    %s97 = sadd.s32 %s96, 1
    %p100 = scmp.eq.s32.totalorder %s15, 7
    %p101 = scmp.ne.s32.totalorder %s96, %s98
    %p102 = scmp.eq.s32.totalorder %s15, 0
    %p103 = por %p101, %p102
    %p104 = scmp.ne.s32.totalorder %s96, %s98
    %p105 = scmp.eq.s32.totalorder %s20, 7
    %p106 = por %p104, %p105
    %p107 = scmp.ne.s32.totalorder %s98, %s99
    %p108 = scmp.eq.s32.totalorder %s20, 0
    %p109 = por %p107, %p108
    %p110 = scmp.ne.s32.totalorder %s98, %s99
    %p111 = scmp.eq.s32.totalorder %s21, 7
    %p112 = por %p110, %p111
    %p114 = scmp.ne.s32.totalorder %s99, %s113
    %p115 = scmp.eq.s32.totalorder %s21, 0
    %p116 = por %p114, %p115
    %s118 = sadd.s32 %s117, 1
    %p121 = scmp.eq.s32.totalorder %s15, 7
    %p122 = scmp.ne.s32.totalorder %s117, %s119
    %p123 = scmp.eq.s32.totalorder %s15, 0
    %p124 = por %p122, %p123
    %p125 = scmp.ne.s32.totalorder %s117, %s119
    %p126 = scmp.eq.s32.totalorder %s20, 7
    %p127 = por %p125, %p126
    %p128 = scmp.ne.s32.totalorder %s119, %s120
    %p129 = scmp.eq.s32.totalorder %s20, 0
    %p130 = por %p128, %p129
    %p131 = scmp.ne.s32.totalorder %s119, %s120
    %p132 = scmp.eq.s32.totalorder %s21, 7
    %p133 = por %p131, %p132
    %p135 = scmp.ne.s32.totalorder %s120, %s134
    %p136 = scmp.eq.s32.totalorder %s21, 0
    %p137 = por %p135, %p136
    %s139 = sadd.s32 %s138, 1
    %p142 = scmp.eq.s32.totalorder %s15, 7
    %p143 = scmp.ne.s32.totalorder %s138, %s140
    %p144 = scmp.eq.s32.totalorder %s15, 0
    %p145 = por %p143, %p144
    %p146 = scmp.ne.s32.totalorder %s138, %s140
    %p147 = scmp.eq.s32.totalorder %s20, 7
    %p148 = por %p146, %p147
    %p149 = scmp.ne.s32.totalorder %s140, %s141
    %p150 = scmp.eq.s32.totalorder %s20, 0
    %p151 = por %p149, %p150
    %p152 = scmp.ne.s32.totalorder %s140, %s141
    %p153 = scmp.eq.s32.totalorder %s21, 7
    %p154 = por %p152, %p153
    %p156 = scmp.ne.s32.totalorder %s141, %s155
    %p157 = scmp.eq.s32.totalorder %s21, 0
    %p158 = por %p156, %p157
    %s160 = sadd.s32 %s159, 1
    %p163 = scmp.eq.s32.totalorder %s15, 7
    %p164 = scmp.ne.s32.totalorder %s159, %s161
    %p165 = scmp.eq.s32.totalorder %s15, 0
    %p166 = por %p164, %p165
    %p167 = scmp.ne.s32.totalorder %s159, %s161
    %p168 = scmp.eq.s32.totalorder %s20, 7
    %p169 = por %p167, %p168
    %p170 = scmp.ne.s32.totalorder %s161, %s162
    %p171 = scmp.eq.s32.totalorder %s20, 0
    %p172 = por %p170, %p171
    %p173 = scmp.ne.s32.totalorder %s161, %s162
    %p174 = scmp.eq.s32.totalorder %s21, 7
    %p175 = por %p173, %p174
    %p177 = scmp.ne.s32.totalorder %s162, %s176
    %p178 = scmp.eq.s32.totalorder %s21, 0
    %p179 = por %p177, %p178
    %s180 = ssub.s32 %s15, %s22
    %p181 = scmp.eq.s32.totalorder %s180, 0
    %s183 = sadd.s32 %s182, 1
    %s184 = scalar_select %p181, %s182, %s183
    %p187 = pneg %p181
    %p188 = scmp.eq.s32.totalorder %s15, 7
    %p189 = por %p187, %p188
    %p190 = scmp.ne.s32.totalorder %s182, %s185
    %p191 = scmp.eq.s32.totalorder %s15, 0
    %p192 = por %p190, %p191
    %p193 = scmp.ne.s32.totalorder %s182, %s185
    %p194 = scmp.eq.s32.totalorder %s20, 7
    %p195 = por %p193, %p194
    %p196 = scmp.ne.s32.totalorder %s185, %s186
    %p197 = scmp.eq.s32.totalorder %s20, 0
    %p198 = por %p196, %p197
    %p199 = scmp.ne.s32.totalorder %s185, %s186
    %p200 = scmp.eq.s32.totalorder %s21, 7
    %p201 = por %p199, %p200
    %p203 = scmp.ne.s32.totalorder %s186, %s202
    %p204 = scmp.eq.s32.totalorder %s21, 0
    %p205 = por %p203, %p204
    %s206 = ssub.s32 %s15, %s22
    %p207 = scmp.eq.s32.totalorder %s206, 0
    %s209 = sadd.s32 %s208, 1
    %s210 = scalar_select %p207, %s208, %s209
    %p213 = pneg %p207
    %p214 = scmp.eq.s32.totalorder %s15, 7
    %p215 = por %p213, %p214
    %p216 = scmp.ne.s32.totalorder %s208, %s211
    %p217 = scmp.eq.s32.totalorder %s15, 0
    %p218 = por %p216, %p217
    %p219 = scmp.ne.s32.totalorder %s208, %s211
    %p220 = scmp.eq.s32.totalorder %s20, 7
    %p221 = por %p219, %p220
    %p222 = scmp.ne.s32.totalorder %s211, %s212
    %p223 = scmp.eq.s32.totalorder %s20, 0
    %p224 = por %p222, %p223
    %p225 = scmp.ne.s32.totalorder %s211, %s212
    %p226 = scmp.eq.s32.totalorder %s21, 7
    %p227 = por %p225, %p226
    %p229 = scmp.ne.s32.totalorder %s212, %s228
    %p230 = scmp.eq.s32.totalorder %s21, 0
    %p231 = por %p229, %p230
    %p232 = scmp.le.s32.totalorder 1, %s15
    %p233 = scmp.lt.s32.totalorder %s15, 9
    %p234 = pnand %p232, %p233
    %p235 = pneg %p234
    // Predicated region
    $region9: #{model_canet_forward.3} parent=5 // pred_check
      _
    $region10: #{model_canet_forward.3} parent=5 // pred_check_branch
      %237 = sbr.rel (%p234) target = $region12
    $region11: #{model_canet_forward.3} parent=5 // pred_region
      %s238 = ssub.s32 %s15, 1
      // Predicated region
      $region13: #{model_canet_forward.3} parent=11 // pred_check
        %p239 = pneg %p88
      $region14: #{model_canet_forward.3} parent=11 // pred_check_branch
        %241 = sbr.rel (%p239) target = $region16
      $region15: #{model_canet_forward.3} parent=11 // pred_region
        _
      $region16: #{model_canet_forward.3} parent=11 // pred_fallthru
        _
      // Predicated region
      $region17: #{model_canet_forward.3} parent=11 // pred_check
        %p242 = pneg %p109
      $region18: #{model_canet_forward.3} parent=11 // pred_check_branch
        %244 = sbr.rel (%p242) target = $region20
      $region19: #{model_canet_forward.3} parent=11 // pred_region
        _
      $region20: #{model_canet_forward.3} parent=11 // pred_fallthru
        _
      // Predicated region
      $region21: #{model_canet_forward.3} parent=11 // pred_check
        %p245 = pneg %p130
      $region22: #{model_canet_forward.3} parent=11 // pred_check_branch
        %247 = sbr.rel (%p245) target = $region24
      $region23: #{model_canet_forward.3} parent=11 // pred_region
        _
      $region24: #{model_canet_forward.3} parent=11 // pred_fallthru
        _
      // Predicated region
      $region25: #{model_canet_forward.3} parent=11 // pred_check
        %p248 = pneg %p151
      $region26: #{model_canet_forward.3} parent=11 // pred_check_branch
        %250 = sbr.rel (%p248) target = $region28
      $region27: #{model_canet_forward.3} parent=11 // pred_region
        _
      $region28: #{model_canet_forward.3} parent=11 // pred_fallthru
        _
      // Predicated region
      $region29: #{model_canet_forward.3} parent=11 // pred_check
        %p251 = pneg %p172
      $region30: #{model_canet_forward.3} parent=11 // pred_check_branch
        %253 = sbr.rel (%p251) target = $region32
      $region31: #{model_canet_forward.3} parent=11 // pred_region
        _
      $region32: #{model_canet_forward.3} parent=11 // pred_fallthru
        _
    $region12: #{model_canet_forward.3} parent=5 // pred_fallthru
      _
    %p254 = scmp.lt.s32.totalorder %s15, 8
    // Predicated region
    $region33: #{model_canet_forward.3} parent=5 // pred_check
      %p255 = pneg %p254
    $region34: #{model_canet_forward.3} parent=5 // pred_check_branch
      %257 = sbr.rel (%p255) target = $region36
    $region35: #{model_canet_forward.3} parent=5 // pred_region
      // Predicated region
      $region37: #{model_canet_forward.3} parent=35 // pred_check
        %p258 = pneg %p35
      $region38: #{model_canet_forward.3} parent=35 // pred_check_branch
        %260 = sbr.rel (%p258) target = $region40
      $region39: #{model_canet_forward.3} parent=35 // pred_region
        %p261 = scmp.lt.s32.totalorder %s15, 7
        %s262 = scalar_select %p261, %s15, 7
        %s263 = smul.addr %s262, 2
        %s264 = smul.addr %s263, 4
        %s265 = scalar_lea.vmem %s0, %s264
      $region40: #{model_canet_forward.3} parent=35 // pred_fallthru
        _
      // Predicated region
      $region41: #{model_canet_forward.3} parent=35 // pred_check
        %p266 = pneg %p61
      $region42: #{model_canet_forward.3} parent=35 // pred_check_branch
        %268 = sbr.rel (%p266) target = $region44
      $region43: #{model_canet_forward.3} parent=35 // pred_region
        %p269 = scmp.lt.s32.totalorder %s15, 7
        %s270 = scalar_select %p269, %s15, 7
        %s271 = smul.addr %s270, 2
        %s272 = scalar_lea.vmem %s1, %s271
      $region44: #{model_canet_forward.3} parent=35 // pred_fallthru
        _
    $region36: #{model_canet_forward.3} parent=5 // pred_fallthru
      _
    %p273 = scmp.le.s32.totalorder 1, %s15
    %p274 = scmp.lt.s32.totalorder %s15, 9
    %p275 = pnand %p273, %p274
    %p276 = pneg %p275
    // Predicated region
    $region45: #{model_canet_forward.3} parent=5 // pred_check
      _
    $region46: #{model_canet_forward.3} parent=5 // pred_check_branch
      %278 = sbr.rel (%p275) target = $region48
    $region47: #{model_canet_forward.3} parent=5 // pred_region
      %s279 = ssub.s32 %s15, 1
      %p280 = scmp.lt.s32.totalorder %s20, 7
      %s281 = scalar_select %p280, %s20, 7
      %s282 = smul.addr %s281, 2
      %s283 = smul.addr %s282, 4
      %s284 = scalar_lea.vmem %s0, %s283
      %p285 = pneg %p41
      %p286 = pneg %p38
      %p287 = scmp.lt.s32.totalorder %s20, 7
      %s288 = scalar_select %p287, %s20, 7
      %s289 = smul.addr %s288, 2
      %s290 = scalar_lea.vmem %s1, %s289
      %p291 = pneg %p67
      %p292 = pneg %p64
      %p293 = pneg %p88
      %p294 = pneg %p85
      %p295 = pneg %p109
      %p296 = pneg %p106
      %p297 = pneg %p130
      %p298 = pneg %p127
      %p299 = pneg %p151
      %p300 = pneg %p148
      %p301 = pneg %p172
      %p302 = pneg %p169
      %p303 = pneg %p198
      %p304 = pneg %p195
      %p305 = scmp.lt.s32.totalorder %s20, 7
      %s306 = scalar_select %p305, %s20, 7
      %s307 = smul.addr %s306, 2
      %s308 = smul.addr %s307, 4
      %s309 = scalar_lea.vmem %s7, %s308
      %p310 = pneg %p224
      %p311 = pneg %p221
      %p312 = scmp.lt.s32.totalorder %s20, 7
      %s313 = scalar_select %p312, %s20, 7
      %s314 = smul.addr %s313, 3
      %s315 = smul.addr %s314, 8
      %s316 = scalar_lea.vmem %s8, %s315
      %p317 = scmp.lt.s32.totalorder %s20, 7
      %s318 = scalar_select %p317, %s20, 7
      %s319 = smul.addr %s318, 2
      %s320 = smul.addr %s319, 4
      %s321 = scalar_lea.vmem %s0, %s320
      %p322 = scmp.lt.s32.totalorder %s20, 7
      %s323 = scalar_select %p322, %s20, 7
      %s324 = smul.addr %s323, 2
      %s325 = scalar_lea.vmem %s1, %s324
      %p326 = scmp.lt.s32.totalorder %s20, 7
      %s327 = scalar_select %p326, %s20, 7
      %s328 = smul.addr %s327, 2
      %s329 = smul.addr %s328, 4
      %s330 = scalar_lea.vmem %s7, %s329
      %p331 = scmp.lt.s32.totalorder %s20, 7
      %s332 = scalar_select %p331, %s20, 7
      %s333 = smul.addr %s332, 3
      %s334 = smul.addr %s333, 8
      %s335 = scalar_lea.vmem %s8, %s334
      %v337 = vld [vmem:[%s321] ss:$4 sm:$0x3]
      %s338 = scalar_lea.vmem %s321, 1
      %v339 = vld [vmem:[%s338] ss:$4 sm:$0x3]
      %s340 = scalar_lea.vmem %s321, 2
      %v341 = vld [vmem:[%s340] ss:$4 sm:$0x3]
      %v342 = vmul.f32 %v337, 0.299
      %v343 = vmul.f32 %v339, 0.587
      %v344 = vadd.f32 %v342, %v343
      %v345 = vmul.f32 %v341, 0.114
      %v346 = vadd.f32 %v344, %v345
      %v347 = vsub.f32 %v341, %v346
      %v348 = vmul.f32 %v347, 0.564
      %v349 = vadd.f32 %v348, 0.5
      %v350 = vsub.f32 %v337, %v346
      %v351 = vmul.f32 %v350, 0.713
      %v352 = vadd.f32 %v351, 0.5
      %v353 = vld [vmem:[%s2] ss:$4 sm:$0x3]
      %s354 = scalar_lea.vmem %s2, 1
      %v355 = vld [vmem:[%s354] ss:$4 sm:$0x3]
      %s356 = scalar_lea.vmem %s2, 2
      %v357 = vld [vmem:[%s356] ss:$4 sm:$0x3]
      %v358 = vmul.f32 %v353, 0.299
      %v359 = vmul.f32 %v355, 0.587
      %v360 = vadd.f32 %v358, %v359
      %v361 = vmul.f32 %v357, 0.114
      %v362 = vadd.f32 %v360, %v361
      %v363 = vsub.f32 %v357, %v362
      %v364 = vmul.f32 %v363, 0.564
      %v365 = vadd.f32 %v364, 0.5
      %v366 = vsub.f32 %v353, %v362
      %v367 = vmul.f32 %v366, 0.713
      %v368 = vadd.f32 %v367, 0.5
      %v369 = vld [vmem:[%s325] sm:$0x3]
      %v370 = vmax.f32 %v369, 0.01
      %v371 = vrcp.pop %v370
      %v372 = vmul.f32 1.0, %v371
      %v373 = vmul.f32 %v337, %v372
      %v374 = vmul.f32 %v339, %v372
      %v375 = vmul.f32 %v341, %v372
      %v376 = vmul.f32 %v373, 0.299
      %v377 = vmul.f32 %v374, 0.587
      %v378 = vadd.f32 %v376, %v377
      %v379 = vmul.f32 %v375, 0.114
      %v380 = vadd.f32 %v378, %v379
      %v381 = vsub.f32 %v375, %v380
      %v382 = vmul.f32 %v381, 0.564
      %v383 = vadd.f32 %v382, 0.5
      %v384 = vsub.f32 %v373, %v380
      %v385 = vmul.f32 %v384, 0.713
      %v386 = vadd.f32 %v385, 0.5
      %387 = vst [vmem:[#allocation2] sm:$0xff] 0.0
      %388 = vst [vmem:[#allocation2 + $0x8] sm:$0xff] 0.0
      %v389 = vlaneseq
      %vm390 = vcmp.ge.s32.totalorder %v389, 0
      %vm391 = vcmp.lt.s32.totalorder %v389, 256
      %vm392 = vmand %vm390, %vm391
      %393 = vst.msk [vmem:[#allocation2] ss:$8 sm:$0x3] %vm392, %v346
      %394 = vst.msk [vmem:[#allocation2] ss:$8 sm:$0x0] %vm392, %v346
      %s395 = scalar_lea.vmem [#allocation2], 1
      %396 = vst.msk [vmem:[%s395] ss:$8 sm:$0x3] %vm392, %v349
      %397 = vst.msk [vmem:[%s395] ss:$8 sm:$0x0] %vm392, %v349
      %s398 = scalar_lea.vmem [#allocation2], 2
      %399 = vst.msk [vmem:[%s398] ss:$8 sm:$0x3] %vm392, %v352
      %400 = vst.msk [vmem:[%s398] ss:$8 sm:$0x0] %vm392, %v352
      %s401 = scalar_lea.vmem [#allocation2], 3
      %402 = vst.msk [vmem:[%s401] ss:$8 sm:$0x3] %vm392, %v362
      %403 = vst.msk [vmem:[%s401] ss:$8 sm:$0x0] %vm392, %v362
      %s404 = scalar_lea.vmem [#allocation2], 4
      %405 = vst.msk [vmem:[%s404] ss:$8 sm:$0x3] %vm392, %v383
      %406 = vst.msk [vmem:[%s404] ss:$8 sm:$0x0] %vm392, %v383
      %s407 = scalar_lea.vmem [#allocation2], 5
      %408 = vst.msk [vmem:[%s407] ss:$8 sm:$0x3] %vm392, %v386
      %409 = vst.msk [vmem:[%s407] ss:$8 sm:$0x0] %vm392, %v386
      %v410 = vlaneseq
      %v411 = vand.u32 %v410, 127
      %v412 = vadd.s32 %v411, 128
      %v413 = vand.u32 %v411, 15
      %v414 = vand.u32 %v412, 15
      %vm415 = vcmp.ge.s32.totalorder %v411, 16
      %vm416 = vcmp.ge.s32.totalorder %v412, 16
      %v417 = vsel %vm415, 1, 0
      %v418 = vsel %vm416, 1, 0
      %v419 = vcvt.s32.f32 %v417
      %v420 = vcvt.s32.f32 %v418
      %vm421 = vcmp.lt.s32.totalorder %v411, 240
      %vm422 = vcmp.lt.s32.totalorder %v412, 240
      %v423 = vsel %vm421, 1, 0
      %v424 = vsel %vm422, 1, 0
      %v425 = vcvt.s32.f32 %v423
      %v426 = vcvt.s32.f32 %v424
      %vm427 = vcmp.ne.s32.totalorder %v413, 0
      %vm428 = vcmp.ne.s32.totalorder %v414, 0
      %v429 = vsel %vm427, 1, 0
      %v430 = vsel %vm428, 1, 0
      %v431 = vcvt.s32.f32 %v429
      %v432 = vcvt.s32.f32 %v430
      %vm433 = vcmp.ne.s32.totalorder %v413, 15
      %vm434 = vcmp.ne.s32.totalorder %v414, 15
      %v435 = vsel %vm433, 1, 0
      %v436 = vsel %vm434, 1, 0
      %v437 = vcvt.s32.f32 %v435
      %v438 = vcvt.s32.f32 %v436
      %v439 = vld [vmem:[#allocation2] sm:$0xff]
      %v440 = vld [vmem:[#allocation2 + $0x8] sm:$0xff]
      %441 = vrot.lane.b32.xlu0 %v439, 16
      %v442 = vpop.permute.xlu0 %441
      %443 = vrot.lane.b32.xlu0 %v440, 16
      %v444 = vpop.permute.xlu0 %443
      %vm445 = vcmp.lt.s32.totalorder %v411, 16
      %v446 = vsel %vm445, %v442, %v444
      %v447 = vsel %vm445, %v444, %v442
      %v448 = vmul.f32 %v447, %v419
      %v449 = vmul.f32 %v446, %v420
      %450 = vst [vmem:[#allocation3 + $0x30] sm:$0xff] %v448
      %451 = vst [vmem:[#allocation3 + $0x38] sm:$0xff] %v449
      %452 = vst [vmem:[#allocation3 + $0x40] sm:$0xff] %v439
      %453 = vst [vmem:[#allocation3 + $0x48] sm:$0xff] %v440
      %454 = vrot.lane.b32.xlu0 %v439, 112
      %v455 = vpop.permute.xlu0 %454
      %456 = vrot.lane.b32.xlu0 %v440, 112
      %v457 = vpop.permute.xlu0 %456
      %vm458 = vcmp.lt.s32.totalorder %v411, 112
      %v459 = vsel %vm458, %v455, %v457
      %v460 = vsel %vm458, %v457, %v455
      %v461 = vmul.f32 %v459, %v425
      %v462 = vmul.f32 %v460, %v426
      %463 = vst [vmem:[#allocation3 + $0x50] sm:$0xff] %v461
      %464 = vst [vmem:[#allocation3 + $0x58] sm:$0xff] %v462
      %v465 = vld [vmem:[#allocation3 + $0x30] sm:$0xff]
      %v466 = vld [vmem:[#allocation3 + $0x38] sm:$0xff]
      %v467 = vld [vmem:[#allocation3 + $0x40] sm:$0xff]
      %v468 = vld [vmem:[#allocation3 + $0x48] sm:$0xff]
      %v469 = vld [vmem:[#allocation3 + $0x50] sm:$0xff]
      %v470 = vld [vmem:[#allocation3 + $0x58] sm:$0xff]
      %471 = vrot.lane.b32.xlu0 %v465, 1
      %v472 = vpop.permute.xlu0 %471
      %473 = vrot.lane.b32.xlu0 %v467, 1
      %v474 = vpop.permute.xlu0 %473
      %475 = vrot.lane.b32.xlu0 %v469, 1
      %v476 = vpop.permute.xlu0 %475
      %477 = vrot.lane.b32.xlu0 %v466, 1
      %v478 = vpop.permute.xlu0 %477
      %479 = vrot.lane.b32.xlu0 %v468, 1
      %v480 = vpop.permute.xlu0 %479
      %481 = vrot.lane.b32.xlu0 %v470, 1
      %v482 = vpop.permute.xlu0 %481
      %vm483 = vcmp.lt.s32.totalorder %v411, 1
      %v484 = vsel %vm483, %v472, %v478
      %v485 = vsel %vm483, %v474, %v480
      %v486 = vsel %vm483, %v476, %v482
      %v487 = vsel %vm483, %v478, %v472
      %v488 = vsel %vm483, %v480, %v474
      %v489 = vsel %vm483, %v482, %v476
      %v490 = vmul.f32 %v487, %v431
      %v491 = vmul.f32 %v484, %v432
      %v492 = vmul.f32 %v488, %v431
      %v493 = vmul.f32 %v485, %v432
      %v494 = vmul.f32 %v489, %v431
      %v495 = vmul.f32 %v486, %v432
      %496 = vst [vmem:[#allocation3] sm:$0xff] %v490
      %497 = vst [vmem:[#allocation3 + $0x8] sm:$0xff] %v491
      %498 = vst [vmem:[#allocation3 + $0x10] sm:$0xff] %v492
      %499 = vst [vmem:[#allocation3 + $0x18] sm:$0xff] %v493
      %500 = vst [vmem:[#allocation3 + $0x20] sm:$0xff] %v494
      %501 = vst [vmem:[#allocation3 + $0x28] sm:$0xff] %v495
      %502 = vrot.lane.b32.xlu0 %v465, 127
      %v503 = vpop.permute.xlu0 %502
      %504 = vrot.lane.b32.xlu0 %v467, 127
      %v505 = vpop.permute.xlu0 %504
      %506 = vrot.lane.b32.xlu0 %v469, 127
      %v507 = vpop.permute.xlu0 %506
      %508 = vrot.lane.b32.xlu0 %v466, 127
      %v509 = vpop.permute.xlu0 %508
      %510 = vrot.lane.b32.xlu0 %v468, 127
      %v511 = vpop.permute.xlu0 %510
      %512 = vrot.lane.b32.xlu0 %v470, 127
      %v513 = vpop.permute.xlu0 %512
      %vm514 = vcmp.lt.s32.totalorder %v411, 127
      %v515 = vsel %vm514, %v503, %v509
      %v516 = vsel %vm514, %v505, %v511
      %v517 = vsel %vm514, %v507, %v513
      %v518 = vsel %vm514, %v509, %v503
      %v519 = vsel %vm514, %v511, %v505
      %v520 = vsel %vm514, %v513, %v507
      %v521 = vmul.f32 %v515, %v437
      %v522 = vmul.f32 %v518, %v438
      %v523 = vmul.f32 %v516, %v437
      %v524 = vmul.f32 %v519, %v438
      %v525 = vmul.f32 %v517, %v437
      %v526 = vmul.f32 %v520, %v438
      %527 = vst [vmem:[#allocation3 + $0x60] sm:$0xff] %v521
      %528 = vst [vmem:[#allocation3 + $0x68] sm:$0xff] %v522
      %529 = vst [vmem:[#allocation3 + $0x70] sm:$0xff] %v523
      %530 = vst [vmem:[#allocation3 + $0x78] sm:$0xff] %v524
      %531 = vst [vmem:[#allocation3 + $0x80] sm:$0xff] %v525
      %532 = vst [vmem:[#allocation3 + $0x88] sm:$0xff] %v526
      %v533 = vld [vmem:[#allocation3] sm:$0xff]
      %v534 = vld [vmem:[#allocation3 + $0x8] sm:$0xff]
      %v535 = vld [vmem:[#allocation3 + $0x10] sm:$0xff]
      %v536 = vld [vmem:[#allocation3 + $0x18] sm:$0xff]
      %v537 = vld [vmem:[#allocation3 + $0x20] sm:$0xff]
      %v538 = vld [vmem:[#allocation3 + $0x28] sm:$0xff]
      %v539 = vld [vmem:[#allocation3 + $0x30] sm:$0xff]
      %v540 = vld [vmem:[#allocation3 + $0x38] sm:$0xff]
      %v541 = vld [vmem:[#allocation3 + $0x40] sm:$0xff]
      %v542 = vld [vmem:[#allocation3 + $0x48] sm:$0xff]
      %v543 = vld [vmem:[#allocation3 + $0x50] sm:$0xff]
      %v544 = vld [vmem:[#allocation3 + $0x58] sm:$0xff]
      %v545 = vld [vmem:[#allocation3 + $0x60] sm:$0xff]
      %v546 = vld [vmem:[#allocation3 + $0x68] sm:$0xff]
      %v547 = vld [vmem:[#allocation3 + $0x70] sm:$0xff]
      %v548 = vld [vmem:[#allocation3 + $0x78] sm:$0xff]
      %v549 = vld [vmem:[#allocation3 + $0x80] sm:$0xff]
      %v550 = vld [vmem:[#allocation3 + $0x88] sm:$0xff]
      %v551 = vpack.c.bf16 %v535, %v533
      %v552 = vpack.c.bf16 %v536, %v534
      %v553 = vpack.c.bf16 %v539, %v537
      %v554 = vpack.c.bf16 %v540, %v538
      %v555 = vpack.c.bf16 %v543, %v541
      %v556 = vpack.c.bf16 %v544, %v542
      %v557 = vpack.c.bf16 %v547, %v545
      %v558 = vpack.c.bf16 %v548, %v546
      %v559 = vpack.c.bf16 %v549, %v549
      %v560 = vpack.c.bf16 %v550, %v550
      %v561 = vld [vmem:[%s3] sm:$0xf]
      %v562 = vld [vmem:[%s3 + $0x4] sm:$0xf]
      %v563 = vld [vmem:[%s4] sm:$0xff]
      %v564 = vld [vmem:[%s4 + $0x8] sm:$0xff]
      %566 = vset.pattern.permute.xlu0 0
      %567 = vperm.xlu0 %566, %v563
      %v568 = vpop.permute.xlu0 %567
      %571 = vset.pattern.permute.xlu0 0
      %572 = vperm.xlu0 %571, %v564
      %v573 = vpop.permute.xlu0 %572
      %v577 = vunpack.c.l.b16 %v561
      %v578 = vunpack.c.l.b16 %v562
      %v579 = vpack.c.b16 %v578, %v577
      %vm580 = vcmask 588800
      %v582 = vsel %vm580, %v579, 0
      %vm584 = vcmask 1043456
      %v586 = vsel %vm584, %v559, 0
      %v589 = vsel %vm584, %v560, 0
      %591 = vmatprep.subr.bf16.mxu0 %v552
      %592 = vmatpush1.bf16.msra.mxu0 %v551
      %593 = vmatprep.subr.bf16.mxu0 %v554
      %594 = vmatpush1.bf16.msra.mxu0 %v553
      %595 = vmatprep.subr.bf16.mxu0 %v556
      %596 = vmatpush1.bf16.msra.mxu0 %v555
      %597 = vmatprep.subr.bf16.mxu0 %v558
      %598 = vmatpush1.bf16.msra.mxu0 %v557
      %599 = vmatprep.subr.bf16.mxu0 %v589
      %600 = vmatpush1.bf16.msra.mxu0 %v586
      %601 = vmatprep.subr.bf16.mxu0 0
      %602 = vmatpush1.bf16.msra.mxu0 0
      %603 = vmatprep.subr.bf16.mxu0 0
      %604 = vmatpush1.bf16.msra.mxu0 0
      %605 = vmatprep.subr.bf16.mxu0 0
      %606 = vmatpush1.bf16.msra.mxu0 0
      %607 = vmatprep.subr.bf16.mxu0 0
      %608 = vmatpush1.bf16.msra.mxu0 0
      %609 = vmatprep.subr.bf16.mxu0 0
      %610 = vmatpush1.bf16.msra.mxu0 0
      %611 = vmatprep.subr.bf16.mxu0 0
      %612 = vmatpush1.bf16.msra.mxu0 0
      %613 = vmatprep.subr.bf16.mxu0 0
      %614 = vmatpush1.bf16.msra.mxu0 0
      %615 = vmatprep.subr.bf16.mxu0 0
      %616 = vmatpush1.bf16.msra.mxu0 0
      %617 = vmatprep.subr.bf16.mxu0 0
      %618 = vmatpush1.bf16.msra.mxu0 0
      %619 = vmatprep.subr.bf16.mxu0 0
      %620 = vmatpush1.bf16.msra.mxu0 0
      %621 = vmatprep.subr.bf16.mxu0 0
      %622 = vmatpush1.bf16.msra.mxu0 0
      %623 = vmatprep.mubr.bf16.mxu0 0
      %624 = vmatmul.mubr.bf16.gmra.mrb[0].mxu0 %v582
      %v625 = vpop.f32.mrb[0].mxu0
      %v626 = vadd.f32 %v568, %v625
      %v627 = vpop.f32.mrb[0].mxu0
      %v628 = vadd.f32 %v568, %v627
      %v629 = vpop.f32.mrb[0].mxu0
      %v630 = vadd.f32 %v573, %v629
      %v631 = vpop.f32.mrb[0].mxu0
      %v632 = vadd.f32 %v573, %v631
      %633 = vdwg.mxu0
      %v634 = vmax.f32 %v626, 0.0
      %v635 = vmax.f32 %v628, 0.0
      %v636 = vmax.f32 %v630, 0.0
      %v637 = vmax.f32 %v632, 0.0
      %638 = vrot.lane.b32.xlu0 %v634, 16
      %v639 = vpop.permute.xlu0 %638
      %640 = vrot.lane.b32.xlu0 %v636, 16
      %v641 = vpop.permute.xlu0 %640
      %642 = vrot.lane.b32.xlu0 %v635, 16
      %v643 = vpop.permute.xlu0 %642
      %644 = vrot.lane.b32.xlu0 %v637, 16
      %v645 = vpop.permute.xlu0 %644
      %v646 = vsel %vm445, %v639, %v643
      %v647 = vsel %vm445, %v641, %v645
      %v648 = vsel %vm445, %v643, %v639
      %v649 = vsel %vm445, %v645, %v641
      %v650 = vmul.f32 %v648, %v419
      %v651 = vmul.f32 %v646, %v420
      %v652 = vmul.f32 %v649, %v419
      %v653 = vmul.f32 %v647, %v420
      %654 = vst [vmem:[#allocation3 + $0x60] sm:$0xff] %v650
      %655 = vst [vmem:[#allocation3 + $0x68] sm:$0xff] %v651
      %656 = vst [vmem:[#allocation3 + $0x70] sm:$0xff] %v652
      %657 = vst [vmem:[#allocation3 + $0x78] sm:$0xff] %v653
      %658 = vst [vmem:[#allocation3 + $0x80] sm:$0xff] %v634
      %659 = vst [vmem:[#allocation3 + $0x88] sm:$0xff] %v635
      %660 = vst [vmem:[#allocation3 + $0x90] sm:$0xff] %v636
      %661 = vst [vmem:[#allocation3 + $0x98] sm:$0xff] %v637
      %662 = vrot.lane.b32.xlu0 %v634, 112
      %v663 = vpop.permute.xlu0 %662
      %664 = vrot.lane.b32.xlu0 %v636, 112
      %v665 = vpop.permute.xlu0 %664
      %666 = vrot.lane.b32.xlu0 %v635, 112
      %v667 = vpop.permute.xlu0 %666
      %668 = vrot.lane.b32.xlu0 %v637, 112
      %v669 = vpop.permute.xlu0 %668
      %v670 = vsel %vm458, %v663, %v667
      %v671 = vsel %vm458, %v665, %v669
      %v672 = vsel %vm458, %v667, %v663
      %v673 = vsel %vm458, %v669, %v665
      %v674 = vmul.f32 %v670, %v425
      %v675 = vmul.f32 %v672, %v426
      %v676 = vmul.f32 %v671, %v425
      %v677 = vmul.f32 %v673, %v426
      %678 = vst [vmem:[#allocation3 + $0xa0] sm:$0xff] %v674
      %679 = vst [vmem:[#allocation3 + $0xa8] sm:$0xff] %v675
      %680 = vst [vmem:[#allocation3 + $0xb0] sm:$0xff] %v676
      %681 = vst [vmem:[#allocation3 + $0xb8] sm:$0xff] %v677
      %v682 = vld [vmem:[#allocation3 + $0x60] sm:$0xff]
      %v683 = vld [vmem:[#allocation3 + $0x68] sm:$0xff]
      %v684 = vld [vmem:[#allocation3 + $0x70] sm:$0xff]
      %v685 = vld [vmem:[#allocation3 + $0x78] sm:$0xff]
      %v686 = vld [vmem:[#allocation3 + $0x80] sm:$0xff]
      %v687 = vld [vmem:[#allocation3 + $0x88] sm:$0xff]
      %v688 = vld [vmem:[#allocation3 + $0x90] sm:$0xff]
      %v689 = vld [vmem:[#allocation3 + $0x98] sm:$0xff]
      %v690 = vld [vmem:[#allocation3 + $0xa0] sm:$0xff]
      %v691 = vld [vmem:[#allocation3 + $0xa8] sm:$0xff]
      %v692 = vld [vmem:[#allocation3 + $0xb0] sm:$0xff]
      %v693 = vld [vmem:[#allocation3 + $0xb8] sm:$0xff]
      %694 = vrot.lane.b32.xlu0 %v682, 1
      %v695 = vpop.permute.xlu0 %694
      %696 = vrot.lane.b32.xlu0 %v684, 1
      %v697 = vpop.permute.xlu0 %696
      %698 = vrot.lane.b32.xlu0 %v686, 1
      %v699 = vpop.permute.xlu0 %698
      %700 = vrot.lane.b32.xlu0 %v688, 1
      %v701 = vpop.permute.xlu0 %700
      %702 = vrot.lane.b32.xlu0 %v690, 1
      %v703 = vpop.permute.xlu0 %702
      %704 = vrot.lane.b32.xlu0 %v692, 1
      %v705 = vpop.permute.xlu0 %704
      %706 = vrot.lane.b32.xlu0 %v683, 1
      %v707 = vpop.permute.xlu0 %706
      %708 = vrot.lane.b32.xlu0 %v685, 1
      %v709 = vpop.permute.xlu0 %708
      %710 = vrot.lane.b32.xlu0 %v687, 1
      %v711 = vpop.permute.xlu0 %710
      %712 = vrot.lane.b32.xlu0 %v689, 1
      %v713 = vpop.permute.xlu0 %712
      %714 = vrot.lane.b32.xlu0 %v691, 1
      %v715 = vpop.permute.xlu0 %714
      %716 = vrot.lane.b32.xlu0 %v693, 1
      %v717 = vpop.permute.xlu0 %716
      %v718 = vsel %vm483, %v695, %v707
      %v719 = vsel %vm483, %v697, %v709
      %v720 = vsel %vm483, %v699, %v711
      %v721 = vsel %vm483, %v701, %v713
      %v722 = vsel %vm483, %v703, %v715
      %v723 = vsel %vm483, %v705, %v717
      %v724 = vsel %vm483, %v707, %v695
      %v725 = vsel %vm483, %v709, %v697
      %v726 = vsel %vm483, %v711, %v699
      %v727 = vsel %vm483, %v713, %v701
      %v728 = vsel %vm483, %v715, %v703
      %v729 = vsel %vm483, %v717, %v705
      %v730 = vmul.f32 %v724, %v431
      %v731 = vmul.f32 %v718, %v432
      %v732 = vmul.f32 %v725, %v431
      %v733 = vmul.f32 %v719, %v432
      %v734 = vmul.f32 %v726, %v431
      %v735 = vmul.f32 %v720, %v432
      %v736 = vmul.f32 %v727, %v431
      %v737 = vmul.f32 %v721, %v432
      %v738 = vmul.f32 %v728, %v431
      %v739 = vmul.f32 %v722, %v432
      %v740 = vmul.f32 %v729, %v431
      %v741 = vmul.f32 %v723, %v432
      %742 = vst [vmem:[#allocation3] sm:$0xff] %v730
      %743 = vst [vmem:[#allocation3 + $0x8] sm:$0xff] %v731
      %744 = vst [vmem:[#allocation3 + $0x10] sm:$0xff] %v732
      %745 = vst [vmem:[#allocation3 + $0x18] sm:$0xff] %v733
      %746 = vst [vmem:[#allocation3 + $0x20] sm:$0xff] %v734
      %747 = vst [vmem:[#allocation3 + $0x28] sm:$0xff] %v735
      %748 = vst [vmem:[#allocation3 + $0x30] sm:$0xff] %v736
      %749 = vst [vmem:[#allocation3 + $0x38] sm:$0xff] %v737
      %750 = vst [vmem:[#allocation3 + $0x40] sm:$0xff] %v738
      %751 = vst [vmem:[#allocation3 + $0x48] sm:$0xff] %v739
      %752 = vst [vmem:[#allocation3 + $0x50] sm:$0xff] %v740
      %753 = vst [vmem:[#allocation3 + $0x58] sm:$0xff] %v741
      %754 = vrot.lane.b32.xlu0 %v682, 127
      %v755 = vpop.permute.xlu0 %754
      %756 = vrot.lane.b32.xlu0 %v684, 127
      %v757 = vpop.permute.xlu0 %756
      %758 = vrot.lane.b32.xlu0 %v686, 127
      %v759 = vpop.permute.xlu0 %758
      %760 = vrot.lane.b32.xlu0 %v688, 127
      %v761 = vpop.permute.xlu0 %760
      %762 = vrot.lane.b32.xlu0 %v690, 127
      %v763 = vpop.permute.xlu0 %762
      %764 = vrot.lane.b32.xlu0 %v692, 127
      %v765 = vpop.permute.xlu0 %764
      %766 = vrot.lane.b32.xlu0 %v683, 127
      %v767 = vpop.permute.xlu0 %766
      %768 = vrot.lane.b32.xlu0 %v685, 127
      %v769 = vpop.permute.xlu0 %768
      %770 = vrot.lane.b32.xlu0 %v687, 127
      %v771 = vpop.permute.xlu0 %770
      %772 = vrot.lane.b32.xlu0 %v689, 127
      %v773 = vpop.permute.xlu0 %772
      %774 = vrot.lane.b32.xlu0 %v691, 127
      %v775 = vpop.permute.xlu0 %774
      %776 = vrot.lane.b32.xlu0 %v693, 127
      %v777 = vpop.permute.xlu0 %776
      %v778 = vsel %vm514, %v755, %v767
      %v779 = vsel %vm514, %v757, %v769
      %v780 = vsel %vm514, %v759, %v771
      %v781 = vsel %vm514, %v761, %v773
      %v782 = vsel %vm514, %v763, %v775
      %v783 = vsel %vm514, %v765, %v777
      %v784 = vsel %vm514, %v767, %v755
      %v785 = vsel %vm514, %v769, %v757
      %v786 = vsel %vm514, %v771, %v759
      %v787 = vsel %vm514, %v773, %v761
      %v788 = vsel %vm514, %v775, %v763
      %v789 = vsel %vm514, %v777, %v765
      %v790 = vmul.f32 %v778, %v437
      %v791 = vmul.f32 %v784, %v438
      %v792 = vmul.f32 %v779, %v437
      %v793 = vmul.f32 %v785, %v438
      %v794 = vmul.f32 %v780, %v437
      %v795 = vmul.f32 %v786, %v438
      %v796 = vmul.f32 %v781, %v437
      %v797 = vmul.f32 %v787, %v438
      %v798 = vmul.f32 %v782, %v437
      %v799 = vmul.f32 %v788, %v438
      %v800 = vmul.f32 %v783, %v437
      %v801 = vmul.f32 %v789, %v438
      %802 = vst [vmem:[#allocation3 + $0xc0] sm:$0xff] %v790
      %803 = vst [vmem:[#allocation3 + $0xc8] sm:$0xff] %v791
      %804 = vst [vmem:[#allocation3 + $0xd0] sm:$0xff] %v792
      %805 = vst [vmem:[#allocation3 + $0xd8] sm:$0xff] %v793
      %806 = vst [vmem:[#allocation3 + $0xe0] sm:$0xff] %v794
      %807 = vst [vmem:[#allocation3 + $0xe8] sm:$0xff] %v795
      %808 = vst [vmem:[#allocation3 + $0xf0] sm:$0xff] %v796
      %809 = vst [vmem:[#allocation3 + $0xf8] sm:$0xff] %v797
      %810 = vst [vmem:[#allocation3 + $0x100] sm:$0xff] %v798
      %811 = vst [vmem:[#allocation3 + $0x108] sm:$0xff] %v799
      %812 = vst [vmem:[#allocation3 + $0x110] sm:$0xff] %v800
      %813 = vst [vmem:[#allocation3 + $0x118] sm:$0xff] %v801
      %v814 = vld [vmem:[#allocation3] sm:$0xff]
      %v815 = vld [vmem:[#allocation3 + $0x8] sm:$0xff]
      %v816 = vld [vmem:[#allocation3 + $0x10] sm:$0xff]
      %v817 = vld [vmem:[#allocation3 + $0x18] sm:$0xff]
      %v818 = vld [vmem:[#allocation3 + $0x20] sm:$0xff]
      %v819 = vld [vmem:[#allocation3 + $0x28] sm:$0xff]
      %v820 = vld [vmem:[#allocation3 + $0x30] sm:$0xff]
      %v821 = vld [vmem:[#allocation3 + $0x38] sm:$0xff]
      %v822 = vld [vmem:[#allocation3 + $0x40] sm:$0xff]
      %v823 = vld [vmem:[#allocation3 + $0x48] sm:$0xff]
      %v824 = vld [vmem:[#allocation3 + $0x50] sm:$0xff]
      %v825 = vld [vmem:[#allocation3 + $0x58] sm:$0xff]
      %v826 = vld [vmem:[#allocation3 + $0x60] sm:$0xff]
      %v827 = vld [vmem:[#allocation3 + $0x68] sm:$0xff]
      %v828 = vld [vmem:[#allocation3 + $0x70] sm:$0xff]
      %v829 = vld [vmem:[#allocation3 + $0x78] sm:$0xff]
      %v830 = vld [vmem:[#allocation3 + $0x80] sm:$0xff]
      %v831 = vld [vmem:[#allocation3 + $0x88] sm:$0xff]
      %v832 = vld [vmem:[#allocation3 + $0x90] sm:$0xff]
      %v833 = vld [vmem:[#allocation3 + $0x98] sm:$0xff]
      %v834 = vld [vmem:[#allocation3 + $0xa0] sm:$0xff]
      %v835 = vld [vmem:[#allocation3 + $0xa8] sm:$0xff]
      %v836 = vld [vmem:[#allocation3 + $0xb0] sm:$0xff]
      %v837 = vld [vmem:[#allocation3 + $0xb8] sm:$0xff]
      %v838 = vld [vmem:[#allocation3 + $0xc0] sm:$0xff]
      %v839 = vld [vmem:[#allocation3 + $0xc8] sm:$0xff]
      %v840 = vld [vmem:[#allocation3 + $0xd0] sm:$0xff]
      %v841 = vld [vmem:[#allocation3 + $0xd8] sm:$0xff]
      %v842 = vld [vmem:[#allocation3 + $0xe0] sm:$0xff]
      %v843 = vld [vmem:[#allocation3 + $0xe8] sm:$0xff]
      %v844 = vld [vmem:[#allocation3 + $0xf0] sm:$0xff]
      %v845 = vld [vmem:[#allocation3 + $0xf8] sm:$0xff]
      %v846 = vld [vmem:[#allocation3 + $0x100] sm:$0xff]
      %v847 = vld [vmem:[#allocation3 + $0x108] sm:$0xff]
      %v848 = vld [vmem:[#allocation3 + $0x110] sm:$0xff]
      %v849 = vld [vmem:[#allocation3 + $0x118] sm:$0xff]
      %v850 = vpack.c.bf16 %v816, %v814
      %v851 = vpack.c.bf16 %v817, %v815
      %v852 = vpack.c.bf16 %v820, %v818
      %v853 = vpack.c.bf16 %v821, %v819
      %v854 = vpack.c.bf16 %v824, %v822
      %v855 = vpack.c.bf16 %v825, %v823
      %v856 = vpack.c.bf16 %v828, %v826
      %v857 = vpack.c.bf16 %v829, %v827
      %v858 = vpack.c.bf16 %v832, %v830
      %v859 = vpack.c.bf16 %v833, %v831
      %v860 = vpack.c.bf16 %v836, %v834
      %v861 = vpack.c.bf16 %v837, %v835
      %v862 = vpack.c.bf16 %v840, %v838
      %v863 = vpack.c.bf16 %v841, %v839
      %v864 = vpack.c.bf16 %v844, %v842
      %v865 = vpack.c.bf16 %v845, %v843
      %v866 = vpack.c.bf16 %v848, %v846
      %v867 = vpack.c.bf16 %v849, %v847
      %v868 = vld [vmem:[%s5] sm:$0x3]
      %v869 = vld [vmem:[%s6] sm:$0x3]
      %871 = vset.pattern.permute.xlu0 0
      %872 = vperm.xlu0 %871, %v869
      %v873 = vpop.permute.xlu0 %872
      %v877 = vunpack.c.l.s4 1966171168
      %v878 = vunpack.c.0.s8 %v877
      %v879 = vlaneseq
      %v880 = vshrl.u32 %v879, 7
      %v881 = vsub.s32 %v878, %v880
      %v882 = vrot.slane %v868, %v881
      %v883 = vcombine.high %v882, %v882
      %v885 = vunpack.c.l.s4 1966171168
      %v886 = vunpack.c.0.s8 %v885
      %v887 = vlaneseq
      %v888 = vshrl.u32 %v887, 7
      %v889 = vsub.s32 %v886, %v888
      %v890 = vrot.slane %v882, %v889
      %v892 = vunpack.c.l.s4 1966171168
      %v893 = vunpack.c.0.s8 %v892
      %v894 = vlaneseq
      %v895 = vshrl.u32 %v894, 7
      %v896 = vsub.s32 %v893, %v895
      %v897 = vrot.slane %v883, %v896
      %vm899 = vcmask 130048
      %v901 = vsel %vm899, %v897, 0
      %903 = vmatprep.subr.bf16.mxu0 %v851
      %904 = vmatpush1.bf16.msra.mxu0 %v850
      %905 = vmatprep.subr.bf16.mxu0 %v853
      %906 = vmatpush1.bf16.msra.mxu0 %v852
      %907 = vmatprep.subr.bf16.mxu0 %v855
      %908 = vmatpush1.bf16.msra.mxu0 %v854
      %909 = vmatprep.subr.bf16.mxu0 %v857
      %910 = vmatpush1.bf16.msra.mxu0 %v856
      %911 = vmatprep.subr.bf16.mxu0 %v859
      %912 = vmatpush1.bf16.msra.mxu0 %v858
      %913 = vmatprep.subr.bf16.mxu0 %v861
      %914 = vmatpush1.bf16.msra.mxu0 %v860
      %915 = vmatprep.subr.bf16.mxu0 %v863
      %916 = vmatpush1.bf16.msra.mxu0 %v862
      %917 = vmatprep.subr.bf16.mxu0 %v865
      %918 = vmatpush1.bf16.msra.mxu0 %v864
      %919 = vmatprep.subr.bf16.mxu0 %v867
      %920 = vmatpush1.bf16.msra.mxu0 %v866
      %921 = vmatprep.subr.bf16.mxu0 0
      %922 = vmatpush1.bf16.msra.mxu0 0
      %923 = vmatprep.subr.bf16.mxu0 0
      %924 = vmatpush1.bf16.msra.mxu0 0
      %925 = vmatprep.subr.bf16.mxu0 0
      %926 = vmatpush1.bf16.msra.mxu0 0
      %927 = vmatprep.subr.bf16.mxu0 0
      %928 = vmatpush1.bf16.msra.mxu0 0
      %929 = vmatprep.subr.bf16.mxu0 0
      %930 = vmatpush1.bf16.msra.mxu0 0
      %931 = vmatprep.subr.bf16.mxu0 0
      %932 = vmatpush1.bf16.msra.mxu0 0
      %933 = vmatprep.subr.bf16.mxu0 0
      %934 = vmatpush1.bf16.msra.mxu0 0
      %935 = vmatprep.mubr.bf16.mxu0 %v901
      %936 = vmatmul.mubr.bf16.gmra.mrb[0].mxu0 %v890
      %v937 = vpop.f32.mrb[0].mxu0
      %v938 = vadd.f32 %v873, %v937
      %v939 = vpop.f32.mrb[0].mxu0
      %v940 = vadd.f32 %v873, %v939
      %v941 = vpop.f32.mrb[0].mxu0
      %v942 = vpop.f32.mrb[0].mxu0
      %943 = vdwg.mxu0
      %v944 = vxor.u32 %v938, 2147483648
      %v945 = vxor.u32 %v940, 2147483648
      %v946 = vmul.f32 %v944, 1.442695
      %v947 = vpow.pop %v946
      %v948 = vmul.f32 %v945, 1.442695
      %v949 = vpow.pop %v948
      %v950 = vadd.f32 %v947, 1.0
      %v951 = vadd.f32 %v949, 1.0
      %v952 = vrcp.pop %v950
      %v953 = vmul.f32 1.0, %v952
      %v954 = vrcp.pop %v951
      %v955 = vmul.f32 1.0, %v954
      %v956 = vsub.f32 %v953, 0.5
      %v957 = vsub.f32 %v955, 0.5
      %v958 = vmul.f32 %v956, 1.403
      %v959 = vmul.f32 %v957, 1.403
      %v962 = vcombine.low %v958, %v959
      %v964 = vunpack.c.l.s4 1966171168
      %v965 = vunpack.c.0.s8 %v964
      %v966 = vlaneseq
      %v967 = vshrl.u32 %v966, 7
      %v968 = vsub.s32 %v965, %v967
      %v969 = vrot.slane %v962, %v968
      %v970 = vcombine.high %v969, %v969
      %v972 = vunpack.c.l.s4 1966171168
      %v973 = vunpack.c.0.s8 %v972
      %v974 = vlaneseq
      %v975 = vshrl.u32 %v974, 7
      %v976 = vsub.s32 %v973, %v975
      %v977 = vrot.slane %v970, %v976
      %v979 = vadd.f32 %v362, %v977
      %v980 = vmul.f32 %v956, 0.714
      %v981 = vmul.f32 %v957, 0.714
      %v984 = vcombine.low %v980, %v981
      %v986 = vunpack.c.l.s4 1966171168
      %v987 = vunpack.c.0.s8 %v986
      %v988 = vlaneseq
      %v989 = vshrl.u32 %v988, 7
      %v990 = vsub.s32 %v987, %v989
      %v991 = vrot.slane %v984, %v990
      %v992 = vcombine.high %v991, %v991
      %v994 = vunpack.c.l.s4 1966171168
      %v995 = vunpack.c.0.s8 %v994
      %v996 = vlaneseq
      %v997 = vshrl.u32 %v996, 7
      %v998 = vsub.s32 %v995, %v997
      %v999 = vrot.slane %v992, %v998
      %v1001 = vsub.f32 %v362, %v999
      %v1002 = vmul.f32 %v956, 0.344
      %v1003 = vmul.f32 %v957, 0.344
      %v1006 = vcombine.low %v1002, %v1003
      %v1008 = vunpack.c.l.s4 1966171168
      %v1009 = vunpack.c.0.s8 %v1008
      %v1010 = vlaneseq
      %v1011 = vshrl.u32 %v1010, 7
      %v1012 = vsub.s32 %v1009, %v1011
      %v1013 = vrot.slane %v1006, %v1012
      %v1015 = vunpack.c.l.s4 1966171168
      %v1016 = vunpack.c.0.s8 %v1015
      %v1017 = vlaneseq
      %v1018 = vshrl.u32 %v1017, 7
      %v1019 = vsub.s32 %v1016, %v1018
      %v1020 = vrot.slane %v1013, %v1019
      %v1022 = vsub.f32 %v1001, %v1020
      %v1023 = vmul.f32 %v956, 1.773
      %v1024 = vmul.f32 %v957, 1.773
      %v1027 = vcombine.low %v1023, %v1024
      %v1029 = vunpack.c.l.s4 1966171168
      %v1030 = vunpack.c.0.s8 %v1029
      %v1031 = vlaneseq
      %v1032 = vshrl.u32 %v1031, 7
      %v1033 = vsub.s32 %v1030, %v1032
      %v1034 = vrot.slane %v1027, %v1033
      %v1036 = vunpack.c.l.s4 1966171168
      %v1037 = vunpack.c.0.s8 %v1036
      %v1038 = vlaneseq
      %v1039 = vshrl.u32 %v1038, 7
      %v1040 = vsub.s32 %v1037, %v1039
      %v1041 = vrot.slane %v1034, %v1040
      %v1043 = vadd.f32 %v362, %v1041
      %1044 = vst.msk [vmem:[%s330] ss:$4 sm:$0x3] %vm392, %v979
      %s1045 = scalar_lea.vmem %s330, 1
      %1046 = vst.msk [vmem:[%s1045] ss:$4 sm:$0x3] %vm392, %v1022
      %s1047 = scalar_lea.vmem %s330, 2
      %1048 = vst.msk [vmem:[%s1047] ss:$4 sm:$0x3] %vm392, %v1043
      %1049 = vst [vmem:[%s335] sm:$0xff] 0.0
      %1050 = vst [vmem:[%s335 + $0x8] sm:$0xff] 0.0
      %1051 = vst [vmem:[%s335 + $0x10] sm:$0xff] 0.0
      %vm1052 = vcmask 1040384
      %v1053 = vsel %vm1052, %v953, 0.0
      %v1054 = vsel %vm1052, %v955, 0.0
      %v1055 = vadd.f32 %v1053, %v1054
      %1056 = vadd.xlane.f32.xlu0 %v1055
      %v1057 = vpop.xlane.xlu0 %1056
      %v1058 = vrot.slane %v1057, 4
      %v1059 = vadd.f32 %v1057, %v1058
      %v1060 = vrot.slane %v1059, 2
      %v1061 = vadd.f32 %v1059, %v1060
      %v1062 = vrot.slane %v1061, 1
      %v1063 = vadd.f32 %v1061, %v1062
      %s1064 = vtos %v1063
      %s1065 = sadd.f32 %s1064, 0.0
      %v1067 = vlaneseq
      %v1068 = vshrl.u32 %v1067, 7
      %v1069 = vsub.s32 0, %v1068
      %v1070 = vrot.slane %v365, %v1069
      %v1071 = vlaneseq
      %v1072 = vshrl.u32 %v1071, 7
      %v1073 = vsub.s32 1, %v1072
      %v1074 = vrot.slane %v365, %v1073
      %v1077 = vsel %vm1052, %v1070, 0.0
      %v1078 = vsel %vm1052, %v1074, 0.0
      %v1079 = vadd.f32 %v1077, %v1078
      %1080 = vadd.xlane.f32.xlu0 %v1079
      %v1081 = vpop.xlane.xlu0 %1080
      %v1082 = vrot.slane %v1081, 4
      %v1083 = vadd.f32 %v1081, %v1082
      %v1084 = vrot.slane %v1083, 2
      %v1085 = vadd.f32 %v1083, %v1084
      %v1086 = vrot.slane %v1085, 1
      %v1087 = vadd.f32 %v1085, %v1086
      %s1088 = vtos %v1087
      %s1089 = sadd.f32 %s1088, 0.0
      %v1090 = vmul.f32 %v953, %v953
      %v1091 = vmul.f32 %v955, %v955
      %v1092 = vsel %vm1052, %v1090, 0.0
      %v1093 = vsel %vm1052, %v1091, 0.0
      %v1094 = vadd.f32 %v1092, %v1093
      %1095 = vadd.xlane.f32.xlu0 %v1094
      %v1096 = vpop.xlane.xlu0 %1095
      %v1097 = vrot.slane %v1096, 4
      %v1098 = vadd.f32 %v1096, %v1097
      %v1099 = vrot.slane %v1098, 2
      %v1100 = vadd.f32 %v1098, %v1099
      %v1101 = vrot.slane %v1100, 1
      %v1102 = vadd.f32 %v1100, %v1101
      %s1103 = vtos %v1102
      %s1104 = sadd.f32 %s1103, 0.0
      %v1105 = vmul.f32 %v365, %v365
      %v1107 = vlaneseq
      %v1108 = vshrl.u32 %v1107, 7
      %v1109 = vsub.s32 0, %v1108
      %v1110 = vrot.slane %v1105, %v1109
      %v1111 = vlaneseq
      %v1112 = vshrl.u32 %v1111, 7
      %v1113 = vsub.s32 1, %v1112
      %v1114 = vrot.slane %v1105, %v1113
      %v1117 = vsel %vm1052, %v1110, 0.0
      %v1118 = vsel %vm1052, %v1114, 0.0
      %v1119 = vadd.f32 %v1117, %v1118
      %1120 = vadd.xlane.f32.xlu0 %v1119
      %v1121 = vpop.xlane.xlu0 %1120
      %v1122 = vrot.slane %v1121, 4
      %v1123 = vadd.f32 %v1121, %v1122
      %v1124 = vrot.slane %v1123, 2
      %v1125 = vadd.f32 %v1123, %v1124
      %v1126 = vrot.slane %v1125, 1
      %v1127 = vadd.f32 %v1125, %v1126
      %s1128 = vtos %v1127
      %s1129 = sadd.f32 %s1128, 0.0
      %v1130 = vmul.f32 %v953, %v1070
      %v1131 = vmul.f32 %v955, %v1074
      %v1132 = vsel %vm1052, %v1130, 0.0
      %v1133 = vsel %vm1052, %v1131, 0.0
      %v1134 = vadd.f32 %v1132, %v1133
      %1135 = vadd.xlane.f32.xlu0 %v1134
      %v1136 = vpop.xlane.xlu0 %1135
      %v1137 = vrot.slane %v1136, 4
      %v1138 = vadd.f32 %v1136, %v1137
      %v1139 = vrot.slane %v1138, 2
      %v1140 = vadd.f32 %v1138, %v1139
      %v1141 = vrot.slane %v1140, 1
      %v1142 = vadd.f32 %v1140, %v1141
      %s1143 = vtos %v1142
      %s1144 = sadd.f32 %s1143, 0.0
      %v1145 = vsub.f32 %v953, %v1070
      %v1146 = vsub.f32 %v955, %v1074
      %v1147 = vand.u32 2147483647, %v1145
      %v1148 = vand.u32 2147483647, %v1146
      %v1149 = vsel %vm1052, %v1147, 0.0
      %v1150 = vsel %vm1052, %v1148, 0.0
      %v1151 = vadd.f32 %v1149, %v1150
      %1152 = vadd.xlane.f32.xlu0 %v1151
      %v1153 = vpop.xlane.xlu0 %1152
      %v1154 = vrot.slane %v1153, 4
      %v1155 = vadd.f32 %v1153, %v1154
      %v1156 = vrot.slane %v1155, 2
      %v1157 = vadd.f32 %v1155, %v1156
      %v1158 = vrot.slane %v1157, 1
      %v1159 = vadd.f32 %v1157, %v1158
      %s1160 = vtos %v1159
      %s1161 = sadd.f32 %s1160, 0.0
      %v1162 = vstv %s1065
      %1163 = vst [vmem:[%s335] sm:$0x1] %v1162
      %v1164 = vstv %s1089
      %1165 = vst [vmem:[%s335 + $0x1] sm:$0x1] %v1164
      %v1166 = vstv %s1104
      %1167 = vst [vmem:[%s335 + $0x2] sm:$0x1] %v1166
      %v1168 = vstv %s1129
      %1169 = vst [vmem:[%s335 + $0x3] sm:$0x1] %v1168
      %v1170 = vstv %s1144
      %1171 = vst [vmem:[%s335 + $0x4] sm:$0x1] %v1170
      %v1172 = vstv %s1161
      %1173 = vst [vmem:[%s335 + $0x5] sm:$0x1] %v1172
      %v1176 = vrot.slane %v953, 1
      %v1177 = vrot.slane %v955, 1
      %v1180 = vsel %vm1052, %v1176, 0.0
      %v1181 = vsel %vm1052, %v1177, 0.0
      %v1182 = vadd.f32 %v1180, %v1181
      %1183 = vadd.xlane.f32.xlu0 %v1182
      %v1184 = vpop.xlane.xlu0 %1183
      %v1185 = vrot.slane %v1184, 4
      %v1186 = vadd.f32 %v1184, %v1185
      %v1187 = vrot.slane %v1186, 2
      %v1188 = vadd.f32 %v1186, %v1187
      %v1189 = vrot.slane %v1188, 1
      %v1190 = vadd.f32 %v1188, %v1189
      %s1191 = vtos %v1190
      %s1192 = sadd.f32 %s1191, 0.0
      %v1194 = vlaneseq
      %v1195 = vshrl.u32 %v1194, 7
      %v1196 = vsub.s32 0, %v1195
      %v1197 = vrot.slane %v368, %v1196
      %v1198 = vlaneseq
      %v1199 = vshrl.u32 %v1198, 7
      %v1200 = vsub.s32 1, %v1199
      %v1201 = vrot.slane %v368, %v1200
      %v1204 = vsel %vm1052, %v1197, 0.0
      %v1205 = vsel %vm1052, %v1201, 0.0
      %v1206 = vadd.f32 %v1204, %v1205
      %1207 = vadd.xlane.f32.xlu0 %v1206
      %v1208 = vpop.xlane.xlu0 %1207
      %v1209 = vrot.slane %v1208, 4
      %v1210 = vadd.f32 %v1208, %v1209
      %v1211 = vrot.slane %v1210, 2
      %v1212 = vadd.f32 %v1210, %v1211
      %v1213 = vrot.slane %v1212, 1
      %v1214 = vadd.f32 %v1212, %v1213
      %s1215 = vtos %v1214
      %s1216 = sadd.f32 %s1215, 0.0
      %v1219 = vrot.slane %v1090, 1
      %v1220 = vrot.slane %v1091, 1
      %v1223 = vsel %vm1052, %v1219, 0.0
      %v1224 = vsel %vm1052, %v1220, 0.0
      %v1225 = vadd.f32 %v1223, %v1224
      %1226 = vadd.xlane.f32.xlu0 %v1225
      %v1227 = vpop.xlane.xlu0 %1226
      %v1228 = vrot.slane %v1227, 4
      %v1229 = vadd.f32 %v1227, %v1228
      %v1230 = vrot.slane %v1229, 2
      %v1231 = vadd.f32 %v1229, %v1230
      %v1232 = vrot.slane %v1231, 1
      %v1233 = vadd.f32 %v1231, %v1232
      %s1234 = vtos %v1233
      %s1235 = sadd.f32 %s1234, 0.0
      %v1236 = vmul.f32 %v368, %v368
      %v1238 = vlaneseq
      %v1239 = vshrl.u32 %v1238, 7
      %v1240 = vsub.s32 0, %v1239
      %v1241 = vrot.slane %v1236, %v1240
      %v1242 = vlaneseq
      %v1243 = vshrl.u32 %v1242, 7
      %v1244 = vsub.s32 1, %v1243
      %v1245 = vrot.slane %v1236, %v1244
      %v1248 = vsel %vm1052, %v1241, 0.0
      %v1249 = vsel %vm1052, %v1245, 0.0
      %v1250 = vadd.f32 %v1248, %v1249
      %1251 = vadd.xlane.f32.xlu0 %v1250
      %v1252 = vpop.xlane.xlu0 %1251
      %v1253 = vrot.slane %v1252, 4
      %v1254 = vadd.f32 %v1252, %v1253
      %v1255 = vrot.slane %v1254, 2
      %v1256 = vadd.f32 %v1254, %v1255
      %v1257 = vrot.slane %v1256, 1
      %v1258 = vadd.f32 %v1256, %v1257
      %s1259 = vtos %v1258
      %s1260 = sadd.f32 %s1259, 0.0
      %v1261 = vmul.f32 %v953, %v1197
      %v1262 = vmul.f32 %v955, %v1201
      %v1265 = vrot.slane %v1261, 1
      %v1266 = vrot.slane %v1262, 1
      %v1269 = vsel %vm1052, %v1265, 0.0
      %v1270 = vsel %vm1052, %v1266, 0.0
      %v1271 = vadd.f32 %v1269, %v1270
      %1272 = vadd.xlane.f32.xlu0 %v1271
      %v1273 = vpop.xlane.xlu0 %1272
      %v1274 = vrot.slane %v1273, 4
      %v1275 = vadd.f32 %v1273, %v1274
      %v1276 = vrot.slane %v1275, 2
      %v1277 = vadd.f32 %v1275, %v1276
      %v1278 = vrot.slane %v1277, 1
      %v1279 = vadd.f32 %v1277, %v1278
      %s1280 = vtos %v1279
      %s1281 = sadd.f32 %s1280, 0.0
      %v1282 = vsub.f32 %v953, %v1197
      %v1283 = vsub.f32 %v955, %v1201
      %v1284 = vand.u32 2147483647, %v1282
      %v1285 = vand.u32 2147483647, %v1283
      %v1288 = vrot.slane %v1284, 1
      %v1289 = vrot.slane %v1285, 1
      %v1292 = vsel %vm1052, %v1288, 0.0
      %v1293 = vsel %vm1052, %v1289, 0.0
      %v1294 = vadd.f32 %v1292, %v1293
      %1295 = vadd.xlane.f32.xlu0 %v1294
      %v1296 = vpop.xlane.xlu0 %1295
      %v1297 = vrot.slane %v1296, 4
      %v1298 = vadd.f32 %v1296, %v1297
      %v1299 = vrot.slane %v1298, 2
      %v1300 = vadd.f32 %v1298, %v1299
      %v1301 = vrot.slane %v1300, 1
      %v1302 = vadd.f32 %v1300, %v1301
      %s1303 = vtos %v1302
      %s1304 = sadd.f32 %s1303, 0.0
      %v1305 = vstv %s1192
      %1306 = vst [vmem:[%s335 + $0x8] sm:$0x1] %v1305
      %v1307 = vstv %s1216
      %1308 = vst [vmem:[%s335 + $0x9] sm:$0x1] %v1307
      %v1309 = vstv %s1235
      %1310 = vst [vmem:[%s335 + $0xa] sm:$0x1] %v1309
      %v1311 = vstv %s1260
      %1312 = vst [vmem:[%s335 + $0xb] sm:$0x1] %v1311
      %v1313 = vstv %s1281
      %1314 = vst [vmem:[%s335 + $0xc] sm:$0x1] %v1313
      %v1315 = vstv %s1304
      %1316 = vst [vmem:[%s335 + $0xd] sm:$0x1] %v1315
      %v1318 = vlaneseq
      %v1319 = vshrl.u32 %v1318, 7
      %v1320 = vsub.s32 0, %v1319
      %v1321 = vrot.slane %v979, %v1320
      %v1322 = vlaneseq
      %v1323 = vshrl.u32 %v1322, 7
      %v1324 = vsub.s32 1, %v1323
      %v1325 = vrot.slane %v979, %v1324
      %v1328 = vsel %vm1052, %v1321, 0.0
      %v1329 = vsel %vm1052, %v1325, 0.0
      %v1330 = vadd.f32 %v1328, %v1329
      %1331 = vadd.xlane.f32.xlu0 %v1330
      %v1332 = vpop.xlane.xlu0 %1331
      %v1333 = vrot.slane %v1332, 4
      %v1334 = vadd.f32 %v1332, %v1333
      %v1335 = vrot.slane %v1334, 2
      %v1336 = vadd.f32 %v1334, %v1335
      %v1337 = vrot.slane %v1336, 1
      %v1338 = vadd.f32 %v1336, %v1337
      %s1339 = vtos %v1338
      %s1340 = sadd.f32 %s1339, 0.0
      %v1342 = vlaneseq
      %v1343 = vshrl.u32 %v1342, 7
      %v1344 = vsub.s32 0, %v1343
      %v1345 = vrot.slane %v1022, %v1344
      %v1346 = vlaneseq
      %v1347 = vshrl.u32 %v1346, 7
      %v1348 = vsub.s32 1, %v1347
      %v1349 = vrot.slane %v1022, %v1348
      %v1352 = vsel %vm1052, %v1345, 0.0
      %v1353 = vsel %vm1052, %v1349, 0.0
      %v1354 = vadd.f32 %v1352, %v1353
      %1355 = vadd.xlane.f32.xlu0 %v1354
      %v1356 = vpop.xlane.xlu0 %1355
      %v1357 = vrot.slane %v1356, 4
      %v1358 = vadd.f32 %v1356, %v1357
      %v1359 = vrot.slane %v1358, 2
      %v1360 = vadd.f32 %v1358, %v1359
      %v1361 = vrot.slane %v1360, 1
      %v1362 = vadd.f32 %v1360, %v1361
      %s1363 = vtos %v1362
      %s1364 = sadd.f32 %s1340, %s1363
      %v1366 = vlaneseq
      %v1367 = vshrl.u32 %v1366, 7
      %v1368 = vsub.s32 0, %v1367
      %v1369 = vrot.slane %v1043, %v1368
      %v1370 = vlaneseq
      %v1371 = vshrl.u32 %v1370, 7
      %v1372 = vsub.s32 1, %v1371
      %v1373 = vrot.slane %v1043, %v1372
      %v1376 = vsel %vm1052, %v1369, 0.0
      %v1377 = vsel %vm1052, %v1373, 0.0
      %v1378 = vadd.f32 %v1376, %v1377
      %1379 = vadd.xlane.f32.xlu0 %v1378
      %v1380 = vpop.xlane.xlu0 %1379
      %v1381 = vrot.slane %v1380, 4
      %v1382 = vadd.f32 %v1380, %v1381
      %v1383 = vrot.slane %v1382, 2
      %v1384 = vadd.f32 %v1382, %v1383
      %v1385 = vrot.slane %v1384, 1
      %v1386 = vadd.f32 %v1384, %v1385
      %s1387 = vtos %v1386
      %s1388 = sadd.f32 %s1364, %s1387
      %v1390 = vlaneseq
      %v1391 = vshrl.u32 %v1390, 7
      %v1392 = vsub.s32 0, %v1391
      %v1393 = vrot.slane %v353, %v1392
      %v1394 = vlaneseq
      %v1395 = vshrl.u32 %v1394, 7
      %v1396 = vsub.s32 1, %v1395
      %v1397 = vrot.slane %v353, %v1396
      %v1400 = vsel %vm1052, %v1393, 0.0
      %v1401 = vsel %vm1052, %v1397, 0.0
      %v1402 = vadd.f32 %v1400, %v1401
      %1403 = vadd.xlane.f32.xlu0 %v1402
      %v1404 = vpop.xlane.xlu0 %1403
      %v1405 = vrot.slane %v1404, 4
      %v1406 = vadd.f32 %v1404, %v1405
      %v1407 = vrot.slane %v1406, 2
      %v1408 = vadd.f32 %v1406, %v1407
      %v1409 = vrot.slane %v1408, 1
      %v1410 = vadd.f32 %v1408, %v1409
      %s1411 = vtos %v1410
      %s1412 = sadd.f32 %s1411, 0.0
      %v1414 = vlaneseq
      %v1415 = vshrl.u32 %v1414, 7
      %v1416 = vsub.s32 0, %v1415
      %v1417 = vrot.slane %v355, %v1416
      %v1418 = vlaneseq
      %v1419 = vshrl.u32 %v1418, 7
      %v1420 = vsub.s32 1, %v1419
      %v1421 = vrot.slane %v355, %v1420
      %v1424 = vsel %vm1052, %v1417, 0.0
      %v1425 = vsel %vm1052, %v1421, 0.0
      %v1426 = vadd.f32 %v1424, %v1425
      %1427 = vadd.xlane.f32.xlu0 %v1426
      %v1428 = vpop.xlane.xlu0 %1427
      %v1429 = vrot.slane %v1428, 4
      %v1430 = vadd.f32 %v1428, %v1429
      %v1431 = vrot.slane %v1430, 2
      %v1432 = vadd.f32 %v1430, %v1431
      %v1433 = vrot.slane %v1432, 1
      %v1434 = vadd.f32 %v1432, %v1433
      %s1435 = vtos %v1434
      %s1436 = sadd.f32 %s1412, %s1435
      %v1438 = vlaneseq
      %v1439 = vshrl.u32 %v1438, 7
      %v1440 = vsub.s32 0, %v1439
      %v1441 = vrot.slane %v357, %v1440
      %v1442 = vlaneseq
      %v1443 = vshrl.u32 %v1442, 7
      %v1444 = vsub.s32 1, %v1443
      %v1445 = vrot.slane %v357, %v1444
      %v1448 = vsel %vm1052, %v1441, 0.0
      %v1449 = vsel %vm1052, %v1445, 0.0
      %v1450 = vadd.f32 %v1448, %v1449
      %1451 = vadd.xlane.f32.xlu0 %v1450
      %v1452 = vpop.xlane.xlu0 %1451
      %v1453 = vrot.slane %v1452, 4
      %v1454 = vadd.f32 %v1452, %v1453
      %v1455 = vrot.slane %v1454, 2
      %v1456 = vadd.f32 %v1454, %v1455
      %v1457 = vrot.slane %v1456, 1
      %v1458 = vadd.f32 %v1456, %v1457
      %s1459 = vtos %v1458
      %s1460 = sadd.f32 %s1436, %s1459
      %v1461 = vmul.f32 %v979, %v979
      %v1463 = vlaneseq
      %v1464 = vshrl.u32 %v1463, 7
      %v1465 = vsub.s32 0, %v1464
      %v1466 = vrot.slane %v1461, %v1465
      %v1467 = vlaneseq
      %v1468 = vshrl.u32 %v1467, 7
      %v1469 = vsub.s32 1, %v1468
      %v1470 = vrot.slane %v1461, %v1469
      %v1473 = vsel %vm1052, %v1466, 0.0
      %v1474 = vsel %vm1052, %v1470, 0.0
      %v1475 = vadd.f32 %v1473, %v1474
      %1476 = vadd.xlane.f32.xlu0 %v1475
      %v1477 = vpop.xlane.xlu0 %1476
      %v1478 = vrot.slane %v1477, 4
      %v1479 = vadd.f32 %v1477, %v1478
      %v1480 = vrot.slane %v1479, 2
      %v1481 = vadd.f32 %v1479, %v1480
      %v1482 = vrot.slane %v1481, 1
      %v1483 = vadd.f32 %v1481, %v1482
      %s1484 = vtos %v1483
      %s1485 = sadd.f32 %s1484, 0.0
      %v1486 = vmul.f32 %v1022, %v1022
      %v1488 = vlaneseq
      %v1489 = vshrl.u32 %v1488, 7
      %v1490 = vsub.s32 0, %v1489
      %v1491 = vrot.slane %v1486, %v1490
      %v1492 = vlaneseq
      %v1493 = vshrl.u32 %v1492, 7
      %v1494 = vsub.s32 1, %v1493
      %v1495 = vrot.slane %v1486, %v1494
      %v1498 = vsel %vm1052, %v1491, 0.0
      %v1499 = vsel %vm1052, %v1495, 0.0
      %v1500 = vadd.f32 %v1498, %v1499
      %1501 = vadd.xlane.f32.xlu0 %v1500
      %v1502 = vpop.xlane.xlu0 %1501
      %v1503 = vrot.slane %v1502, 4
      %v1504 = vadd.f32 %v1502, %v1503
      %v1505 = vrot.slane %v1504, 2
      %v1506 = vadd.f32 %v1504, %v1505
      %v1507 = vrot.slane %v1506, 1
      %v1508 = vadd.f32 %v1506, %v1507
      %s1509 = vtos %v1508
      %s1510 = sadd.f32 %s1485, %s1509
      %v1511 = vmul.f32 %v1043, %v1043
      %v1513 = vlaneseq
      %v1514 = vshrl.u32 %v1513, 7
      %v1515 = vsub.s32 0, %v1514
      %v1516 = vrot.slane %v1511, %v1515
      %v1517 = vlaneseq
      %v1518 = vshrl.u32 %v1517, 7
      %v1519 = vsub.s32 1, %v1518
      %v1520 = vrot.slane %v1511, %v1519
      %v1523 = vsel %vm1052, %v1516, 0.0
      %v1524 = vsel %vm1052, %v1520, 0.0
      %v1525 = vadd.f32 %v1523, %v1524
      %1526 = vadd.xlane.f32.xlu0 %v1525
      %v1527 = vpop.xlane.xlu0 %1526
      %v1528 = vrot.slane %v1527, 4
      %v1529 = vadd.f32 %v1527, %v1528
      %v1530 = vrot.slane %v1529, 2
      %v1531 = vadd.f32 %v1529, %v1530
      %v1532 = vrot.slane %v1531, 1
      %v1533 = vadd.f32 %v1531, %v1532
      %s1534 = vtos %v1533
      %s1535 = sadd.f32 %s1510, %s1534
      %v1536 = vmul.f32 %v353, %v353
      %v1538 = vlaneseq
      %v1539 = vshrl.u32 %v1538, 7
      %v1540 = vsub.s32 0, %v1539
      %v1541 = vrot.slane %v1536, %v1540
      %v1542 = vlaneseq
      %v1543 = vshrl.u32 %v1542, 7
      %v1544 = vsub.s32 1, %v1543
      %v1545 = vrot.slane %v1536, %v1544
      %v1548 = vsel %vm1052, %v1541, 0.0
      %v1549 = vsel %vm1052, %v1545, 0.0
      %v1550 = vadd.f32 %v1548, %v1549
      %1551 = vadd.xlane.f32.xlu0 %v1550
      %v1552 = vpop.xlane.xlu0 %1551
      %v1553 = vrot.slane %v1552, 4
      %v1554 = vadd.f32 %v1552, %v1553
      %v1555 = vrot.slane %v1554, 2
      %v1556 = vadd.f32 %v1554, %v1555
      %v1557 = vrot.slane %v1556, 1
      %v1558 = vadd.f32 %v1556, %v1557
      %s1559 = vtos %v1558
      %s1560 = sadd.f32 %s1559, 0.0
      %v1561 = vmul.f32 %v355, %v355
      %v1563 = vlaneseq
      %v1564 = vshrl.u32 %v1563, 7
      %v1565 = vsub.s32 0, %v1564
      %v1566 = vrot.slane %v1561, %v1565
      %v1567 = vlaneseq
      %v1568 = vshrl.u32 %v1567, 7
      %v1569 = vsub.s32 1, %v1568
      %v1570 = vrot.slane %v1561, %v1569
      %v1573 = vsel %vm1052, %v1566, 0.0
      %v1574 = vsel %vm1052, %v1570, 0.0
      %v1575 = vadd.f32 %v1573, %v1574
      %1576 = vadd.xlane.f32.xlu0 %v1575
      %v1577 = vpop.xlane.xlu0 %1576
      %v1578 = vrot.slane %v1577, 4
      %v1579 = vadd.f32 %v1577, %v1578
      %v1580 = vrot.slane %v1579, 2
      %v1581 = vadd.f32 %v1579, %v1580
      %v1582 = vrot.slane %v1581, 1
      %v1583 = vadd.f32 %v1581, %v1582
      %s1584 = vtos %v1583
      %s1585 = sadd.f32 %s1560, %s1584
      %v1586 = vmul.f32 %v357, %v357
      %v1588 = vlaneseq
      %v1589 = vshrl.u32 %v1588, 7
      %v1590 = vsub.s32 0, %v1589
      %v1591 = vrot.slane %v1586, %v1590
      %v1592 = vlaneseq
      %v1593 = vshrl.u32 %v1592, 7
      %v1594 = vsub.s32 1, %v1593
      %v1595 = vrot.slane %v1586, %v1594
      %v1598 = vsel %vm1052, %v1591, 0.0
      %v1599 = vsel %vm1052, %v1595, 0.0
      %v1600 = vadd.f32 %v1598, %v1599
      %1601 = vadd.xlane.f32.xlu0 %v1600
      %v1602 = vpop.xlane.xlu0 %1601
      %v1603 = vrot.slane %v1602, 4
      %v1604 = vadd.f32 %v1602, %v1603
      %v1605 = vrot.slane %v1604, 2
      %v1606 = vadd.f32 %v1604, %v1605
      %v1607 = vrot.slane %v1606, 1
      %v1608 = vadd.f32 %v1606, %v1607
      %s1609 = vtos %v1608
      %s1610 = sadd.f32 %s1585, %s1609
      %v1611 = vmul.f32 %v979, %v353
      %v1613 = vlaneseq
      %v1614 = vshrl.u32 %v1613, 7
      %v1615 = vsub.s32 0, %v1614
      %v1616 = vrot.slane %v1611, %v1615
      %v1617 = vlaneseq
      %v1618 = vshrl.u32 %v1617, 7
      %v1619 = vsub.s32 1, %v1618
      %v1620 = vrot.slane %v1611, %v1619
      %v1623 = vsel %vm1052, %v1616, 0.0
      %v1624 = vsel %vm1052, %v1620, 0.0
      %v1625 = vadd.f32 %v1623, %v1624
      %1626 = vadd.xlane.f32.xlu0 %v1625
      %v1627 = vpop.xlane.xlu0 %1626
      %v1628 = vrot.slane %v1627, 4
      %v1629 = vadd.f32 %v1627, %v1628
      %v1630 = vrot.slane %v1629, 2
      %v1631 = vadd.f32 %v1629, %v1630
      %v1632 = vrot.slane %v1631, 1
      %v1633 = vadd.f32 %v1631, %v1632
      %s1634 = vtos %v1633
      %s1635 = sadd.f32 %s1634, 0.0
      %v1636 = vmul.f32 %v1022, %v355
      %v1638 = vlaneseq
      %v1639 = vshrl.u32 %v1638, 7
      %v1640 = vsub.s32 0, %v1639
      %v1641 = vrot.slane %v1636, %v1640
      %v1642 = vlaneseq
      %v1643 = vshrl.u32 %v1642, 7
      %v1644 = vsub.s32 1, %v1643
      %v1645 = vrot.slane %v1636, %v1644
      %v1648 = vsel %vm1052, %v1641, 0.0
      %v1649 = vsel %vm1052, %v1645, 0.0
      %v1650 = vadd.f32 %v1648, %v1649
      %1651 = vadd.xlane.f32.xlu0 %v1650
      %v1652 = vpop.xlane.xlu0 %1651
      %v1653 = vrot.slane %v1652, 4
      %v1654 = vadd.f32 %v1652, %v1653
      %v1655 = vrot.slane %v1654, 2
      %v1656 = vadd.f32 %v1654, %v1655
      %v1657 = vrot.slane %v1656, 1
      %v1658 = vadd.f32 %v1656, %v1657
      %s1659 = vtos %v1658
      %s1660 = sadd.f32 %s1635, %s1659
      %v1661 = vmul.f32 %v1043, %v357
      %v1663 = vlaneseq
      %v1664 = vshrl.u32 %v1663, 7
      %v1665 = vsub.s32 0, %v1664
      %v1666 = vrot.slane %v1661, %v1665
      %v1667 = vlaneseq
      %v1668 = vshrl.u32 %v1667, 7
      %v1669 = vsub.s32 1, %v1668
      %v1670 = vrot.slane %v1661, %v1669
      %v1673 = vsel %vm1052, %v1666, 0.0
      %v1674 = vsel %vm1052, %v1670, 0.0
      %v1675 = vadd.f32 %v1673, %v1674
      %1676 = vadd.xlane.f32.xlu0 %v1675
      %v1677 = vpop.xlane.xlu0 %1676
      %v1678 = vrot.slane %v1677, 4
      %v1679 = vadd.f32 %v1677, %v1678
      %v1680 = vrot.slane %v1679, 2
      %v1681 = vadd.f32 %v1679, %v1680
      %v1682 = vrot.slane %v1681, 1
      %v1683 = vadd.f32 %v1681, %v1682
      %s1684 = vtos %v1683
      %s1685 = sadd.f32 %s1660, %s1684
      %v1686 = vsub.f32 %v979, %v353
      %v1687 = vand.u32 2147483647, %v1686
      %v1689 = vlaneseq
      %v1690 = vshrl.u32 %v1689, 7
      %v1691 = vsub.s32 0, %v1690
      %v1692 = vrot.slane %v1687, %v1691
      %v1693 = vlaneseq
      %v1694 = vshrl.u32 %v1693, 7
      %v1695 = vsub.s32 1, %v1694
      %v1696 = vrot.slane %v1687, %v1695
      %v1699 = vsel %vm1052, %v1692, 0.0
      %v1700 = vsel %vm1052, %v1696, 0.0
      %v1701 = vadd.f32 %v1699, %v1700
      %1702 = vadd.xlane.f32.xlu0 %v1701
      %v1703 = vpop.xlane.xlu0 %1702
      %v1704 = vrot.slane %v1703, 4
      %v1705 = vadd.f32 %v1703, %v1704
      %v1706 = vrot.slane %v1705, 2
      %v1707 = vadd.f32 %v1705, %v1706
      %v1708 = vrot.slane %v1707, 1
      %v1709 = vadd.f32 %v1707, %v1708
      %s1710 = vtos %v1709
      %s1711 = sadd.f32 %s1710, 0.0
      %v1712 = vsub.f32 %v1022, %v355
      %v1713 = vand.u32 2147483647, %v1712
      %v1715 = vlaneseq
      %v1716 = vshrl.u32 %v1715, 7
      %v1717 = vsub.s32 0, %v1716
      %v1718 = vrot.slane %v1713, %v1717
      %v1719 = vlaneseq
      %v1720 = vshrl.u32 %v1719, 7
      %v1721 = vsub.s32 1, %v1720
      %v1722 = vrot.slane %v1713, %v1721
      %v1725 = vsel %vm1052, %v1718, 0.0
      %v1726 = vsel %vm1052, %v1722, 0.0
      %v1727 = vadd.f32 %v1725, %v1726
      %1728 = vadd.xlane.f32.xlu0 %v1727
      %v1729 = vpop.xlane.xlu0 %1728
      %v1730 = vrot.slane %v1729, 4
      %v1731 = vadd.f32 %v1729, %v1730
      %v1732 = vrot.slane %v1731, 2
      %v1733 = vadd.f32 %v1731, %v1732
      %v1734 = vrot.slane %v1733, 1
      %v1735 = vadd.f32 %v1733, %v1734
      %s1736 = vtos %v1735
      %s1737 = sadd.f32 %s1711, %s1736
      %v1738 = vsub.f32 %v1043, %v357
      %v1739 = vand.u32 2147483647, %v1738
      %v1741 = vlaneseq
      %v1742 = vshrl.u32 %v1741, 7
      %v1743 = vsub.s32 0, %v1742
      %v1744 = vrot.slane %v1739, %v1743
      %v1745 = vlaneseq
      %v1746 = vshrl.u32 %v1745, 7
      %v1747 = vsub.s32 1, %v1746
      %v1748 = vrot.slane %v1739, %v1747
      %v1751 = vsel %vm1052, %v1744, 0.0
      %v1752 = vsel %vm1052, %v1748, 0.0
      %v1753 = vadd.f32 %v1751, %v1752
      %1754 = vadd.xlane.f32.xlu0 %v1753
      %v1755 = vpop.xlane.xlu0 %1754
      %v1756 = vrot.slane %v1755, 4
      %v1757 = vadd.f32 %v1755, %v1756
      %v1758 = vrot.slane %v1757, 2
      %v1759 = vadd.f32 %v1757, %v1758
      %v1760 = vrot.slane %v1759, 1
      %v1761 = vadd.f32 %v1759, %v1760
      %s1762 = vtos %v1761
      %s1763 = sadd.f32 %s1737, %s1762
      %v1764 = vstv %s1388
      %1765 = vst [vmem:[%s335 + $0x10] sm:$0x1] %v1764
      %v1766 = vstv %s1460
      %1767 = vst [vmem:[%s335 + $0x11] sm:$0x1] %v1766
      %v1768 = vstv %s1535
      %1769 = vst [vmem:[%s335 + $0x12] sm:$0x1] %v1768
      %v1770 = vstv %s1610
      %1771 = vst [vmem:[%s335 + $0x13] sm:$0x1] %v1770
      %v1772 = vstv %s1685
      %1773 = vst [vmem:[%s335 + $0x14] sm:$0x1] %v1772
      %v1774 = vstv %s1763
      %1775 = vst [vmem:[%s335 + $0x15] sm:$0x1] %v1774
      %p1776 = scmp.lt.s32.totalorder %s20, 7
      %s1777 = scalar_select %p1776, %s20, 7
      %s1778 = smul.addr %s1777, 2
      %s1779 = smul.addr %s1778, 4
      %s1780 = scalar_lea.vmem %s7, %s1779
      %p1781 = scmp.lt.s32.totalorder %s20, 7
      %s1782 = scalar_select %p1781, %s20, 7
      %s1783 = smul.addr %s1782, 3
      %s1784 = smul.addr %s1783, 8
      %s1785 = scalar_lea.vmem %s8, %s1784
      // Predicated region
      $region49: #{model_canet_forward.3} parent=47 // pred_check
        %p1786 = pneg %p195
      $region50: #{model_canet_forward.3} parent=47 // pred_check_branch
        %1788 = sbr.rel (%p1786) target = $region52
      $region51: #{model_canet_forward.3} parent=47 // pred_region
        _
      $region52: #{model_canet_forward.3} parent=47 // pred_fallthru
        _
      // Predicated region
      $region53: #{model_canet_forward.3} parent=47 // pred_check
        %p1789 = pneg %p221
      $region54: #{model_canet_forward.3} parent=47 // pred_check_branch
        %1791 = sbr.rel (%p1789) target = $region56
      $region55: #{model_canet_forward.3} parent=47 // pred_region
        _
      $region56: #{model_canet_forward.3} parent=47 // pred_fallthru
        _
    $region48: #{model_canet_forward.3} parent=5 // pred_fallthru
      _
    %p1792 = scmp.le.s32.totalorder 2, %s15
    // Predicated region
    $region57: #{model_canet_forward.3} parent=5 // pred_check
      %p1793 = pneg %p1792
    $region58: #{model_canet_forward.3} parent=5 // pred_check_branch
      %1795 = sbr.rel (%p1793) target = $region60
    $region59: #{model_canet_forward.3} parent=5 // pred_region
      %s1796 = ssub.s32 %s15, 2
      // Predicated region
      $region61: #{model_canet_forward.3} parent=59 // pred_check
        %p1797 = pneg %p201
      $region62: #{model_canet_forward.3} parent=59 // pred_check_branch
        %1799 = sbr.rel (%p1797) target = $region64
      $region63: #{model_canet_forward.3} parent=59 // pred_region
        %p1800 = scmp.lt.s32.totalorder %s21, 7
        %s1801 = scalar_select %p1800, %s21, 7
        %s1802 = smul.addr %s1801, 2
        %s1803 = smul.addr %s1802, 4
        %s1804 = scalar_lea.vmem %s7, %s1803
      $region64: #{model_canet_forward.3} parent=59 // pred_fallthru
        _
      // Predicated region
      $region65: #{model_canet_forward.3} parent=59 // pred_check
        %p1805 = pneg %p227
      $region66: #{model_canet_forward.3} parent=59 // pred_check_branch
        %1807 = sbr.rel (%p1805) target = $region68
      $region67: #{model_canet_forward.3} parent=59 // pred_region
        %p1808 = scmp.lt.s32.totalorder %s21, 7
        %s1809 = scalar_select %p1808, %s21, 7
        %s1810 = smul.addr %s1809, 3
        %s1811 = smul.addr %s1810, 8
        %s1812 = scalar_lea.vmem %s8, %s1811
      $region68: #{model_canet_forward.3} parent=59 // pred_fallthru
        _
    $region60: #{model_canet_forward.3} parent=5 // pred_fallthru
      _
  $region6: #{model_canet_forward.3} parent=0 // loop_footer
    %s19 = sadd.s32 1, %s15
  $region7: #{model_canet_forward.3} parent=0 // loop_footer_branch
    %14 = sbr.rel target = $region3
  $region8: #{model_canet_forward.3} parent=0 // loop_exit
    _

</llo_original>
